<compile_context>
chip_gen: v7x
topology: tpu7x:2x2x1
jax: 0.10.0
libtpu: 0.0.40
codegen_flags: <defaults>
</compile_context>

<pallas_src>
import functools

import jax
import jax.numpy as jnp
from jax.experimental import pallas as pl
from jax.experimental.pallas import tpu as pltpu

EPS = 1e-5
CBLK = 128                       # output-channel block (lane width)
# Above the 16/32 MiB scoped-VMEM defaults, comfortably under v7x's 64 MiB.
VMEM_LIMIT = 48 * 1024 * 1024


def _im2col(get_tap):
    """Concatenate the nine 3x3 taps (ky, kx, cin order) along the lane dim."""
    taps = [get_tap(ky, kx) for ky in range(3) for kx in range(3)]
    return jnp.concatenate(taps, axis=-1)


def conv_stats_kernel(x_ref, w_ref, y_ref, stats_ref, patches_ref):
    """3x3 'same' conv for one image / one Cout block + per-image BN stats.

    x_ref       : (1, H+2, W+2, C) bf16  spatially zero-padded input image
    w_ref       : (9*C, CBLK)      bf16  conv weights for this Cout block
    y_ref       : (1, HW, CBLK)    bf16  conv output (pre-BN)
    stats_ref   : (1, 2, CBLK)     f32   per-image [sum, sum_of_squares]
    patches_ref : (HW, 9*C)        bf16  per-image im2col scratch
    """
    _, Hp, Wp, C = x_ref.shape
    H, W = Hp - 2, Wp - 2
    HW = H * W

    # The patch matrix does not depend on the output-channel block: build it
    # once per image and reuse it for all Cout blocks (c axis is 'arbitrary').
    @pl.when(pl.program_id(1) == 0)
    def _():
        patches_ref[...] = _im2col(
            lambda ky, kx: x_ref[:, ky:ky + H, kx:kx + W, :].reshape(HW, C))

    # One MXU matmul per Cout block: bf16 operands, f32 accumulation.
    acc = jnp.dot(patches_ref[...], w_ref[...],
                  preferred_element_type=jnp.float32)             # (HW, CBLK)

    y_ref[...] = acc.reshape(y_ref.shape).astype(y_ref.dtype)

    # Single-pass BN statistics; cross-image reduction happens in the wrapper.
    s = jnp.sum(acc, axis=0, keepdims=True)
    sq = jnp.sum(acc * acc, axis=0, keepdims=True)
    stats_ref[...] = jnp.concatenate([s, sq], axis=0).reshape(stats_ref.shape)


def bn_relu_conv_stats_kernel(y1_ref, scale_ref, shift_ref, w_ref,
                              y2_ref, stats_ref, patches_ref, *, H, W, C):
    """bn1 (folded affine) + ReLU for one image, zero 1-px halo built in VMEM,
    then 3x3 conv2 for one Cout block + per-image BN stats.

    y1_ref      : (1, HW, Cp)      bf16  conv1 output (pre-BN), all channels
    scale_ref   : (1, Cp)          f32   gamma1 * rsqrt(var1 + eps)
    shift_ref   : (1, Cp)          f32   beta1 - mean1 * scale1
    w_ref       : (9*C, CBLK)      bf16  conv2 weights for this Cout block
    y2_ref      : (1, HW, CBLK)    bf16  conv2 output (pre-BN)
    stats_ref   : (1, 2, CBLK)     f32
    patches_ref : (HW, 9*C)        bf16  per-image im2col scratch
    """
    HW = H * W

    @pl.when(pl.program_id(1) == 0)
    def _():
        # bn1 affine + ReLU in f32, on the real C channels only.
        y = y1_ref[:, :, :C].astype(jnp.float32)                  # (1, HW, C)
        m1 = jnp.maximum(y * scale_ref[:, :C].reshape(1, 1, C)
                         + shift_ref[:, :C].reshape(1, 1, C), 0.0)
        m1 = m1.reshape(H, W, C)
        # Zero 1-pixel halo assembled in VMEM (replaces the old wrapper-side
        # jnp.pad HBM round trip of the intermediate).
        zc = jnp.zeros((H, 1, C), jnp.float32)
        zr = jnp.zeros((1, W + 2, C), jnp.float32)
        m1p = jnp.concatenate(
            [zr, jnp.concatenate([zc, m1, zc], axis=1), zr], axis=0)
        m1p = m1p.astype(jnp.bfloat16)                            # cast once
        patches_ref[...] = _im2col(
            lambda ky, kx: m1p[ky:ky + H, kx:kx + W, :].reshape(HW, C))

    acc = jnp.dot(patches_ref[...], w_ref[...],
                  preferred_element_type=jnp.float32)             # (HW, CBLK)

    y2_ref[...] = acc.reshape(y2_ref.shape).astype(y2_ref.dtype)
    s = jnp.sum(acc, axis=0, keepdims=True)
    sq = jnp.sum(acc * acc, axis=0, keepdims=True)
    stats_ref[...] = jnp.concatenate([s, sq], axis=0).reshape(stats_ref.shape)


def bn_add_relu_kernel(y2_ref, res_ref, scale_ref, shift_ref, out_ref):
    """out = relu(bn2(y2) + residual) for one image (all channels)."""
    _, HW, C = out_ref.shape
    y = y2_ref[:, :, :C].astype(jnp.float32)                      # (1, HW, C)
    y = (y * scale_ref[:, :C].reshape(1, 1, C)
         + shift_ref[:, :C].reshape(1, 1, C))
    out_ref[...] = jnp.maximum(y + res_ref[...], 0.0).astype(out_ref.dtype)


@jax.jit
def residual_block(x_nchw, w1, w2, g1, b1, g2, b2):
    """x_nchw: (N, C, H, W) f32; w1/w2 HWIO (3, 3, C, C); returns NCHW f32."""
    x = jnp.transpose(x_nchw, (0, 2, 3, 1))                       # NHWC
    N, H, W, C = x.shape
    assert w1.shape[-1] == C and w2.shape[-1] == C, \
        "identity residual requires in_channels == out_channels"
    HW = H * W
    M = N * HW
    Cp = ((C + CBLK - 1) // CBLK) * CBLK      # pad Cout only (lane-dense tiles)
    pc = Cp - C
    nblk = Cp // CBLK

    # Cin stays unpadded; input cast to bf16 once (MXU operand dtype).
    x_pad = jnp.pad(x.astype(jnp.bfloat16),
                    ((0, 0), (1, 1), (1, 1), (0, 0)))             # (N,H+2,W+2,C)
    x_res = x.reshape(N, HW, C)                                   # f32 residual

    def prep_w(w):   # HWIO (3,3,C,C) -> (9*C, Cp) bf16; only Cout is padded.
        w = jnp.pad(w, ((0, 0), (0, 0), (0, 0), (0, pc)))
        return w.reshape(9 * C, Cp).astype(jnp.bfloat16)

    def prep_v(v):   # (C,) -> (Cp,) f32 (padded gamma/beta stay zero)
        return jnp.pad(v, (0, pc)).astype(jnp.float32)

    w1p, w2p = prep_w(w1), prep_w(w2)
    g1p, b1p = prep_v(g1), prep_v(b1)
    g2p, b2p = prep_v(g2), prep_v(b2)

    conv_params = pltpu.CompilerParams(
        dimension_semantics=("parallel", "arbitrary"),
        vmem_limit_bytes=VMEM_LIMIT)
    ew_params = pltpu.CompilerParams(
        dimension_semantics=("parallel",),
        vmem_limit_bytes=VMEM_LIMIT)

    y_spec = pl.BlockSpec((1, HW, CBLK), lambda n, c: (n, 0, c))
    stats_spec = pl.BlockSpec((1, 2, CBLK), lambda n, c: (n, 0, c))
    w_spec = pl.BlockSpec((9 * C, CBLK), lambda n, c: (0, c))
    vec_spec = pl.BlockSpec((1, Cp), lambda n, c: (0, 0),
                            pipeline_mode=pl.Buffered(1))

    # --- stage 1a: conv1 + per-image BN1 statistics -----------------------
    y1, stats1 = pl.pallas_call(
        conv_stats_kernel,
        out_shape=(jax.ShapeDtypeStruct((N, HW, Cp), jnp.bfloat16),
                   jax.ShapeDtypeStruct((N, 2, Cp), jnp.float32)),
        grid=(N, nblk),
        in_specs=[pl.BlockSpec((1, H + 2, W + 2, C), lambda n, c: (n, 0, 0, 0)),
                  w_spec],
        out_specs=(y_spec, stats_spec),
        scratch_shapes=[pltpu.VMEM((HW, 9 * C), jnp.bfloat16)],
        compiler_params=conv_params,
    )(x_pad, w1p)

    def bn_coeffs(stats, g, b):
        sums = jnp.sum(stats, axis=0)                             # (2, Cp)
        mean = sums[0] / M
        var = sums[1] / M - mean * mean                           # biased var
        scale = g * jax.lax.rsqrt(var + EPS)
        return scale.reshape(1, Cp), (b - mean * scale).reshape(1, Cp)

    scale1, shift1 = bn_coeffs(stats1, g1p, b1p)

    # --- stage 1b/2a: bn1 + ReLU (fused, halo in VMEM) -> conv2 + stats ---
    kernel2 = functools.partial(bn_relu_conv_stats_kernel, H=H, W=W, C=C)
    y2, stats2 = pl.pallas_call(
        kernel2,
        out_shape=(jax.ShapeDtypeStruct((N, HW, Cp), jnp.bfloat16),
                   jax.ShapeDtypeStruct((N, 2, Cp), jnp.float32)),
        grid=(N, nblk),
        in_specs=[pl.BlockSpec((1, HW, Cp), lambda n, c: (n, 0, 0)),
                  vec_spec, vec_spec, w_spec],
        out_specs=(y_spec, stats_spec),
        scratch_shapes=[pltpu.VMEM((HW, 9 * C), jnp.bfloat16)],
        compiler_params=conv_params,
    )(y1, scale1, shift1, w2p)

    scale2, shift2 = bn_coeffs(stats2, g2p, b2p)

    # --- stage 2b: bn2 + residual add + ReLU -------------------------------
    vec1_spec = pl.BlockSpec((1, Cp), lambda n: (0, 0),
                             pipeline_mode=pl.Buffered(1))
    out = pl.pallas_call(
        bn_add_relu_kernel,
        out_shape=jax.ShapeDtypeStruct((N, HW, C), jnp.float32),
        grid=(N,),
        in_specs=[pl.BlockSpec((1, HW, Cp), lambda n: (n, 0, 0)),
                  pl.BlockSpec((1, HW, C), lambda n: (n, 0, 0)),
                  vec1_spec, vec1_spec],
        out_specs=pl.BlockSpec((1, HW, C), lambda n: (n, 0, 0)),
        compiler_params=ew_params,
    )(y2, x_res, scale2, shift2)

    out = out.reshape(N, H, W, C)
    return jnp.transpose(out, (0, 3, 1, 2))                       # NCHW


def reference(x_nchw, w1, w2, g1, b1, g2, b2):
    """Pure-JAX f32 reference mirroring the PyTorch forward (training BN)."""
    x = jnp.transpose(x_nchw, (0, 2, 3, 1))

    def conv(a, w):
        return jax.lax.conv_general_dilated(
            a, w, window_strides=(1, 1), padding=((1, 1), (1, 1)),
            dimension_numbers=("NHWC", "HWIO", "NHWC"))

    def bn(a, g, b):
        mean = jnp.mean(a, axis=(0, 1, 2), keepdims=True)
        var = jnp.mean((a - mean) ** 2, axis=(0, 1, 2), keepdims=True)
        return (a - mean) / jnp.sqrt(var + EPS) * g + b

    out = jnp.maximum(bn(conv(x, w1), g1, b1), 0.0)
    out = bn(conv(out, w2), g2, b2) + x
    out = jnp.maximum(out, 0.0)
    return jnp.transpose(out, (0, 3, 1, 2))


if __name__ == "__main__":
    N, C, H, W = 2, 4, 16, 16          # in_channels == out_channels, stride=1
    key = jax.random.PRNGKey(0)
    kx, kw1, kw2, kg1, kb1, kg2, kb2 = jax.random.split(key, 7)

    x = jax.random.normal(kx, (N, C, H, W), jnp.float32)
    w1 = 0.1 * jax.random.normal(kw1, (3, 3, C, C), jnp.float32)   # HWIO
    w2 = 0.1 * jax.random.normal(kw2, (3, 3, C, C), jnp.float32)   # HWIO
    g1 = 1.0 + 0.1 * jax.random.normal(kg1, (C,), jnp.float32)
    b1 = 0.1 * jax.random.normal(kb1, (C,), jnp.float32)
    g2 = 1.0 + 0.1 * jax.random.normal(kg2, (C,), jnp.float32)
    b2 = 0.1 * jax.random.normal(kb2, (C,), jnp.float32)

    out = jax.block_until_ready(residual_block(x, w1, w2, g1, b1, g2, b2))
    ref = reference(x, w1, w2, g1, b1, g2, b2)

    assert out.shape == (N, C, H, W)
    max_err = float(jnp.max(jnp.abs(out - ref)))
    # bf16 MXU operands and bf16 pre-BN intermediates (f32 accumulation and
    # f32 BN / residual math) vs the pure-f32 reference.
    assert jnp.allclose(out, ref, rtol=5e-2, atol=5e-2), \
        f"max abs err = {max_err}"

    print("KERNEL_OK")
</pallas_src>

<mosaic_0001>
module attributes {stable_mosaic.version = 11 : i64} {
  func.func @conv_stats_kernel(%arg0: i32, %arg1: i32, %arg2: memref<1x18x18x4xbf16, #tpu.memory_space<vmem>>, %arg3: memref<36x128xbf16, #tpu.memory_space<vmem>>, %arg4: memref<1x256x128xbf16, #tpu.memory_space<vmem>>, %arg5: memref<1x2x128xf32, #tpu.memory_space<vmem>>, %arg6: memref<256x36xbf16, #tpu.memory_space<vmem>>) attributes {dimension_semantics = [#tpu.dimension_semantics<parallel>, #tpu.dimension_semantics<arbitrary>], iteration_bounds = array<i64: 2, 1>, scalar_prefetch = 0 : i64, scratch_operands = 1 : i64, tpu.core_type = #tpu.core_type<tc>, window_params = [{transform_indices = @transform_0, window_bounds = array<i64: 1, 18, 18, 4>}, {transform_indices = @transform_1, window_bounds = array<i64: 36, 128>}, {transform_indices = @transform_2, window_bounds = array<i64: 1, 256, 128>}, {transform_indices = @transform_3, window_bounds = array<i64: 1, 2, 128>}]} {
    %c0_i32 = arith.constant 0 : i32
    %0 = arith.cmpi eq, %arg1, %c0_i32 : i32
    %1 = arith.extui %0 : i1 to i32
    %c0_i32_0 = arith.constant 0 : i32
    %2 = arith.cmpi ne, %1, %c0_i32_0 : i32
    scf.if %2 {
      %c0_12 = arith.constant 0 : index
      %c0_13 = arith.constant 0 : index
      %c0_14 = arith.constant 0 : index
      %c0_15 = arith.constant 0 : index
      %17 = vector.load %arg2[%c0_12, %c0_13, %c0_14, %c0_15] : memref<1x18x18x4xbf16, #tpu.memory_space<vmem>>, vector<1x16x16x4xbf16>
      %18 = vector.shape_cast %17 : vector<1x16x16x4xbf16> to vector<256x4xbf16>
      %c0_16 = arith.constant 0 : index
      %c0_17 = arith.constant 0 : index
      %c1 = arith.constant 1 : index
      %c0_18 = arith.constant 0 : index
      %19 = vector.load %arg2[%c0_16, %c0_17, %c1, %c0_18] : memref<1x18x18x4xbf16, #tpu.memory_space<vmem>>, vector<1x16x16x4xbf16>
      %20 = vector.shape_cast %19 : vector<1x16x16x4xbf16> to vector<256x4xbf16>
      %c0_19 = arith.constant 0 : index
      %c0_20 = arith.constant 0 : index
      %c2 = arith.constant 2 : index
      %c0_21 = arith.constant 0 : index
      %21 = vector.load %arg2[%c0_19, %c0_20, %c2, %c0_21] : memref<1x18x18x4xbf16, #tpu.memory_space<vmem>>, vector<1x16x16x4xbf16>
      %22 = vector.shape_cast %21 : vector<1x16x16x4xbf16> to vector<256x4xbf16>
      %c0_22 = arith.constant 0 : index
      %c1_23 = arith.constant 1 : index
      %c0_24 = arith.constant 0 : index
      %c0_25 = arith.constant 0 : index
      %23 = vector.load %arg2[%c0_22, %c1_23, %c0_24, %c0_25] : memref<1x18x18x4xbf16, #tpu.memory_space<vmem>>, vector<1x16x16x4xbf16>
      %24 = vector.shape_cast %23 : vector<1x16x16x4xbf16> to vector<256x4xbf16>
      %c0_26 = arith.constant 0 : index
      %c1_27 = arith.constant 1 : index
      %c1_28 = arith.constant 1 : index
      %c0_29 = arith.constant 0 : index
      %25 = vector.load %arg2[%c0_26, %c1_27, %c1_28, %c0_29] : memref<1x18x18x4xbf16, #tpu.memory_space<vmem>>, vector<1x16x16x4xbf16>
      %26 = vector.shape_cast %25 : vector<1x16x16x4xbf16> to vector<256x4xbf16>
      %c0_30 = arith.constant 0 : index
      %c1_31 = arith.constant 1 : index
      %c2_32 = arith.constant 2 : index
      %c0_33 = arith.constant 0 : index
      %27 = vector.load %arg2[%c0_30, %c1_31, %c2_32, %c0_33] : memref<1x18x18x4xbf16, #tpu.memory_space<vmem>>, vector<1x16x16x4xbf16>
      %28 = vector.shape_cast %27 : vector<1x16x16x4xbf16> to vector<256x4xbf16>
      %c0_34 = arith.constant 0 : index
      %c2_35 = arith.constant 2 : index
      %c0_36 = arith.constant 0 : index
      %c0_37 = arith.constant 0 : index
      %29 = vector.load %arg2[%c0_34, %c2_35, %c0_36, %c0_37] : memref<1x18x18x4xbf16, #tpu.memory_space<vmem>>, vector<1x16x16x4xbf16>
      %30 = vector.shape_cast %29 : vector<1x16x16x4xbf16> to vector<256x4xbf16>
      %c0_38 = arith.constant 0 : index
      %c2_39 = arith.constant 2 : index
      %c1_40 = arith.constant 1 : index
      %c0_41 = arith.constant 0 : index
      %31 = vector.load %arg2[%c0_38, %c2_39, %c1_40, %c0_41] : memref<1x18x18x4xbf16, #tpu.memory_space<vmem>>, vector<1x16x16x4xbf16>
      %32 = vector.shape_cast %31 : vector<1x16x16x4xbf16> to vector<256x4xbf16>
      %c0_42 = arith.constant 0 : index
      %c2_43 = arith.constant 2 : index
      %c2_44 = arith.constant 2 : index
      %c0_45 = arith.constant 0 : index
      %33 = vector.load %arg2[%c0_42, %c2_43, %c2_44, %c0_45] : memref<1x18x18x4xbf16, #tpu.memory_space<vmem>>, vector<1x16x16x4xbf16>
      %34 = vector.shape_cast %33 : vector<1x16x16x4xbf16> to vector<256x4xbf16>
      %35 = tpu.concatenate %18, %20, %22, %24, %26, %28, %30, %32, %34 in 1 : vector<256x4xbf16>, vector<256x4xbf16>, vector<256x4xbf16>, vector<256x4xbf16>, vector<256x4xbf16>, vector<256x4xbf16>, vector<256x4xbf16>, vector<256x4xbf16>, vector<256x4xbf16> -> vector<256x36xbf16>
      %c0_46 = arith.constant 0 : index
      %c0_47 = arith.constant 0 : index
      %36 = vector.load %arg6[%c0_46, %c0_47] : memref<256x36xbf16, #tpu.memory_space<vmem>>, vector<256x36xbf16>
      tpu.vector_store %arg6[%c0_46, %c0_47], %35 {strides = array<i32>} : memref<256x36xbf16, #tpu.memory_space<vmem>>, vector<256x36xbf16>,
    } else {
    }
    %c0 = arith.constant 0 : index
    %c0_1 = arith.constant 0 : index
    %3 = vector.load %arg6[%c0, %c0_1] : memref<256x36xbf16, #tpu.memory_space<vmem>>, vector<256x36xbf16>
    %c0_2 = arith.constant 0 : index
    %c0_3 = arith.constant 0 : index
    %4 = vector.load %arg3[%c0_2, %c0_3] : memref<36x128xbf16, #tpu.memory_space<vmem>>, vector<36x128xbf16>
    %cst = arith.constant dense<0.000000e+00> : vector<256x128xf32>
    %5 = tpu.matmul %3, %4, %cst {dimension_numbers = #tpu.dot_dimension_numbers<[1], [0], [0], [1], [0, 0, 1, 1], [], []>} : vector<256x36xbf16>, vector<36x128xbf16>, vector<256x128xf32> -> vector<256x128xf32>
    %6 = vector.shape_cast %5 : vector<256x128xf32> to vector<1x256x128xf32>
    %7 = arith.truncf %6 : vector<1x256x128xf32> to vector<1x256x128xbf16>
    %c0_4 = arith.constant 0 : index
    %c0_5 = arith.constant 0 : index
    %c0_6 = arith.constant 0 : index
    %8 = vector.load %arg4[%c0_4, %c0_5, %c0_6] : memref<1x256x128xbf16, #tpu.memory_space<vmem>>, vector<1x256x128xbf16>
    tpu.vector_store %arg4[%c0_4, %c0_5, %c0_6], %7 {strides = array<i32>} : memref<1x256x128xbf16, #tpu.memory_space<vmem>>, vector<1x256x128xbf16>,
    %cst_7 = arith.constant dense<0.000000e+00> : vector<128xf32>
    %9 = vector.multi_reduction <add>, %5, %cst_7 [0] : vector<256x128xf32> to vector<128xf32>
    %10 = vector.shape_cast %9 : vector<128xf32> to vector<1x128xf32>
    %11 = arith.mulf %5, %5 : vector<256x128xf32>
    %cst_8 = arith.constant dense<0.000000e+00> : vector<128xf32>
    %12 = vector.multi_reduction <add>, %11, %cst_8 [0] : vector<256x128xf32> to vector<128xf32>
    %13 = vector.shape_cast %12 : vector<128xf32> to vector<1x128xf32>
    %14 = tpu.concatenate %10, %13 in 0 : vector<1x128xf32>, vector<1x128xf32> -> vector<2x128xf32>
    %15 = vector.shape_cast %14 : vector<2x128xf32> to vector<1x2x128xf32>
    %c0_9 = arith.constant 0 : index
    %c0_10 = arith.constant 0 : index
    %c0_11 = arith.constant 0 : index
    %16 = vector.load %arg5[%c0_9, %c0_10, %c0_11] : memref<1x2x128xf32, #tpu.memory_space<vmem>>, vector<1x2x128xf32>
    tpu.vector_store %arg5[%c0_9, %c0_10, %c0_11], %15 {strides = array<i32>} : memref<1x2x128xf32, #tpu.memory_space<vmem>>, vector<1x2x128xf32>,
    return
  }
  func.func @transform_0(%arg0: i32, %arg1: i32) -> (i32, i32, i32, i32) {
    %c0_i32 = arith.constant 0 : i32
    %c0_i32_0 = arith.constant 0 : i32
    %c0_i32_1 = arith.constant 0 : i32
    %c0_i32_2 = arith.constant 0 : i32
    return %arg0, %c0_i32, %c0_i32_0, %c0_i32_1 : i32, i32, i32, i32
  }
  func.func @transform_1(%arg0: i32, %arg1: i32) -> (i32, i32) {
    %c0_i32 = arith.constant 0 : i32
    %c0_i32_0 = arith.constant 0 : i32
    return %c0_i32, %arg1 : i32, i32
  }
  func.func @transform_2(%arg0: i32, %arg1: i32) -> (i32, i32, i32) {
    %c0_i32 = arith.constant 0 : i32
    %c0_i32_0 = arith.constant 0 : i32
    return %arg0, %c0_i32, %arg1 : i32, i32, i32
  }
  func.func @transform_3(%arg0: i32, %arg1: i32) -> (i32, i32, i32) {
    %c0_i32 = arith.constant 0 : i32
    %c0_i32_0 = arith.constant 0 : i32
    return %arg0, %c0_i32, %arg1 : i32, i32, i32
  }
}

module attributes {stable_mosaic.version = 11 : i64} {
  func.func @bn_relu_conv_stats_kernel(%arg0: i32, %arg1: i32, %arg2: memref<1x256x128xbf16, #tpu.memory_space<vmem>>, %arg3: memref<1x128xf32, #tpu.memory_space<vmem>>, %arg4: memref<1x128xf32, #tpu.memory_space<vmem>>, %arg5: memref<36x128xbf16, #tpu.memory_space<vmem>>, %arg6: memref<1x256x128xbf16, #tpu.memory_space<vmem>>, %arg7: memref<1x2x128xf32, #tpu.memory_space<vmem>>, %arg8: memref<256x36xbf16, #tpu.memory_space<vmem>>) attributes {dimension_semantics = [#tpu.dimension_semantics<parallel>, #tpu.dimension_semantics<arbitrary>], iteration_bounds = array<i64: 2, 1>, scalar_prefetch = 0 : i64, scratch_operands = 1 : i64, tpu.core_type = #tpu.core_type<tc>, window_params = [{transform_indices = @transform_0, window_bounds = array<i64: 1, 256, 128>}, {pipeline_mode = #tpu.pipeline_mode<synchronous>, transform_indices = @transform_1, window_bounds = array<i64: 1, 128>}, {pipeline_mode = #tpu.pipeline_mode<synchronous>, transform_indices = @transform_2, window_bounds = array<i64: 1, 128>}, {transform_indices = @transform_3, window_bounds = array<i64: 36, 128>}, {transform_indices = @transform_4, window_bounds = array<i64: 1, 256, 128>}, {transform_indices = @transform_5, window_bounds = array<i64: 1, 2, 128>}]} {
    %c0_i32 = arith.constant 0 : i32
    %0 = arith.cmpi eq, %arg1, %c0_i32 : i32
    %1 = arith.extui %0 : i1 to i32
    %c0_i32_0 = arith.constant 0 : i32
    %2 = arith.cmpi ne, %1, %c0_i32_0 : i32
    scf.if %2 {
      %c0_12 = arith.constant 0 : index
      %c0_13 = arith.constant 0 : index
      %c0_14 = arith.constant 0 : index
      %17 = vector.load %arg2[%c0_12, %c0_13, %c0_14] : memref<1x256x128xbf16, #tpu.memory_space<vmem>>, vector<1x256x4xbf16>
      %18 = arith.extf %17 : vector<1x256x4xbf16> to vector<1x256x4xf32>
      %c0_15 = arith.constant 0 : index
      %c0_16 = arith.constant 0 : index
      %19 = vector.load %arg3[%c0_15, %c0_16] : memref<1x128xf32, #tpu.memory_space<vmem>>, vector<1x4xf32>
      %20 = vector.shape_cast %19 : vector<1x4xf32> to vector<1x1x4xf32>
      %21 = vector.broadcast %20 : vector<1x1x4xf32> to vector<1x256x4xf32>
      %22 = arith.mulf %18, %21 : vector<1x256x4xf32>
      %c0_17 = arith.constant 0 : index
      %c0_18 = arith.constant 0 : index
      %23 = vector.load %arg4[%c0_17, %c0_18] : memref<1x128xf32, #tpu.memory_space<vmem>>, vector<1x4xf32>
      %24 = vector.shape_cast %23 : vector<1x4xf32> to vector<1x1x4xf32>
      %25 = vector.broadcast %24 : vector<1x1x4xf32> to vector<1x256x4xf32>
      %26 = arith.addf %22, %25 : vector<1x256x4xf32>
      %cst_19 = arith.constant 0.000000e+00 : f32
      %27 = vector.broadcast %cst_19 : f32 to vector<1x256x4xf32>
      %28 = arith.maximumf %26, %27 : vector<1x256x4xf32>
      %29 = vector.shape_cast %28 : vector<1x256x4xf32> to vector<16x16x4xf32>
      %cst_20 = arith.constant 0.000000e+00 : f32
      %30 = vector.broadcast %cst_20 : f32 to vector<16x1x4xf32>
      %cst_21 = arith.constant 0.000000e+00 : f32
      %31 = vector.broadcast %cst_21 : f32 to vector<1x18x4xf32>
      %32 = tpu.concatenate %30, %29, %30 in 1 : vector<16x1x4xf32>, vector<16x16x4xf32>, vector<16x1x4xf32> -> vector<16x18x4xf32>
      %33 = tpu.concatenate %31, %32, %31 in 0 : vector<1x18x4xf32>, vector<16x18x4xf32>, vector<1x18x4xf32> -> vector<18x18x4xf32>
      %34 = arith.truncf %33 : vector<18x18x4xf32> to vector<18x18x4xbf16>
      %35 = vector.extract_strided_slice %34 {offsets = [0, 0, 0], sizes = [16, 16, 4], strides = [1, 1, 1]} : vector<18x18x4xbf16> to vector<16x16x4xbf16>
      %36 = vector.shape_cast %35 : vector<16x16x4xbf16> to vector<256x4xbf16>
      %37 = vector.extract_strided_slice %34 {offsets = [0, 1, 0], sizes = [16, 16, 4], strides = [1, 1, 1]} : vector<18x18x4xbf16> to vector<16x16x4xbf16>
      %38 = vector.shape_cast %37 : vector<16x16x4xbf16> to vector<256x4xbf16>
      %39 = vector.extract_strided_slice %34 {offsets = [0, 2, 0], sizes = [16, 16, 4], strides = [1, 1, 1]} : vector<18x18x4xbf16> to vector<16x16x4xbf16>
      %40 = vector.shape_cast %39 : vector<16x16x4xbf16> to vector<256x4xbf16>
      %41 = vector.extract_strided_slice %34 {offsets = [1, 0, 0], sizes = [16, 16, 4], strides = [1, 1, 1]} : vector<18x18x4xbf16> to vector<16x16x4xbf16>
      %42 = vector.shape_cast %41 : vector<16x16x4xbf16> to vector<256x4xbf16>
      %43 = vector.extract_strided_slice %34 {offsets = [1, 1, 0], sizes = [16, 16, 4], strides = [1, 1, 1]} : vector<18x18x4xbf16> to vector<16x16x4xbf16>
      %44 = vector.shape_cast %43 : vector<16x16x4xbf16> to vector<256x4xbf16>
      %45 = vector.extract_strided_slice %34 {offsets = [1, 2, 0], sizes = [16, 16, 4], strides = [1, 1, 1]} : vector<18x18x4xbf16> to vector<16x16x4xbf16>
      %46 = vector.shape_cast %45 : vector<16x16x4xbf16> to vector<256x4xbf16>
      %47 = vector.extract_strided_slice %34 {offsets = [2, 0, 0], sizes = [16, 16, 4], strides = [1, 1, 1]} : vector<18x18x4xbf16> to vector<16x16x4xbf16>
      %48 = vector.shape_cast %47 : vector<16x16x4xbf16> to vector<256x4xbf16>
      %49 = vector.extract_strided_slice %34 {offsets = [2, 1, 0], sizes = [16, 16, 4], strides = [1, 1, 1]} : vector<18x18x4xbf16> to vector<16x16x4xbf16>
      %50 = vector.shape_cast %49 : vector<16x16x4xbf16> to vector<256x4xbf16>
      %51 = vector.extract_strided_slice %34 {offsets = [2, 2, 0], sizes = [16, 16, 4], strides = [1, 1, 1]} : vector<18x18x4xbf16> to vector<16x16x4xbf16>
      %52 = vector.shape_cast %51 : vector<16x16x4xbf16> to vector<256x4xbf16>
      %53 = tpu.concatenate %36, %38, %40, %42, %44, %46, %48, %50, %52 in 1 : vector<256x4xbf16>, vector<256x4xbf16>, vector<256x4xbf16>, vector<256x4xbf16>, vector<256x4xbf16>, vector<256x4xbf16>, vector<256x4xbf16>, vector<256x4xbf16>, vector<256x4xbf16> -> vector<256x36xbf16>
      %c0_22 = arith.constant 0 : index
      %c0_23 = arith.constant 0 : index
      %54 = vector.load %arg8[%c0_22, %c0_23] : memref<256x36xbf16, #tpu.memory_space<vmem>>, vector<256x36xbf16>
      tpu.vector_store %arg8[%c0_22, %c0_23], %53 {strides = array<i32>} : memref<256x36xbf16, #tpu.memory_space<vmem>>, vector<256x36xbf16>,
    } else {
    }
    %c0 = arith.constant 0 : index
    %c0_1 = arith.constant 0 : index
    %3 = vector.load %arg8[%c0, %c0_1] : memref<256x36xbf16, #tpu.memory_space<vmem>>, vector<256x36xbf16>
    %c0_2 = arith.constant 0 : index
    %c0_3 = arith.constant 0 : index
    %4 = vector.load %arg5[%c0_2, %c0_3] : memref<36x128xbf16, #tpu.memory_space<vmem>>, vector<36x128xbf16>
    %cst = arith.constant dense<0.000000e+00> : vector<256x128xf32>
    %5 = tpu.matmul %3, %4, %cst {dimension_numbers = #tpu.dot_dimension_numbers<[1], [0], [0], [1], [0, 0, 1, 1], [], []>} : vector<256x36xbf16>, vector<36x128xbf16>, vector<256x128xf32> -> vector<256x128xf32>
    %6 = vector.shape_cast %5 : vector<256x128xf32> to vector<1x256x128xf32>
    %7 = arith.truncf %6 : vector<1x256x128xf32> to vector<1x256x128xbf16>
    %c0_4 = arith.constant 0 : index
    %c0_5 = arith.constant 0 : index
    %c0_6 = arith.constant 0 : index
    %8 = vector.load %arg6[%c0_4, %c0_5, %c0_6] : memref<1x256x128xbf16, #tpu.memory_space<vmem>>, vector<1x256x128xbf16>
    tpu.vector_store %arg6[%c0_4, %c0_5, %c0_6], %7 {strides = array<i32>} : memref<1x256x128xbf16, #tpu.memory_space<vmem>>, vector<1x256x128xbf16>,
    %cst_7 = arith.constant dense<0.000000e+00> : vector<128xf32>
    %9 = vector.multi_reduction <add>, %5, %cst_7 [0] : vector<256x128xf32> to vector<128xf32>
    %10 = vector.shape_cast %9 : vector<128xf32> to vector<1x128xf32>
    %11 = arith.mulf %5, %5 : vector<256x128xf32>
    %cst_8 = arith.constant dense<0.000000e+00> : vector<128xf32>
    %12 = vector.multi_reduction <add>, %11, %cst_8 [0] : vector<256x128xf32> to vector<128xf32>
    %13 = vector.shape_cast %12 : vector<128xf32> to vector<1x128xf32>
    %14 = tpu.concatenate %10, %13 in 0 : vector<1x128xf32>, vector<1x128xf32> -> vector<2x128xf32>
    %15 = vector.shape_cast %14 : vector<2x128xf32> to vector<1x2x128xf32>
    %c0_9 = arith.constant 0 : index
    %c0_10 = arith.constant 0 : index
    %c0_11 = arith.constant 0 : index
    %16 = vector.load %arg7[%c0_9, %c0_10, %c0_11] : memref<1x2x128xf32, #tpu.memory_space<vmem>>, vector<1x2x128xf32>
    tpu.vector_store %arg7[%c0_9, %c0_10, %c0_11], %15 {strides = array<i32>} : memref<1x2x128xf32, #tpu.memory_space<vmem>>, vector<1x2x128xf32>,
    return
  }
  func.func @transform_0(%arg0: i32, %arg1: i32) -> (i32, i32, i32) {
    %c0_i32 = arith.constant 0 : i32
    %c0_i32_0 = arith.constant 0 : i32
    %c0_i32_1 = arith.constant 0 : i32
    return %arg0, %c0_i32, %c0_i32_0 : i32, i32, i32
  }
  func.func @transform_1(%arg0: i32, %arg1: i32) -> (i32, i32) {
    %c0_i32 = arith.constant 0 : i32
    %c0_i32_0 = arith.constant 0 : i32
    %c0_i32_1 = arith.constant 0 : i32
    return %c0_i32, %c0_i32_0 : i32, i32
  }
  func.func @transform_2(%arg0: i32, %arg1: i32) -> (i32, i32) {
    %c0_i32 = arith.constant 0 : i32
    %c0_i32_0 = arith.constant 0 : i32
    %c0_i32_1 = arith.constant 0 : i32
    return %c0_i32, %c0_i32_0 : i32, i32
  }
  func.func @transform_3(%arg0: i32, %arg1: i32) -> (i32, i32) {
    %c0_i32 = arith.constant 0 : i32
    %c0_i32_0 = arith.constant 0 : i32
    return %c0_i32, %arg1 : i32, i32
  }
  func.func @transform_4(%arg0: i32, %arg1: i32) -> (i32, i32, i32) {
    %c0_i32 = arith.constant 0 : i32
    %c0_i32_0 = arith.constant 0 : i32
    return %arg0, %c0_i32, %arg1 : i32, i32, i32
  }
  func.func @transform_5(%arg0: i32, %arg1: i32) -> (i32, i32, i32) {
    %c0_i32 = arith.constant 0 : i32
    %c0_i32_0 = arith.constant 0 : i32
    return %arg0, %c0_i32, %arg1 : i32, i32, i32
  }
}

module attributes {stable_mosaic.version = 11 : i64} {
  func.func @bn_add_relu_kernel(%arg0: i32, %arg1: memref<1x256x128xbf16, #tpu.memory_space<vmem>>, %arg2: memref<1x256x4xf32, #tpu.memory_space<vmem>>, %arg3: memref<1x128xf32, #tpu.memory_space<vmem>>, %arg4: memref<1x128xf32, #tpu.memory_space<vmem>>, %arg5: memref<1x256x4xf32, #tpu.memory_space<vmem>>) attributes {dimension_semantics = [#tpu.dimension_semantics<parallel>], iteration_bounds = array<i64: 2>, scalar_prefetch = 0 : i64, scratch_operands = 0 : i64, tpu.core_type = #tpu.core_type<tc>, window_params = [{transform_indices = @transform_0, window_bounds = array<i64: 1, 256, 128>}, {transform_indices = @transform_1, window_bounds = array<i64: 1, 256, 4>}, {pipeline_mode = #tpu.pipeline_mode<synchronous>, transform_indices = @transform_2, window_bounds = array<i64: 1, 128>}, {pipeline_mode = #tpu.pipeline_mode<synchronous>, transform_indices = @transform_3, window_bounds = array<i64: 1, 128>}, {transform_indices = @transform_4, window_bounds = array<i64: 1, 256, 4>}]} {
    %c0 = arith.constant 0 : index
    %c0_0 = arith.constant 0 : index
    %c0_1 = arith.constant 0 : index
    %0 = vector.load %arg1[%c0, %c0_0, %c0_1] : memref<1x256x128xbf16, #tpu.memory_space<vmem>>, vector<1x256x4xbf16>
    %1 = arith.extf %0 : vector<1x256x4xbf16> to vector<1x256x4xf32>
    %c0_2 = arith.constant 0 : index
    %c0_3 = arith.constant 0 : index
    %2 = vector.load %arg3[%c0_2, %c0_3] : memref<1x128xf32, #tpu.memory_space<vmem>>, vector<1x4xf32>
    %3 = vector.shape_cast %2 : vector<1x4xf32> to vector<1x1x4xf32>
    %4 = vector.broadcast %3 : vector<1x1x4xf32> to vector<1x256x4xf32>
    %5 = arith.mulf %1, %4 : vector<1x256x4xf32>
    %c0_4 = arith.constant 0 : index
    %c0_5 = arith.constant 0 : index
    %6 = vector.load %arg4[%c0_4, %c0_5] : memref<1x128xf32, #tpu.memory_space<vmem>>, vector<1x4xf32>
    %7 = vector.shape_cast %6 : vector<1x4xf32> to vector<1x1x4xf32>
    %8 = vector.broadcast %7 : vector<1x1x4xf32> to vector<1x256x4xf32>
    %9 = arith.addf %5, %8 : vector<1x256x4xf32>
    %c0_6 = arith.constant 0 : index
    %c0_7 = arith.constant 0 : index
    %c0_8 = arith.constant 0 : index
    %10 = vector.load %arg2[%c0_6, %c0_7, %c0_8] : memref<1x256x4xf32, #tpu.memory_space<vmem>>, vector<1x256x4xf32>
    %11 = arith.addf %9, %10 : vector<1x256x4xf32>
    %cst = arith.constant 0.000000e+00 : f32
    %12 = vector.broadcast %cst : f32 to vector<1x256x4xf32>
    %13 = arith.maximumf %11, %12 : vector<1x256x4xf32>
    %c0_9 = arith.constant 0 : index
    %c0_10 = arith.constant 0 : index
    %c0_11 = arith.constant 0 : index
    %14 = vector.load %arg5[%c0_9, %c0_10, %c0_11] : memref<1x256x4xf32, #tpu.memory_space<vmem>>, vector<1x256x4xf32>
    tpu.vector_store %arg5[%c0_9, %c0_10, %c0_11], %13 {strides = array<i32>} : memref<1x256x4xf32, #tpu.memory_space<vmem>>, vector<1x256x4xf32>,
    return
  }
  func.func @transform_0(%arg0: i32) -> (i32, i32, i32) {
    %c0_i32 = arith.constant 0 : i32
    %c0_i32_0 = arith.constant 0 : i32
    %c0_i32_1 = arith.constant 0 : i32
    return %arg0, %c0_i32, %c0_i32_0 : i32, i32, i32
  }
  func.func @transform_1(%arg0: i32) -> (i32, i32, i32) {
    %c0_i32 = arith.constant 0 : i32
    %c0_i32_0 = arith.constant 0 : i32
    %c0_i32_1 = arith.constant 0 : i32
    return %arg0, %c0_i32, %c0_i32_0 : i32, i32, i32
  }
  func.func @transform_2(%arg0: i32) -> (i32, i32) {
    %c0_i32 = arith.constant 0 : i32
    %c0_i32_0 = arith.constant 0 : i32
    %c0_i32_1 = arith.constant 0 : i32
    return %c0_i32, %c0_i32_0 : i32, i32
  }
  func.func @transform_3(%arg0: i32) -> (i32, i32) {
    %c0_i32 = arith.constant 0 : i32
    %c0_i32_0 = arith.constant 0 : i32
    %c0_i32_1 = arith.constant 0 : i32
    return %c0_i32, %c0_i32_0 : i32, i32
  }
  func.func @transform_4(%arg0: i32) -> (i32, i32, i32) {
    %c0_i32 = arith.constant 0 : i32
    %c0_i32_0 = arith.constant 0 : i32
    %c0_i32_1 = arith.constant 0 : i32
    return %arg0, %c0_i32, %c0_i32_0 : i32, i32, i32
  }
}

</mosaic_0001>

<llo_original>
// kernel: residual_block.5
$region0: #{residual_block.5}
  #allocation0 [shape = 'u32[]', space=smem, size = 0x4, offset = 0x4, fixed_abs, tag = 'smem constant byte address 0x4 - core index']
  #allocation1 [shape = 'u32[144,128]{1,0:T(1,128)}', space=vmem, size = 0x12000, scoped, tag = 'internal scratch']
  %s0 = inlined_call_operand.vmem [shape: bf16[2,256,128], index: 0, kind: input, shape index: {}]
  %s1 = inlined_call_operand.vmem [shape: f32[2,256,4], index: 1, kind: input, shape index: {}]
  %s2 = inlined_call_operand.vmem [shape: f32[1,128], index: 2, kind: input, shape index: {}]
  %s3 = inlined_call_operand.vmem [shape: f32[1,128], index: 3, kind: input, shape index: {}]
  %s4 = inlined_call_operand.vmem [shape: f32[2,256,4], index: 4, kind: output, shape index: {}]
  %s5 = sld [smem:[#allocation0]]
  $region49: #{residual_block.5} parent=0
    _
  %s7 = ssub.s32 1, %s5
  %s8 = scalar_select 0, %s7, %s5
  loop: start=0, step=1, limit=4
  $region2: #{residual_block.5} parent=0 // loop_pre_header
    _
  $region3: #{residual_block.5} parent=0 // loop_header
    %s10 = sphi 0, %s14
    %p11 = scmp.ge.s32.totalorder %s10, 4
    %s20 = sphi 0, %s22
    %s23 = sphi 0, %s20
    %s24 = sphi 0, %s23
    %s40 = sphi 0, %s24
    %s46 = sphi 0, %s48
    %s49 = sphi 0, %s46
    %s50 = sphi 0, %s49
    %s66 = sphi 0, %s50
    %s70 = sphi 0, %s70
    %s72 = sphi 0, %s70
    %s73 = sphi 0, %s72
    %s87 = sphi 0, %s73
    %s91 = sphi 0, %s91
    %s93 = sphi 0, %s91
    %s94 = sphi 0, %s93
    %s108 = sphi 0, %s94
    %s114 = sphi 0, %s116
    %s117 = sphi 0, %s114
    %s118 = sphi 0, %s117
    %s134 = sphi 0, %s118
  $region4: #{residual_block.5} parent=0 // loop_header_branch
    %13 = sbr.rel (%p11) target = $region8
  $region5: #{residual_block.5} parent=0 // loop_body
    %s15 = ssub.s32 %s10, 1
    %s16 = ssub.s32 %s10, 2
    %s17 = sadd.s32 %s10, 1
    %s18 = ssub.s32 %s10, %s17
    %p19 = scmp.eq.s32.totalorder %s18, 0
    %s21 = sadd.s32 %s20, 1
    %s22 = scalar_select %p19, %s20, %s21
    %p25 = pneg %p19
    %p26 = scmp.eq.s32.totalorder %s10, 1
    %p27 = por %p25, %p26
    %p28 = scmp.ne.s32.totalorder %s20, %s23
    %p29 = scmp.eq.s32.totalorder %s10, 0
    %p30 = por %p28, %p29
    %p31 = scmp.ne.s32.totalorder %s20, %s23
    %p32 = scmp.eq.s32.totalorder %s15, 1
    %p33 = por %p31, %p32
    %p34 = scmp.ne.s32.totalorder %s23, %s24
    %p35 = scmp.eq.s32.totalorder %s15, 0
    %p36 = por %p34, %p35
    %p37 = scmp.ne.s32.totalorder %s23, %s24
    %p38 = scmp.eq.s32.totalorder %s16, 1
    %p39 = por %p37, %p38
    %p41 = scmp.ne.s32.totalorder %s24, %s40
    %p42 = scmp.eq.s32.totalorder %s16, 0
    %p43 = por %p41, %p42
    %s44 = ssub.s32 %s10, %s17
    %p45 = scmp.eq.s32.totalorder %s44, 0
    %s47 = sadd.s32 %s46, 1
    %s48 = scalar_select %p45, %s46, %s47
    %p51 = pneg %p45
    %p52 = scmp.eq.s32.totalorder %s10, 1
    %p53 = por %p51, %p52
    %p54 = scmp.ne.s32.totalorder %s46, %s49
    %p55 = scmp.eq.s32.totalorder %s10, 0
    %p56 = por %p54, %p55
    %p57 = scmp.ne.s32.totalorder %s46, %s49
    %p58 = scmp.eq.s32.totalorder %s15, 1
    %p59 = por %p57, %p58
    %p60 = scmp.ne.s32.totalorder %s49, %s50
    %p61 = scmp.eq.s32.totalorder %s15, 0
    %p62 = por %p60, %p61
    %p63 = scmp.ne.s32.totalorder %s49, %s50
    %p64 = scmp.eq.s32.totalorder %s16, 1
    %p65 = por %p63, %p64
    %p67 = scmp.ne.s32.totalorder %s50, %s66
    %p68 = scmp.eq.s32.totalorder %s16, 0
    %p69 = por %p67, %p68
    %s71 = sadd.s32 %s70, 1
    %p74 = scmp.eq.s32.totalorder %s10, 1
    %p75 = scmp.ne.s32.totalorder %s70, %s72
    %p76 = scmp.eq.s32.totalorder %s10, 0
    %p77 = por %p75, %p76
    %p78 = scmp.ne.s32.totalorder %s70, %s72
    %p79 = scmp.eq.s32.totalorder %s15, 1
    %p80 = por %p78, %p79
    %p81 = scmp.ne.s32.totalorder %s72, %s73
    %p82 = scmp.eq.s32.totalorder %s15, 0
    %p83 = por %p81, %p82
    %p84 = scmp.ne.s32.totalorder %s72, %s73
    %p85 = scmp.eq.s32.totalorder %s16, 1
    %p86 = por %p84, %p85
    %p88 = scmp.ne.s32.totalorder %s73, %s87
    %p89 = scmp.eq.s32.totalorder %s16, 0
    %p90 = por %p88, %p89
    %s92 = sadd.s32 %s91, 1
    %p95 = scmp.eq.s32.totalorder %s10, 1
    %p96 = scmp.ne.s32.totalorder %s91, %s93
    %p97 = scmp.eq.s32.totalorder %s10, 0
    %p98 = por %p96, %p97
    %p99 = scmp.ne.s32.totalorder %s91, %s93
    %p100 = scmp.eq.s32.totalorder %s15, 1
    %p101 = por %p99, %p100
    %p102 = scmp.ne.s32.totalorder %s93, %s94
    %p103 = scmp.eq.s32.totalorder %s15, 0
    %p104 = por %p102, %p103
    %p105 = scmp.ne.s32.totalorder %s93, %s94
    %p106 = scmp.eq.s32.totalorder %s16, 1
    %p107 = por %p105, %p106
    %p109 = scmp.ne.s32.totalorder %s94, %s108
    %p110 = scmp.eq.s32.totalorder %s16, 0
    %p111 = por %p109, %p110
    %s112 = ssub.s32 %s10, %s17
    %p113 = scmp.eq.s32.totalorder %s112, 0
    %s115 = sadd.s32 %s114, 1
    %s116 = scalar_select %p113, %s114, %s115
    %p119 = pneg %p113
    %p120 = scmp.eq.s32.totalorder %s10, 1
    %p121 = por %p119, %p120
    %p122 = scmp.ne.s32.totalorder %s114, %s117
    %p123 = scmp.eq.s32.totalorder %s10, 0
    %p124 = por %p122, %p123
    %p125 = scmp.ne.s32.totalorder %s114, %s117
    %p126 = scmp.eq.s32.totalorder %s15, 1
    %p127 = por %p125, %p126
    %p128 = scmp.ne.s32.totalorder %s117, %s118
    %p129 = scmp.eq.s32.totalorder %s15, 0
    %p130 = por %p128, %p129
    %p131 = scmp.ne.s32.totalorder %s117, %s118
    %p132 = scmp.eq.s32.totalorder %s16, 1
    %p133 = por %p131, %p132
    %p135 = scmp.ne.s32.totalorder %s118, %s134
    %p136 = scmp.eq.s32.totalorder %s16, 0
    %p137 = por %p135, %p136
    %p138 = scmp.le.s32.totalorder 1, %s10
    %p139 = scmp.lt.s32.totalorder %s10, 3
    %p140 = pnand %p138, %p139
    %p141 = pneg %p140
    // Predicated region
    $region9: #{residual_block.5} parent=5 // pred_check
      _
    $region10: #{residual_block.5} parent=5 // pred_check_branch
      %143 = sbr.rel (%p140) target = $region12
    $region11: #{residual_block.5} parent=5 // pred_region
      %s144 = ssub.s32 %s10, 1
      // Predicated region
      $region13: #{residual_block.5} parent=11 // pred_check
        %p145 = pneg %p83
      $region14: #{residual_block.5} parent=11 // pred_check_branch
        %147 = sbr.rel (%p145) target = $region16
      $region15: #{residual_block.5} parent=11 // pred_region
        _
      $region16: #{residual_block.5} parent=11 // pred_fallthru
        _
      // Predicated region
      $region17: #{residual_block.5} parent=11 // pred_check
        %p148 = pneg %p104
      $region18: #{residual_block.5} parent=11 // pred_check_branch
        %150 = sbr.rel (%p148) target = $region20
      $region19: #{residual_block.5} parent=11 // pred_region
        _
      $region20: #{residual_block.5} parent=11 // pred_fallthru
        _
    $region12: #{residual_block.5} parent=5 // pred_fallthru
      _
    %p151 = scmp.lt.s32.totalorder %s10, 2
    // Predicated region
    $region21: #{residual_block.5} parent=5 // pred_check
      %p152 = pneg %p151
    $region22: #{residual_block.5} parent=5 // pred_check_branch
      %154 = sbr.rel (%p152) target = $region24
    $region23: #{residual_block.5} parent=5 // pred_region
      // Predicated region
      $region25: #{residual_block.5} parent=23 // pred_check
        %p155 = pneg %p30
      $region26: #{residual_block.5} parent=23 // pred_check_branch
        %157 = sbr.rel (%p155) target = $region28
      $region27: #{residual_block.5} parent=23 // pred_region
        %p158 = scmp.lt.s32.totalorder %s10, 1
        %s159 = scalar_select %p158, %s10, 1
        %s160 = smul.addr %s159, 32
        %s161 = smul.addr %s160, 4
        %s162 = scalar_lea.vmem %s0, %s161
      $region28: #{residual_block.5} parent=23 // pred_fallthru
        _
      // Predicated region
      $region29: #{residual_block.5} parent=23 // pred_check
        %p163 = pneg %p56
      $region30: #{residual_block.5} parent=23 // pred_check_branch
        %165 = sbr.rel (%p163) target = $region32
      $region31: #{residual_block.5} parent=23 // pred_region
        %p166 = scmp.lt.s32.totalorder %s10, 1
        %s167 = scalar_select %p166, %s10, 1
        %s168 = smul.addr %s167, 32
        %s169 = smul.addr %s168, 8
        %s170 = scalar_lea.vmem %s1, %s169
      $region32: #{residual_block.5} parent=23 // pred_fallthru
        _
    $region24: #{residual_block.5} parent=5 // pred_fallthru
      _
    %p171 = scmp.le.s32.totalorder 1, %s10
    %p172 = scmp.lt.s32.totalorder %s10, 3
    %p173 = pnand %p171, %p172
    %p174 = pneg %p173
    // Predicated region
    $region33: #{residual_block.5} parent=5 // pred_check
      _
    $region34: #{residual_block.5} parent=5 // pred_check_branch
      %176 = sbr.rel (%p173) target = $region36
    $region35: #{residual_block.5} parent=5 // pred_region
      %s177 = ssub.s32 %s10, 1
      %p178 = scmp.lt.s32.totalorder %s15, 1
      %s179 = scalar_select %p178, %s15, 1
      %s180 = smul.addr %s179, 32
      %s181 = smul.addr %s180, 4
      %s182 = scalar_lea.vmem %s0, %s181
      %p183 = pneg %p36
      %p184 = pneg %p33
      %p185 = scmp.lt.s32.totalorder %s15, 1
      %s186 = scalar_select %p185, %s15, 1
      %s187 = smul.addr %s186, 32
      %s188 = smul.addr %s187, 8
      %s189 = scalar_lea.vmem %s1, %s188
      %p190 = pneg %p62
      %p191 = pneg %p59
      %p192 = pneg %p83
      %p193 = pneg %p80
      %p194 = pneg %p104
      %p195 = pneg %p101
      %p196 = pneg %p130
      %p197 = pneg %p127
      %p198 = scmp.lt.s32.totalorder %s15, 1
      %s199 = scalar_select %p198, %s15, 1
      %s200 = smul.addr %s199, 32
      %s201 = smul.addr %s200, 8
      %s202 = scalar_lea.vmem %s4, %s201
      %p203 = scmp.lt.s32.totalorder %s15, 1
      %s204 = scalar_select %p203, %s15, 1
      %s205 = smul.addr %s204, 32
      %s206 = smul.addr %s205, 4
      %s207 = scalar_lea.vmem %s0, %s206
      %p208 = scmp.lt.s32.totalorder %s15, 1
      %s209 = scalar_select %p208, %s15, 1
      %s210 = smul.addr %s209, 32
      %s211 = smul.addr %s210, 8
      %s212 = scalar_lea.vmem %s1, %s211
      %p213 = scmp.lt.s32.totalorder %s15, 1
      %s214 = scalar_select %p213, %s15, 1
      %s215 = smul.addr %s214, 32
      %s216 = smul.addr %s215, 8
      %s217 = scalar_lea.vmem %s4, %s216
      %v218 = vld [vmem:[%s207] sm:$0xf]
      %v219 = vld [vmem:[%s207 + $0x4] sm:$0xf]
      %v220 = vld [vmem:[%s207 + $0x8] sm:$0xf]
      %v221 = vld [vmem:[%s207 + $0xc] sm:$0xf]
      %v222 = vld [vmem:[%s207 + $0x10] sm:$0xf]
      %v223 = vld [vmem:[%s207 + $0x14] sm:$0xf]
      %v224 = vld [vmem:[%s207 + $0x18] sm:$0xf]
      %v225 = vld [vmem:[%s207 + $0x1c] sm:$0xf]
      %v226 = vld [vmem:[%s207 + $0x20] sm:$0xf]
      %v227 = vld [vmem:[%s207 + $0x24] sm:$0xf]
      %v228 = vld [vmem:[%s207 + $0x28] sm:$0xf]
      %v229 = vld [vmem:[%s207 + $0x2c] sm:$0xf]
      %v230 = vld [vmem:[%s207 + $0x30] sm:$0xf]
      %v231 = vld [vmem:[%s207 + $0x34] sm:$0xf]
      %v232 = vld [vmem:[%s207 + $0x38] sm:$0xf]
      %v233 = vld [vmem:[%s207 + $0x3c] sm:$0xf]
      %v234 = vld [vmem:[%s207 + $0x40] sm:$0xf]
      %v235 = vld [vmem:[%s207 + $0x44] sm:$0xf]
      %v236 = vld [vmem:[%s207 + $0x48] sm:$0xf]
      %v237 = vld [vmem:[%s207 + $0x4c] sm:$0xf]
      %v238 = vld [vmem:[%s207 + $0x50] sm:$0xf]
      %v239 = vld [vmem:[%s207 + $0x54] sm:$0xf]
      %v240 = vld [vmem:[%s207 + $0x58] sm:$0xf]
      %v241 = vld [vmem:[%s207 + $0x5c] sm:$0xf]
      %v242 = vld [vmem:[%s207 + $0x60] sm:$0xf]
      %v243 = vld [vmem:[%s207 + $0x64] sm:$0xf]
      %v244 = vld [vmem:[%s207 + $0x68] sm:$0xf]
      %v245 = vld [vmem:[%s207 + $0x6c] sm:$0xf]
      %v246 = vld [vmem:[%s207 + $0x70] sm:$0xf]
      %v247 = vld [vmem:[%s207 + $0x74] sm:$0xf]
      %v248 = vld [vmem:[%s207 + $0x78] sm:$0xf]
      %v249 = vld [vmem:[%s207 + $0x7c] sm:$0xf]
      %v250 = vunpack.c.l.bf16 %v218
      %v251 = vunpack.c.l.bf16 %v219
      %v252 = vunpack.c.l.bf16 %v220
      %v253 = vunpack.c.l.bf16 %v221
      %v254 = vunpack.c.l.bf16 %v222
      %v255 = vunpack.c.l.bf16 %v223
      %v256 = vunpack.c.l.bf16 %v224
      %v257 = vunpack.c.l.bf16 %v225
      %v258 = vunpack.c.l.bf16 %v226
      %v259 = vunpack.c.l.bf16 %v227
      %v260 = vunpack.c.l.bf16 %v228
      %v261 = vunpack.c.l.bf16 %v229
      %v262 = vunpack.c.l.bf16 %v230
      %v263 = vunpack.c.l.bf16 %v231
      %v264 = vunpack.c.l.bf16 %v232
      %v265 = vunpack.c.l.bf16 %v233
      %v266 = vunpack.c.l.bf16 %v234
      %v267 = vunpack.c.l.bf16 %v235
      %v268 = vunpack.c.l.bf16 %v236
      %v269 = vunpack.c.l.bf16 %v237
      %v270 = vunpack.c.l.bf16 %v238
      %v271 = vunpack.c.l.bf16 %v239
      %v272 = vunpack.c.l.bf16 %v240
      %v273 = vunpack.c.l.bf16 %v241
      %v274 = vunpack.c.l.bf16 %v242
      %v275 = vunpack.c.l.bf16 %v243
      %v276 = vunpack.c.l.bf16 %v244
      %v277 = vunpack.c.l.bf16 %v245
      %v278 = vunpack.c.l.bf16 %v246
      %v279 = vunpack.c.l.bf16 %v247
      %v280 = vunpack.c.l.bf16 %v248
      %v281 = vunpack.c.l.bf16 %v249
      %v282 = vld [vmem:[%s2] sm:$0x1]
      %v284 = vlaneseq
      %v285 = vshrl.u32 %v284, 7
      %v286 = vsub.s32 0, %v285
      %v287 = vrot.slane %v282, %v286
      %v289 = vmul.f32 %v250, %v287
      %v290 = vmul.f32 %v251, %v287
      %v291 = vmul.f32 %v252, %v287
      %v292 = vmul.f32 %v253, %v287
      %v293 = vmul.f32 %v254, %v287
      %v294 = vmul.f32 %v255, %v287
      %v295 = vmul.f32 %v256, %v287
      %v296 = vmul.f32 %v257, %v287
      %v297 = vmul.f32 %v258, %v287
      %v298 = vmul.f32 %v259, %v287
      %v299 = vmul.f32 %v260, %v287
      %v300 = vmul.f32 %v261, %v287
      %v301 = vmul.f32 %v262, %v287
      %v302 = vmul.f32 %v263, %v287
      %v303 = vmul.f32 %v264, %v287
      %v304 = vmul.f32 %v265, %v287
      %v305 = vmul.f32 %v266, %v287
      %v306 = vmul.f32 %v267, %v287
      %v307 = vmul.f32 %v268, %v287
      %v308 = vmul.f32 %v269, %v287
      %v309 = vmul.f32 %v270, %v287
      %v310 = vmul.f32 %v271, %v287
      %v311 = vmul.f32 %v272, %v287
      %v312 = vmul.f32 %v273, %v287
      %v313 = vmul.f32 %v274, %v287
      %v314 = vmul.f32 %v275, %v287
      %v315 = vmul.f32 %v276, %v287
      %v316 = vmul.f32 %v277, %v287
      %v317 = vmul.f32 %v278, %v287
      %v318 = vmul.f32 %v279, %v287
      %v319 = vmul.f32 %v280, %v287
      %v320 = vmul.f32 %v281, %v287
      %v321 = vld [vmem:[%s3] sm:$0x1]
      %v323 = vlaneseq
      %v324 = vshrl.u32 %v323, 7
      %v325 = vsub.s32 0, %v324
      %v326 = vrot.slane %v321, %v325
      %v328 = vadd.f32 %v289, %v326
      %v329 = vadd.f32 %v290, %v326
      %v330 = vadd.f32 %v291, %v326
      %v331 = vadd.f32 %v292, %v326
      %v332 = vadd.f32 %v293, %v326
      %v333 = vadd.f32 %v294, %v326
      %v334 = vadd.f32 %v295, %v326
      %v335 = vadd.f32 %v296, %v326
      %v336 = vadd.f32 %v297, %v326
      %v337 = vadd.f32 %v298, %v326
      %v338 = vadd.f32 %v299, %v326
      %v339 = vadd.f32 %v300, %v326
      %v340 = vadd.f32 %v301, %v326
      %v341 = vadd.f32 %v302, %v326
      %v342 = vadd.f32 %v303, %v326
      %v343 = vadd.f32 %v304, %v326
      %v344 = vadd.f32 %v305, %v326
      %v345 = vadd.f32 %v306, %v326
      %v346 = vadd.f32 %v307, %v326
      %v347 = vadd.f32 %v308, %v326
      %v348 = vadd.f32 %v309, %v326
      %v349 = vadd.f32 %v310, %v326
      %v350 = vadd.f32 %v311, %v326
      %v351 = vadd.f32 %v312, %v326
      %v352 = vadd.f32 %v313, %v326
      %v353 = vadd.f32 %v314, %v326
      %v354 = vadd.f32 %v315, %v326
      %v355 = vadd.f32 %v316, %v326
      %v356 = vadd.f32 %v317, %v326
      %v357 = vadd.f32 %v318, %v326
      %v358 = vadd.f32 %v319, %v326
      %v359 = vadd.f32 %v320, %v326
      %v360 = vld [vmem:[%s212] sm:$0xff]
      %v361 = vld [vmem:[%s212 + $0x8] sm:$0xff]
      %v362 = vld [vmem:[%s212 + $0x10] sm:$0xff]
      %v363 = vld [vmem:[%s212 + $0x18] sm:$0xff]
      %v364 = vld [vmem:[%s212 + $0x20] sm:$0xff]
      %v365 = vld [vmem:[%s212 + $0x28] sm:$0xff]
      %v366 = vld [vmem:[%s212 + $0x30] sm:$0xff]
      %v367 = vld [vmem:[%s212 + $0x38] sm:$0xff]
      %v368 = vld [vmem:[%s212 + $0x40] sm:$0xff]
      %v369 = vld [vmem:[%s212 + $0x48] sm:$0xff]
      %v370 = vld [vmem:[%s212 + $0x50] sm:$0xff]
      %v371 = vld [vmem:[%s212 + $0x58] sm:$0xff]
      %v372 = vld [vmem:[%s212 + $0x60] sm:$0xff]
      %v373 = vld [vmem:[%s212 + $0x68] sm:$0xff]
      %v374 = vld [vmem:[%s212 + $0x70] sm:$0xff]
      %v375 = vld [vmem:[%s212 + $0x78] sm:$0xff]
      %v376 = vld [vmem:[%s212 + $0x80] sm:$0xff]
      %v377 = vld [vmem:[%s212 + $0x88] sm:$0xff]
      %v378 = vld [vmem:[%s212 + $0x90] sm:$0xff]
      %v379 = vld [vmem:[%s212 + $0x98] sm:$0xff]
      %v380 = vld [vmem:[%s212 + $0xa0] sm:$0xff]
      %v381 = vld [vmem:[%s212 + $0xa8] sm:$0xff]
      %v382 = vld [vmem:[%s212 + $0xb0] sm:$0xff]
      %v383 = vld [vmem:[%s212 + $0xb8] sm:$0xff]
      %v384 = vld [vmem:[%s212 + $0xc0] sm:$0xff]
      %v385 = vld [vmem:[%s212 + $0xc8] sm:$0xff]
      %v386 = vld [vmem:[%s212 + $0xd0] sm:$0xff]
      %v387 = vld [vmem:[%s212 + $0xd8] sm:$0xff]
      %v388 = vld [vmem:[%s212 + $0xe0] sm:$0xff]
      %v389 = vld [vmem:[%s212 + $0xe8] sm:$0xff]
      %v390 = vld [vmem:[%s212 + $0xf0] sm:$0xff]
      %v391 = vld [vmem:[%s212 + $0xf8] sm:$0xff]
      %v392 = vadd.f32 %v328, %v360
      %v393 = vadd.f32 %v329, %v361
      %v394 = vadd.f32 %v330, %v362
      %v395 = vadd.f32 %v331, %v363
      %v396 = vadd.f32 %v332, %v364
      %v397 = vadd.f32 %v333, %v365
      %v398 = vadd.f32 %v334, %v366
      %v399 = vadd.f32 %v335, %v367
      %v400 = vadd.f32 %v336, %v368
      %v401 = vadd.f32 %v337, %v369
      %v402 = vadd.f32 %v338, %v370
      %v403 = vadd.f32 %v339, %v371
      %v404 = vadd.f32 %v340, %v372
      %v405 = vadd.f32 %v341, %v373
      %v406 = vadd.f32 %v342, %v374
      %v407 = vadd.f32 %v343, %v375
      %v408 = vadd.f32 %v344, %v376
      %v409 = vadd.f32 %v345, %v377
      %v410 = vadd.f32 %v346, %v378
      %v411 = vadd.f32 %v347, %v379
      %v412 = vadd.f32 %v348, %v380
      %v413 = vadd.f32 %v349, %v381
      %v414 = vadd.f32 %v350, %v382
      %v415 = vadd.f32 %v351, %v383
      %v416 = vadd.f32 %v352, %v384
      %v417 = vadd.f32 %v353, %v385
      %v418 = vadd.f32 %v354, %v386
      %v419 = vadd.f32 %v355, %v387
      %v420 = vadd.f32 %v356, %v388
      %v421 = vadd.f32 %v357, %v389
      %v422 = vadd.f32 %v358, %v390
      %v423 = vadd.f32 %v359, %v391
      %v424 = vmax.f32 %v392, 0.0
      %v425 = vmax.f32 %v393, 0.0
      %v426 = vmax.f32 %v394, 0.0
      %v427 = vmax.f32 %v395, 0.0
      %v428 = vmax.f32 %v396, 0.0
      %v429 = vmax.f32 %v397, 0.0
      %v430 = vmax.f32 %v398, 0.0
      %v431 = vmax.f32 %v399, 0.0
      %v432 = vmax.f32 %v400, 0.0
      %v433 = vmax.f32 %v401, 0.0
      %v434 = vmax.f32 %v402, 0.0
      %v435 = vmax.f32 %v403, 0.0
      %v436 = vmax.f32 %v404, 0.0
      %v437 = vmax.f32 %v405, 0.0
      %v438 = vmax.f32 %v406, 0.0
      %v439 = vmax.f32 %v407, 0.0
      %v440 = vmax.f32 %v408, 0.0
      %v441 = vmax.f32 %v409, 0.0
      %v442 = vmax.f32 %v410, 0.0
      %v443 = vmax.f32 %v411, 0.0
      %v444 = vmax.f32 %v412, 0.0
      %v445 = vmax.f32 %v413, 0.0
      %v446 = vmax.f32 %v414, 0.0
      %v447 = vmax.f32 %v415, 0.0
      %v448 = vmax.f32 %v416, 0.0
      %v449 = vmax.f32 %v417, 0.0
      %v450 = vmax.f32 %v418, 0.0
      %v451 = vmax.f32 %v419, 0.0
      %v452 = vmax.f32 %v420, 0.0
      %v453 = vmax.f32 %v421, 0.0
      %v454 = vmax.f32 %v422, 0.0
      %v455 = vmax.f32 %v423, 0.0
      %vm456 = vcmask 31744
      %457 = vst.msk [vmem:[%s217] sm:$0xff] %vm456, %v424
      %458 = vst.msk [vmem:[%s217 + $0x8] sm:$0xff] %vm456, %v425
      %459 = vst.msk [vmem:[%s217 + $0x10] sm:$0xff] %vm456, %v426
      %460 = vst.msk [vmem:[%s217 + $0x18] sm:$0xff] %vm456, %v427
      %461 = vst.msk [vmem:[%s217 + $0x20] sm:$0xff] %vm456, %v428
      %462 = vst.msk [vmem:[%s217 + $0x28] sm:$0xff] %vm456, %v429
      %463 = vst.msk [vmem:[%s217 + $0x30] sm:$0xff] %vm456, %v430
      %464 = vst.msk [vmem:[%s217 + $0x38] sm:$0xff] %vm456, %v431
      %465 = vst.msk [vmem:[%s217 + $0x40] sm:$0xff] %vm456, %v432
      %466 = vst.msk [vmem:[%s217 + $0x48] sm:$0xff] %vm456, %v433
      %467 = vst.msk [vmem:[%s217 + $0x50] sm:$0xff] %vm456, %v434
      %468 = vst.msk [vmem:[%s217 + $0x58] sm:$0xff] %vm456, %v435
      %469 = vst.msk [vmem:[%s217 + $0x60] sm:$0xff] %vm456, %v436
      %470 = vst.msk [vmem:[%s217 + $0x68] sm:$0xff] %vm456, %v437
      %471 = vst.msk [vmem:[%s217 + $0x70] sm:$0xff] %vm456, %v438
      %472 = vst.msk [vmem:[%s217 + $0x78] sm:$0xff] %vm456, %v439
      %473 = vst.msk [vmem:[%s217 + $0x80] sm:$0xff] %vm456, %v440
      %474 = vst.msk [vmem:[%s217 + $0x88] sm:$0xff] %vm456, %v441
      %475 = vst.msk [vmem:[%s217 + $0x90] sm:$0xff] %vm456, %v442
      %476 = vst.msk [vmem:[%s217 + $0x98] sm:$0xff] %vm456, %v443
      %477 = vst.msk [vmem:[%s217 + $0xa0] sm:$0xff] %vm456, %v444
      %478 = vst.msk [vmem:[%s217 + $0xa8] sm:$0xff] %vm456, %v445
      %479 = vst.msk [vmem:[%s217 + $0xb0] sm:$0xff] %vm456, %v446
      %480 = vst.msk [vmem:[%s217 + $0xb8] sm:$0xff] %vm456, %v447
      %481 = vst.msk [vmem:[%s217 + $0xc0] sm:$0xff] %vm456, %v448
      %482 = vst.msk [vmem:[%s217 + $0xc8] sm:$0xff] %vm456, %v449
      %483 = vst.msk [vmem:[%s217 + $0xd0] sm:$0xff] %vm456, %v450
      %484 = vst.msk [vmem:[%s217 + $0xd8] sm:$0xff] %vm456, %v451
      %485 = vst.msk [vmem:[%s217 + $0xe0] sm:$0xff] %vm456, %v452
      %486 = vst.msk [vmem:[%s217 + $0xe8] sm:$0xff] %vm456, %v453
      %487 = vst.msk [vmem:[%s217 + $0xf0] sm:$0xff] %vm456, %v454
      %488 = vst.msk [vmem:[%s217 + $0xf8] sm:$0xff] %vm456, %v455
      %p489 = scmp.lt.s32.totalorder %s15, 1
      %s490 = scalar_select %p489, %s15, 1
      %s491 = smul.addr %s490, 32
      %s492 = smul.addr %s491, 8
      %s493 = scalar_lea.vmem %s4, %s492
      // Predicated region
      $region37: #{residual_block.5} parent=35 // pred_check
        %p494 = pneg %p127
      $region38: #{residual_block.5} parent=35 // pred_check_branch
        %496 = sbr.rel (%p494) target = $region40
      $region39: #{residual_block.5} parent=35 // pred_region
        _
      $region40: #{residual_block.5} parent=35 // pred_fallthru
        _
    $region36: #{residual_block.5} parent=5 // pred_fallthru
      _
    %p497 = scmp.le.s32.totalorder 2, %s10
    // Predicated region
    $region41: #{residual_block.5} parent=5 // pred_check
      %p498 = pneg %p497
    $region42: #{residual_block.5} parent=5 // pred_check_branch
      %500 = sbr.rel (%p498) target = $region44
    $region43: #{residual_block.5} parent=5 // pred_region
      %s501 = ssub.s32 %s10, 2
      // Predicated region
      $region45: #{residual_block.5} parent=43 // pred_check
        %p502 = pneg %p133
      $region46: #{residual_block.5} parent=43 // pred_check_branch
        %504 = sbr.rel (%p502) target = $region48
      $region47: #{residual_block.5} parent=43 // pred_region
        %p505 = scmp.lt.s32.totalorder %s16, 1
        %s506 = scalar_select %p505, %s16, 1
        %s507 = smul.addr %s506, 32
        %s508 = smul.addr %s507, 8
        %s509 = scalar_lea.vmem %s4, %s508
      $region48: #{residual_block.5} parent=43 // pred_fallthru
        _
    $region44: #{residual_block.5} parent=5 // pred_fallthru
      _
  $region6: #{residual_block.5} parent=0 // loop_footer
    %s14 = sadd.s32 1, %s10
  $region7: #{residual_block.5} parent=0 // loop_footer_branch
    %9 = sbr.rel target = $region3
  $region8: #{residual_block.5} parent=0 // loop_exit
    _

// kernel: residual_block.4
$region0: #{residual_block.4}
  #allocation0 [shape = 'u32[]', space=smem, size = 0x4, offset = 0x4, fixed_abs, tag = 'smem constant byte address 0x4 - core index']
  #allocation1 [shape = 'u32[144,128]{1,0:T(1,128)}', space=vmem, size = 0x12000, scoped, tag = 'internal scratch']
  #allocation2 [shape = 'bf16[256,36]{1,0:T(16,128)(2,1)}', space=vmem, size = 0x10000, scoped, tag = 'scratch operand']
  %s0 = inlined_call_operand.vmem [shape: bf16[2,256,128], index: 0, kind: input, shape index: {}]
  %s1 = inlined_call_operand.vmem [shape: f32[1,128], index: 1, kind: input, shape index: {}]
  %s2 = inlined_call_operand.vmem [shape: f32[1,128], index: 2, kind: input, shape index: {}]
  %s3 = inlined_call_operand.vmem [shape: bf16[36,128], index: 3, kind: input, shape index: {}]
  %s4 = inlined_call_operand.vmem [shape: bf16[2,256,128], index: 4, kind: output, shape index: {0}]
  %s5 = inlined_call_operand.vmem [shape: f32[2,2,128], index: 5, kind: output, shape index: {1}]
  %6 = xla_tuple %s4, %s5
  %s7 = sld [smem:[#allocation0]]
  $region61: #{residual_block.4} parent=0
    _
  %s9 = ssub.s32 1, %s7
  %s10 = scalar_select 0, %s9, %s7
  loop: start=0, step=1, limit=4
  $region2: #{residual_block.4} parent=0 // loop_pre_header
    _
  $region3: #{residual_block.4} parent=0 // loop_header
    %s12 = sphi 0, %s16
    %p13 = scmp.ge.s32.totalorder %s12, 4
    %s19 = sphi 0, %s31
    %s20 = sphi 0, %s27
    %s21 = sphi 0, %s19
    %s22 = sphi 0, %s20
    %s23 = sphi 0, %s21
    %s24 = sphi 0, %s22
    %s34 = sphi 0, %s36
    %s37 = sphi 0, %s34
    %s38 = sphi 0, %s37
    %s54 = sphi 0, %s38
    %s58 = sphi 0, %s58
    %s60 = sphi 0, %s58
    %s61 = sphi 0, %s60
    %s75 = sphi 0, %s61
    %s79 = sphi 0, %s79
    %s81 = sphi 0, %s79
    %s82 = sphi 0, %s81
    %s96 = sphi 0, %s82
    %s102 = sphi 0, %s104
    %s105 = sphi 0, %s102
    %s106 = sphi 0, %s105
    %s122 = sphi 0, %s106
    %s130 = sphi 0, %s132
    %s133 = sphi 0, %s130
    %s134 = sphi 0, %s133
    %s150 = sphi 0, %s134
    %s158 = sphi 0, %s160
    %s161 = sphi 0, %s158
    %s162 = sphi 0, %s161
    %s178 = sphi 0, %s162
  $region4: #{residual_block.4} parent=0 // loop_header_branch
    %15 = sbr.rel (%p13) target = $region8
  $region5: #{residual_block.4} parent=0 // loop_body
    %s17 = ssub.s32 %s12, 1
    %s18 = ssub.s32 %s12, 2
    %s25 = sadd.s32 1, %s20
    %p26 = scmp.ge.s32.totalorder %s25, 1
    %s27 = scalar_select %p26, 0, %s25
    %s28 = sadd.s32 1, %s19
    %s29 = scalar_select %p26, %s28, %s19
    %p30 = scmp.ge.s32.totalorder %s29, 2
    %s31 = scalar_select %p30, 0, %s29
    %s32 = ssub.s32 %s19, %s31
    %p33 = scmp.eq.s32.totalorder %s32, 0
    %s35 = sadd.s32 %s34, 1
    %s36 = scalar_select %p33, %s34, %s35
    %p39 = pneg %p33
    %p40 = scmp.eq.s32.totalorder %s12, 1
    %p41 = por %p39, %p40
    %p42 = scmp.ne.s32.totalorder %s34, %s37
    %p43 = scmp.eq.s32.totalorder %s12, 0
    %p44 = por %p42, %p43
    %p45 = scmp.ne.s32.totalorder %s34, %s37
    %p46 = scmp.eq.s32.totalorder %s17, 1
    %p47 = por %p45, %p46
    %p48 = scmp.ne.s32.totalorder %s37, %s38
    %p49 = scmp.eq.s32.totalorder %s17, 0
    %p50 = por %p48, %p49
    %p51 = scmp.ne.s32.totalorder %s37, %s38
    %p52 = scmp.eq.s32.totalorder %s18, 1
    %p53 = por %p51, %p52
    %p55 = scmp.ne.s32.totalorder %s38, %s54
    %p56 = scmp.eq.s32.totalorder %s18, 0
    %p57 = por %p55, %p56
    %s59 = sadd.s32 %s58, 1
    %p62 = scmp.eq.s32.totalorder %s12, 1
    %p63 = scmp.ne.s32.totalorder %s58, %s60
    %p64 = scmp.eq.s32.totalorder %s12, 0
    %p65 = por %p63, %p64
    %p66 = scmp.ne.s32.totalorder %s58, %s60
    %p67 = scmp.eq.s32.totalorder %s17, 1
    %p68 = por %p66, %p67
    %p69 = scmp.ne.s32.totalorder %s60, %s61
    %p70 = scmp.eq.s32.totalorder %s17, 0
    %p71 = por %p69, %p70
    %p72 = scmp.ne.s32.totalorder %s60, %s61
    %p73 = scmp.eq.s32.totalorder %s18, 1
    %p74 = por %p72, %p73
    %p76 = scmp.ne.s32.totalorder %s61, %s75
    %p77 = scmp.eq.s32.totalorder %s18, 0
    %p78 = por %p76, %p77
    %s80 = sadd.s32 %s79, 1
    %p83 = scmp.eq.s32.totalorder %s12, 1
    %p84 = scmp.ne.s32.totalorder %s79, %s81
    %p85 = scmp.eq.s32.totalorder %s12, 0
    %p86 = por %p84, %p85
    %p87 = scmp.ne.s32.totalorder %s79, %s81
    %p88 = scmp.eq.s32.totalorder %s17, 1
    %p89 = por %p87, %p88
    %p90 = scmp.ne.s32.totalorder %s81, %s82
    %p91 = scmp.eq.s32.totalorder %s17, 0
    %p92 = por %p90, %p91
    %p93 = scmp.ne.s32.totalorder %s81, %s82
    %p94 = scmp.eq.s32.totalorder %s18, 1
    %p95 = por %p93, %p94
    %p97 = scmp.ne.s32.totalorder %s82, %s96
    %p98 = scmp.eq.s32.totalorder %s18, 0
    %p99 = por %p97, %p98
    %s100 = ssub.s32 %s20, %s27
    %p101 = scmp.eq.s32.totalorder %s100, 0
    %s103 = sadd.s32 %s102, 1
    %s104 = scalar_select %p101, %s102, %s103
    %p107 = pneg %p101
    %p108 = scmp.eq.s32.totalorder %s12, 1
    %p109 = por %p107, %p108
    %p110 = scmp.ne.s32.totalorder %s102, %s105
    %p111 = scmp.eq.s32.totalorder %s12, 0
    %p112 = por %p110, %p111
    %p113 = scmp.ne.s32.totalorder %s102, %s105
    %p114 = scmp.eq.s32.totalorder %s17, 1
    %p115 = por %p113, %p114
    %p116 = scmp.ne.s32.totalorder %s105, %s106
    %p117 = scmp.eq.s32.totalorder %s17, 0
    %p118 = por %p116, %p117
    %p119 = scmp.ne.s32.totalorder %s105, %s106
    %p120 = scmp.eq.s32.totalorder %s18, 1
    %p121 = por %p119, %p120
    %p123 = scmp.ne.s32.totalorder %s106, %s122
    %p124 = scmp.eq.s32.totalorder %s18, 0
    %p125 = por %p123, %p124
    %s126 = ssub.s32 %s19, %s31
    %s127 = ssub.s32 %s20, %s27
    %s128 = sor.u32 %s126, %s127
    %p129 = scmp.eq.s32.totalorder %s128, 0
    %s131 = sadd.s32 %s130, 1
    %s132 = scalar_select %p129, %s130, %s131
    %p135 = pneg %p129
    %p136 = scmp.eq.s32.totalorder %s12, 1
    %p137 = por %p135, %p136
    %p138 = scmp.ne.s32.totalorder %s130, %s133
    %p139 = scmp.eq.s32.totalorder %s12, 0
    %p140 = por %p138, %p139
    %p141 = scmp.ne.s32.totalorder %s130, %s133
    %p142 = scmp.eq.s32.totalorder %s17, 1
    %p143 = por %p141, %p142
    %p144 = scmp.ne.s32.totalorder %s133, %s134
    %p145 = scmp.eq.s32.totalorder %s17, 0
    %p146 = por %p144, %p145
    %p147 = scmp.ne.s32.totalorder %s133, %s134
    %p148 = scmp.eq.s32.totalorder %s18, 1
    %p149 = por %p147, %p148
    %p151 = scmp.ne.s32.totalorder %s134, %s150
    %p152 = scmp.eq.s32.totalorder %s18, 0
    %p153 = por %p151, %p152
    %s154 = ssub.s32 %s19, %s31
    %s155 = ssub.s32 %s20, %s27
    %s156 = sor.u32 %s154, %s155
    %p157 = scmp.eq.s32.totalorder %s156, 0
    %s159 = sadd.s32 %s158, 1
    %s160 = scalar_select %p157, %s158, %s159
    %p163 = pneg %p157
    %p164 = scmp.eq.s32.totalorder %s12, 1
    %p165 = por %p163, %p164
    %p166 = scmp.ne.s32.totalorder %s158, %s161
    %p167 = scmp.eq.s32.totalorder %s12, 0
    %p168 = por %p166, %p167
    %p169 = scmp.ne.s32.totalorder %s158, %s161
    %p170 = scmp.eq.s32.totalorder %s17, 1
    %p171 = por %p169, %p170
    %p172 = scmp.ne.s32.totalorder %s161, %s162
    %p173 = scmp.eq.s32.totalorder %s17, 0
    %p174 = por %p172, %p173
    %p175 = scmp.ne.s32.totalorder %s161, %s162
    %p176 = scmp.eq.s32.totalorder %s18, 1
    %p177 = por %p175, %p176
    %p179 = scmp.ne.s32.totalorder %s162, %s178
    %p180 = scmp.eq.s32.totalorder %s18, 0
    %p181 = por %p179, %p180
    %p182 = scmp.le.s32.totalorder 1, %s12
    %p183 = scmp.lt.s32.totalorder %s12, 3
    %p184 = pnand %p182, %p183
    %p185 = pneg %p184
    // Predicated region
    $region9: #{residual_block.4} parent=5 // pred_check
      _
    $region10: #{residual_block.4} parent=5 // pred_check_branch
      %187 = sbr.rel (%p184) target = $region12
    $region11: #{residual_block.4} parent=5 // pred_region
      %s188 = ssub.s32 %s12, 1
      // Predicated region
      $region13: #{residual_block.4} parent=11 // pred_check
        %p189 = pneg %p71
      $region14: #{residual_block.4} parent=11 // pred_check_branch
        %191 = sbr.rel (%p189) target = $region16
      $region15: #{residual_block.4} parent=11 // pred_region
        _
      $region16: #{residual_block.4} parent=11 // pred_fallthru
        _
      // Predicated region
      $region17: #{residual_block.4} parent=11 // pred_check
        %p192 = pneg %p92
      $region18: #{residual_block.4} parent=11 // pred_check_branch
        %194 = sbr.rel (%p192) target = $region20
      $region19: #{residual_block.4} parent=11 // pred_region
        _
      $region20: #{residual_block.4} parent=11 // pred_fallthru
        _
      // Predicated region
      $region21: #{residual_block.4} parent=11 // pred_check
        %p195 = pneg %p118
      $region22: #{residual_block.4} parent=11 // pred_check_branch
        %197 = sbr.rel (%p195) target = $region24
      $region23: #{residual_block.4} parent=11 // pred_region
        %p198 = scmp.lt.s32.totalorder %s22, 0
        %s199 = scalar_select %p198, %s22, 0
        %s200 = smul.addr %s199, 4
        %s201 = scalar_lea.vmem %s3, %s200
      $region24: #{residual_block.4} parent=11 // pred_fallthru
        _
    $region12: #{residual_block.4} parent=5 // pred_fallthru
      _
    %p202 = scmp.lt.s32.totalorder %s12, 2
    // Predicated region
    $region25: #{residual_block.4} parent=5 // pred_check
      %p203 = pneg %p202
    $region26: #{residual_block.4} parent=5 // pred_check_branch
      %205 = sbr.rel (%p203) target = $region28
    $region27: #{residual_block.4} parent=5 // pred_region
      // Predicated region
      $region29: #{residual_block.4} parent=27 // pred_check
        %p206 = pneg %p44
      $region30: #{residual_block.4} parent=27 // pred_check_branch
        %208 = sbr.rel (%p206) target = $region32
      $region31: #{residual_block.4} parent=27 // pred_region
        %p209 = scmp.lt.s32.totalorder %s19, 1
        %s210 = scalar_select %p209, %s19, 1
        %s211 = smul.addr %s210, 32
        %s212 = smul.addr %s211, 4
        %s213 = scalar_lea.vmem %s0, %s212
      $region32: #{residual_block.4} parent=27 // pred_fallthru
        _
    $region28: #{residual_block.4} parent=5 // pred_fallthru
      _
    %p214 = scmp.le.s32.totalorder 1, %s12
    %p215 = scmp.lt.s32.totalorder %s12, 3
    %p216 = pnand %p214, %p215
    %p217 = pneg %p216
    // Predicated region
    $region33: #{residual_block.4} parent=5 // pred_check
      _
    $region34: #{residual_block.4} parent=5 // pred_check_branch
      %219 = sbr.rel (%p216) target = $region36
    $region35: #{residual_block.4} parent=5 // pred_region
      %s220 = ssub.s32 %s12, 1
      %p221 = scmp.lt.s32.totalorder %s21, 1
      %s222 = scalar_select %p221, %s21, 1
      %s223 = smul.addr %s222, 32
      %s224 = smul.addr %s223, 4
      %s225 = scalar_lea.vmem %s0, %s224
      %p226 = pneg %p50
      %p227 = pneg %p47
      %p228 = pneg %p71
      %p229 = pneg %p68
      %p230 = pneg %p92
      %p231 = pneg %p89
      %p232 = scmp.lt.s32.totalorder %s22, 0
      %s233 = scalar_select %p232, %s22, 0
      %s234 = smul.addr %s233, 4
      %s235 = scalar_lea.vmem %s3, %s234
      %p236 = pneg %p118
      %p237 = pneg %p115
      %p238 = pneg %p146
      %p239 = pneg %p143
      %p240 = scmp.lt.s32.totalorder %s21, 1
      %s241 = scalar_select %p240, %s21, 1
      %p242 = scmp.lt.s32.totalorder %s22, 0
      %s243 = scalar_select %p242, %s22, 0
      %s244 = smul.addr %s241, 32
      %s245 = sadd.s32 %s243, %s244
      %s246 = smul.addr %s245, 4
      %s247 = scalar_lea.vmem %s4, %s246
      %p248 = pneg %p174
      %p249 = pneg %p171
      %p250 = scmp.lt.s32.totalorder %s21, 1
      %s251 = scalar_select %p250, %s21, 1
      %p252 = scmp.lt.s32.totalorder %s22, 0
      %s253 = scalar_select %p252, %s22, 0
      %s254 = sadd.s32 %s253, %s251
      %s255 = smul.addr %s254, 2
      %s256 = scalar_lea.vmem %s5, %s255
      %p257 = scmp.lt.s32.totalorder %s21, 1
      %s258 = scalar_select %p257, %s21, 1
      %s259 = smul.addr %s258, 32
      %s260 = smul.addr %s259, 4
      %s261 = scalar_lea.vmem %s0, %s260
      %p262 = scmp.lt.s32.totalorder %s22, 0
      %s263 = scalar_select %p262, %s22, 0
      %s264 = smul.addr %s263, 4
      %s265 = scalar_lea.vmem %s3, %s264
      %p266 = scmp.lt.s32.totalorder %s21, 1
      %s267 = scalar_select %p266, %s21, 1
      %p268 = scmp.lt.s32.totalorder %s22, 0
      %s269 = scalar_select %p268, %s22, 0
      %s270 = smul.addr %s267, 32
      %s271 = sadd.s32 %s269, %s270
      %s272 = smul.addr %s271, 4
      %s273 = scalar_lea.vmem %s4, %s272
      %p274 = scmp.lt.s32.totalorder %s21, 1
      %s275 = scalar_select %p274, %s21, 1
      %p276 = scmp.lt.s32.totalorder %s22, 0
      %s277 = scalar_select %p276, %s22, 0
      %s278 = sadd.s32 %s277, %s275
      %s279 = smul.addr %s278, 2
      %s280 = scalar_lea.vmem %s5, %s279
      %p282 = scmp.eq.s32.totalorder %s22, 0
      // Predicated region
      $region37: #{residual_block.4} parent=35 // pred_check
        %p283 = pneg %p282
      $region38: #{residual_block.4} parent=35 // pred_check_branch
        %285 = sbr.rel (%p283) target = $region40
      $region39: #{residual_block.4} parent=35 // pred_region
        %v286 = vld [vmem:[%s261] sm:$0xf]
        %v287 = vld [vmem:[%s261 + $0x4] sm:$0xf]
        %v288 = vld [vmem:[%s261 + $0x8] sm:$0xf]
        %v289 = vld [vmem:[%s261 + $0xc] sm:$0xf]
        %v290 = vld [vmem:[%s261 + $0x10] sm:$0xf]
        %v291 = vld [vmem:[%s261 + $0x14] sm:$0xf]
        %v292 = vld [vmem:[%s261 + $0x18] sm:$0xf]
        %v293 = vld [vmem:[%s261 + $0x1c] sm:$0xf]
        %v294 = vld [vmem:[%s261 + $0x20] sm:$0xf]
        %v295 = vld [vmem:[%s261 + $0x24] sm:$0xf]
        %v296 = vld [vmem:[%s261 + $0x28] sm:$0xf]
        %v297 = vld [vmem:[%s261 + $0x2c] sm:$0xf]
        %v298 = vld [vmem:[%s261 + $0x30] sm:$0xf]
        %v299 = vld [vmem:[%s261 + $0x34] sm:$0xf]
        %v300 = vld [vmem:[%s261 + $0x38] sm:$0xf]
        %v301 = vld [vmem:[%s261 + $0x3c] sm:$0xf]
        %v302 = vld [vmem:[%s261 + $0x40] sm:$0xf]
        %v303 = vld [vmem:[%s261 + $0x44] sm:$0xf]
        %v304 = vld [vmem:[%s261 + $0x48] sm:$0xf]
        %v305 = vld [vmem:[%s261 + $0x4c] sm:$0xf]
        %v306 = vld [vmem:[%s261 + $0x50] sm:$0xf]
        %v307 = vld [vmem:[%s261 + $0x54] sm:$0xf]
        %v308 = vld [vmem:[%s261 + $0x58] sm:$0xf]
        %v309 = vld [vmem:[%s261 + $0x5c] sm:$0xf]
        %v310 = vld [vmem:[%s261 + $0x60] sm:$0xf]
        %v311 = vld [vmem:[%s261 + $0x64] sm:$0xf]
        %v312 = vld [vmem:[%s261 + $0x68] sm:$0xf]
        %v313 = vld [vmem:[%s261 + $0x6c] sm:$0xf]
        %v314 = vld [vmem:[%s261 + $0x70] sm:$0xf]
        %v315 = vld [vmem:[%s261 + $0x74] sm:$0xf]
        %v316 = vld [vmem:[%s261 + $0x78] sm:$0xf]
        %v317 = vld [vmem:[%s261 + $0x7c] sm:$0xf]
        %v318 = vunpack.c.l.bf16 %v286
        %v319 = vunpack.c.l.bf16 %v287
        %v320 = vunpack.c.l.bf16 %v288
        %v321 = vunpack.c.l.bf16 %v289
        %v322 = vunpack.c.l.bf16 %v290
        %v323 = vunpack.c.l.bf16 %v291
        %v324 = vunpack.c.l.bf16 %v292
        %v325 = vunpack.c.l.bf16 %v293
        %v326 = vunpack.c.l.bf16 %v294
        %v327 = vunpack.c.l.bf16 %v295
        %v328 = vunpack.c.l.bf16 %v296
        %v329 = vunpack.c.l.bf16 %v297
        %v330 = vunpack.c.l.bf16 %v298
        %v331 = vunpack.c.l.bf16 %v299
        %v332 = vunpack.c.l.bf16 %v300
        %v333 = vunpack.c.l.bf16 %v301
        %v334 = vunpack.c.l.bf16 %v302
        %v335 = vunpack.c.l.bf16 %v303
        %v336 = vunpack.c.l.bf16 %v304
        %v337 = vunpack.c.l.bf16 %v305
        %v338 = vunpack.c.l.bf16 %v306
        %v339 = vunpack.c.l.bf16 %v307
        %v340 = vunpack.c.l.bf16 %v308
        %v341 = vunpack.c.l.bf16 %v309
        %v342 = vunpack.c.l.bf16 %v310
        %v343 = vunpack.c.l.bf16 %v311
        %v344 = vunpack.c.l.bf16 %v312
        %v345 = vunpack.c.l.bf16 %v313
        %v346 = vunpack.c.l.bf16 %v314
        %v347 = vunpack.c.l.bf16 %v315
        %v348 = vunpack.c.l.bf16 %v316
        %v349 = vunpack.c.l.bf16 %v317
        %v350 = vld [vmem:[%s1] sm:$0x1]
        %v352 = vlaneseq
        %v353 = vshrl.u32 %v352, 7
        %v354 = vsub.s32 0, %v353
        %v355 = vrot.slane %v350, %v354
        %v357 = vmul.f32 %v318, %v355
        %v358 = vmul.f32 %v319, %v355
        %v359 = vmul.f32 %v320, %v355
        %v360 = vmul.f32 %v321, %v355
        %v361 = vmul.f32 %v322, %v355
        %v362 = vmul.f32 %v323, %v355
        %v363 = vmul.f32 %v324, %v355
        %v364 = vmul.f32 %v325, %v355
        %v365 = vmul.f32 %v326, %v355
        %v366 = vmul.f32 %v327, %v355
        %v367 = vmul.f32 %v328, %v355
        %v368 = vmul.f32 %v329, %v355
        %v369 = vmul.f32 %v330, %v355
        %v370 = vmul.f32 %v331, %v355
        %v371 = vmul.f32 %v332, %v355
        %v372 = vmul.f32 %v333, %v355
        %v373 = vmul.f32 %v334, %v355
        %v374 = vmul.f32 %v335, %v355
        %v375 = vmul.f32 %v336, %v355
        %v376 = vmul.f32 %v337, %v355
        %v377 = vmul.f32 %v338, %v355
        %v378 = vmul.f32 %v339, %v355
        %v379 = vmul.f32 %v340, %v355
        %v380 = vmul.f32 %v341, %v355
        %v381 = vmul.f32 %v342, %v355
        %v382 = vmul.f32 %v343, %v355
        %v383 = vmul.f32 %v344, %v355
        %v384 = vmul.f32 %v345, %v355
        %v385 = vmul.f32 %v346, %v355
        %v386 = vmul.f32 %v347, %v355
        %v387 = vmul.f32 %v348, %v355
        %v388 = vmul.f32 %v349, %v355
        %v389 = vld [vmem:[%s2] sm:$0x1]
        %v391 = vlaneseq
        %v392 = vshrl.u32 %v391, 7
        %v393 = vsub.s32 0, %v392
        %v394 = vrot.slane %v389, %v393
        %v396 = vadd.f32 %v357, %v394
        %v397 = vadd.f32 %v358, %v394
        %v398 = vadd.f32 %v359, %v394
        %v399 = vadd.f32 %v360, %v394
        %v400 = vadd.f32 %v361, %v394
        %v401 = vadd.f32 %v362, %v394
        %v402 = vadd.f32 %v363, %v394
        %v403 = vadd.f32 %v364, %v394
        %v404 = vadd.f32 %v365, %v394
        %v405 = vadd.f32 %v366, %v394
        %v406 = vadd.f32 %v367, %v394
        %v407 = vadd.f32 %v368, %v394
        %v408 = vadd.f32 %v369, %v394
        %v409 = vadd.f32 %v370, %v394
        %v410 = vadd.f32 %v371, %v394
        %v411 = vadd.f32 %v372, %v394
        %v412 = vadd.f32 %v373, %v394
        %v413 = vadd.f32 %v374, %v394
        %v414 = vadd.f32 %v375, %v394
        %v415 = vadd.f32 %v376, %v394
        %v416 = vadd.f32 %v377, %v394
        %v417 = vadd.f32 %v378, %v394
        %v418 = vadd.f32 %v379, %v394
        %v419 = vadd.f32 %v380, %v394
        %v420 = vadd.f32 %v381, %v394
        %v421 = vadd.f32 %v382, %v394
        %v422 = vadd.f32 %v383, %v394
        %v423 = vadd.f32 %v384, %v394
        %v424 = vadd.f32 %v385, %v394
        %v425 = vadd.f32 %v386, %v394
        %v426 = vadd.f32 %v387, %v394
        %v427 = vadd.f32 %v388, %v394
        %v428 = vmax.f32 %v396, 0.0
        %v429 = vmax.f32 %v397, 0.0
        %v430 = vmax.f32 %v398, 0.0
        %v431 = vmax.f32 %v399, 0.0
        %v432 = vmax.f32 %v400, 0.0
        %v433 = vmax.f32 %v401, 0.0
        %v434 = vmax.f32 %v402, 0.0
        %v435 = vmax.f32 %v403, 0.0
        %v436 = vmax.f32 %v404, 0.0
        %v437 = vmax.f32 %v405, 0.0
        %v438 = vmax.f32 %v406, 0.0
        %v439 = vmax.f32 %v407, 0.0
        %v440 = vmax.f32 %v408, 0.0
        %v441 = vmax.f32 %v409, 0.0
        %v442 = vmax.f32 %v410, 0.0
        %v443 = vmax.f32 %v411, 0.0
        %v444 = vmax.f32 %v412, 0.0
        %v445 = vmax.f32 %v413, 0.0
        %v446 = vmax.f32 %v414, 0.0
        %v447 = vmax.f32 %v415, 0.0
        %v448 = vmax.f32 %v416, 0.0
        %v449 = vmax.f32 %v417, 0.0
        %v450 = vmax.f32 %v418, 0.0
        %v451 = vmax.f32 %v419, 0.0
        %v452 = vmax.f32 %v420, 0.0
        %v453 = vmax.f32 %v421, 0.0
        %v454 = vmax.f32 %v422, 0.0
        %v455 = vmax.f32 %v423, 0.0
        %v456 = vmax.f32 %v424, 0.0
        %v457 = vmax.f32 %v425, 0.0
        %v458 = vmax.f32 %v426, 0.0
        %v459 = vmax.f32 %v427, 0.0
        %vm492 = vcmask 1040384
        %v493 = vrot.slane %v428, 7
        %v494 = vrot.slane %v429, 7
        %v495 = vsel %vm492, %v493, %v494
        %v496 = vrot.slane %v430, 7
        %v497 = vrot.slane %v431, 7
        %v498 = vsel %vm492, %v496, %v497
        %v499 = vrot.slane %v432, 7
        %v500 = vrot.slane %v433, 7
        %v501 = vsel %vm492, %v499, %v500
        %v502 = vrot.slane %v434, 7
        %v503 = vrot.slane %v435, 7
        %v504 = vsel %vm492, %v502, %v503
        %v505 = vrot.slane %v436, 7
        %v506 = vrot.slane %v437, 7
        %v507 = vsel %vm492, %v505, %v506
        %v508 = vrot.slane %v438, 7
        %v509 = vrot.slane %v439, 7
        %v510 = vsel %vm492, %v508, %v509
        %v511 = vrot.slane %v440, 7
        %v512 = vrot.slane %v441, 7
        %v513 = vsel %vm492, %v511, %v512
        %v514 = vrot.slane %v442, 7
        %v515 = vrot.slane %v443, 7
        %v516 = vsel %vm492, %v514, %v515
        %v517 = vrot.slane %v444, 7
        %v518 = vrot.slane %v445, 7
        %v519 = vsel %vm492, %v517, %v518
        %v520 = vrot.slane %v446, 7
        %v521 = vrot.slane %v447, 7
        %v522 = vsel %vm492, %v520, %v521
        %v523 = vrot.slane %v448, 7
        %v524 = vrot.slane %v449, 7
        %v525 = vsel %vm492, %v523, %v524
        %v526 = vrot.slane %v450, 7
        %v527 = vrot.slane %v451, 7
        %v528 = vsel %vm492, %v526, %v527
        %v529 = vrot.slane %v452, 7
        %v530 = vrot.slane %v453, 7
        %v531 = vsel %vm492, %v529, %v530
        %v532 = vrot.slane %v454, 7
        %v533 = vrot.slane %v455, 7
        %v534 = vsel %vm492, %v532, %v533
        %v535 = vrot.slane %v456, 7
        %v536 = vrot.slane %v457, 7
        %v537 = vsel %vm492, %v535, %v536
        %v538 = vrot.slane %v458, 7
        %v539 = vrot.slane %v459, 7
        %v540 = vsel %vm492, %v538, %v539
        %v589 = vsel %vm492, 0.0, %v493
        %v590 = vsel %vm492, 0.0, %v496
        %v591 = vsel %vm492, 0.0, %v499
        %v592 = vsel %vm492, 0.0, %v502
        %v593 = vsel %vm492, 0.0, %v505
        %v594 = vsel %vm492, 0.0, %v508
        %v595 = vsel %vm492, 0.0, %v511
        %v596 = vsel %vm492, 0.0, %v514
        %v597 = vsel %vm492, 0.0, %v517
        %v598 = vsel %vm492, 0.0, %v520
        %v599 = vsel %vm492, 0.0, %v523
        %v600 = vsel %vm492, 0.0, %v526
        %v601 = vsel %vm492, 0.0, %v529
        %v602 = vsel %vm492, 0.0, %v532
        %v603 = vsel %vm492, 0.0, %v535
        %v604 = vsel %vm492, 0.0, %v538
        %v605 = vsel %vm492, %v494, 0.0
        %v606 = vsel %vm492, %v497, 0.0
        %v607 = vsel %vm492, %v500, 0.0
        %v608 = vsel %vm492, %v503, 0.0
        %v609 = vsel %vm492, %v506, 0.0
        %v610 = vsel %vm492, %v509, 0.0
        %v611 = vsel %vm492, %v512, 0.0
        %v612 = vsel %vm492, %v515, 0.0
        %v613 = vsel %vm492, %v518, 0.0
        %v614 = vsel %vm492, %v521, 0.0
        %v615 = vsel %vm492, %v524, 0.0
        %v616 = vsel %vm492, %v527, 0.0
        %v617 = vsel %vm492, %v530, 0.0
        %v618 = vsel %vm492, %v533, 0.0
        %v619 = vsel %vm492, %v536, 0.0
        %v620 = vsel %vm492, %v539, 0.0
        %v621 = vpack.c.bf16 0.0, 0.0
        %v622 = vpack.c.bf16 %v495, %v589
        %v623 = vpack.c.bf16 %v605, %v605
        %v624 = vpack.c.bf16 %v498, %v590
        %v625 = vpack.c.bf16 %v606, %v606
        %v626 = vpack.c.bf16 %v501, %v591
        %v627 = vpack.c.bf16 %v607, %v607
        %v628 = vpack.c.bf16 %v504, %v592
        %v629 = vpack.c.bf16 %v608, %v608
        %v630 = vpack.c.bf16 %v507, %v593
        %v631 = vpack.c.bf16 %v609, %v609
        %v632 = vpack.c.bf16 %v510, %v594
        %v633 = vpack.c.bf16 %v610, %v610
        %v634 = vpack.c.bf16 %v513, %v595
        %v635 = vpack.c.bf16 %v611, %v611
        %v636 = vpack.c.bf16 %v516, %v596
        %v637 = vpack.c.bf16 %v612, %v612
        %v638 = vpack.c.bf16 %v519, %v597
        %v639 = vpack.c.bf16 %v613, %v613
        %v640 = vpack.c.bf16 %v522, %v598
        %v641 = vpack.c.bf16 %v614, %v614
        %v642 = vpack.c.bf16 %v525, %v599
        %v643 = vpack.c.bf16 %v615, %v615
        %v644 = vpack.c.bf16 %v528, %v600
        %v645 = vpack.c.bf16 %v616, %v616
        %v646 = vpack.c.bf16 %v531, %v601
        %v647 = vpack.c.bf16 %v617, %v617
        %v648 = vpack.c.bf16 %v534, %v602
        %v649 = vpack.c.bf16 %v618, %v618
        %v650 = vpack.c.bf16 %v537, %v603
        %v651 = vpack.c.bf16 %v619, %v619
        %v652 = vpack.c.bf16 %v540, %v604
        %v653 = vpack.c.bf16 %v620, %v620
        %vm654 = vsmask.f32 7424
        %v656 = vshrl.u32 %v621, 16
        %v658 = vshll.u32 %v621, 16
        %v660 = vrot.slane %v658, 1
        %v661 = vor.u32 %v656, %v660
        %v662 = vsel %vm654, %v661, %v660
        %v664 = vshrl.u32 %v622, 16
        %v666 = vshll.u32 %v622, 16
        %v668 = vrot.slane %v666, 1
        %v669 = vor.u32 %v664, %v668
        %v671 = vshll.u32 %v623, 16
        %v673 = vrot.slane %v671, 1
        %v674 = vsel %vm654, %v669, %v673
        %v676 = vshrl.u32 %v624, 16
        %v678 = vshll.u32 %v624, 16
        %v680 = vrot.slane %v678, 1
        %v681 = vor.u32 %v676, %v680
        %v683 = vshll.u32 %v625, 16
        %v685 = vrot.slane %v683, 1
        %v686 = vsel %vm654, %v681, %v685
        %v688 = vshrl.u32 %v626, 16
        %v690 = vshll.u32 %v626, 16
        %v692 = vrot.slane %v690, 1
        %v693 = vor.u32 %v688, %v692
        %v695 = vshll.u32 %v627, 16
        %v697 = vrot.slane %v695, 1
        %v698 = vsel %vm654, %v693, %v697
        %v700 = vshrl.u32 %v628, 16
        %v702 = vshll.u32 %v628, 16
        %v704 = vrot.slane %v702, 1
        %v705 = vor.u32 %v700, %v704
        %v707 = vshll.u32 %v629, 16
        %v709 = vrot.slane %v707, 1
        %v710 = vsel %vm654, %v705, %v709
        %v712 = vshrl.u32 %v630, 16
        %v714 = vshll.u32 %v630, 16
        %v716 = vrot.slane %v714, 1
        %v717 = vor.u32 %v712, %v716
        %v719 = vshll.u32 %v631, 16
        %v721 = vrot.slane %v719, 1
        %v722 = vsel %vm654, %v717, %v721
        %v724 = vshrl.u32 %v632, 16
        %v726 = vshll.u32 %v632, 16
        %v728 = vrot.slane %v726, 1
        %v729 = vor.u32 %v724, %v728
        %v731 = vshll.u32 %v633, 16
        %v733 = vrot.slane %v731, 1
        %v734 = vsel %vm654, %v729, %v733
        %v736 = vshrl.u32 %v634, 16
        %v738 = vshll.u32 %v634, 16
        %v740 = vrot.slane %v738, 1
        %v741 = vor.u32 %v736, %v740
        %v743 = vshll.u32 %v635, 16
        %v745 = vrot.slane %v743, 1
        %v746 = vsel %vm654, %v741, %v745
        %v748 = vshrl.u32 %v636, 16
        %v750 = vshll.u32 %v636, 16
        %v752 = vrot.slane %v750, 1
        %v753 = vor.u32 %v748, %v752
        %v755 = vshll.u32 %v637, 16
        %v757 = vrot.slane %v755, 1
        %v758 = vsel %vm654, %v753, %v757
        %v760 = vshrl.u32 %v638, 16
        %v762 = vshll.u32 %v638, 16
        %v764 = vrot.slane %v762, 1
        %v765 = vor.u32 %v760, %v764
        %v767 = vshll.u32 %v639, 16
        %v769 = vrot.slane %v767, 1
        %v770 = vsel %vm654, %v765, %v769
        %v772 = vshrl.u32 %v640, 16
        %v774 = vshll.u32 %v640, 16
        %v776 = vrot.slane %v774, 1
        %v777 = vor.u32 %v772, %v776
        %v779 = vshll.u32 %v641, 16
        %v781 = vrot.slane %v779, 1
        %v782 = vsel %vm654, %v777, %v781
        %v784 = vshrl.u32 %v642, 16
        %v786 = vshll.u32 %v642, 16
        %v788 = vrot.slane %v786, 1
        %v789 = vor.u32 %v784, %v788
        %v791 = vshll.u32 %v643, 16
        %v793 = vrot.slane %v791, 1
        %v794 = vsel %vm654, %v789, %v793
        %v796 = vshrl.u32 %v644, 16
        %v798 = vshll.u32 %v644, 16
        %v800 = vrot.slane %v798, 1
        %v801 = vor.u32 %v796, %v800
        %v803 = vshll.u32 %v645, 16
        %v805 = vrot.slane %v803, 1
        %v806 = vsel %vm654, %v801, %v805
        %v808 = vshrl.u32 %v646, 16
        %v810 = vshll.u32 %v646, 16
        %v812 = vrot.slane %v810, 1
        %v813 = vor.u32 %v808, %v812
        %v815 = vshll.u32 %v647, 16
        %v817 = vrot.slane %v815, 1
        %v818 = vsel %vm654, %v813, %v817
        %v820 = vshrl.u32 %v648, 16
        %v822 = vshll.u32 %v648, 16
        %v824 = vrot.slane %v822, 1
        %v825 = vor.u32 %v820, %v824
        %v827 = vshll.u32 %v649, 16
        %v829 = vrot.slane %v827, 1
        %v830 = vsel %vm654, %v825, %v829
        %v832 = vshrl.u32 %v650, 16
        %v834 = vshll.u32 %v650, 16
        %v836 = vrot.slane %v834, 1
        %v837 = vor.u32 %v832, %v836
        %v839 = vshll.u32 %v651, 16
        %v841 = vrot.slane %v839, 1
        %v842 = vsel %vm654, %v837, %v841
        %vm874 = vcmask 1046528
        %v875 = vrot.slane %v621, 1
        %v876 = vsel %vm874, %v875, %v875
        %v877 = vrot.slane %v622, 1
        %v878 = vrot.slane %v623, 1
        %v879 = vsel %vm874, %v877, %v878
        %v880 = vrot.slane %v624, 1
        %v881 = vrot.slane %v625, 1
        %v882 = vsel %vm874, %v880, %v881
        %v883 = vrot.slane %v626, 1
        %v884 = vrot.slane %v627, 1
        %v885 = vsel %vm874, %v883, %v884
        %v886 = vrot.slane %v628, 1
        %v887 = vrot.slane %v629, 1
        %v888 = vsel %vm874, %v886, %v887
        %v889 = vrot.slane %v630, 1
        %v890 = vrot.slane %v631, 1
        %v891 = vsel %vm874, %v889, %v890
        %v892 = vrot.slane %v632, 1
        %v893 = vrot.slane %v633, 1
        %v894 = vsel %vm874, %v892, %v893
        %v895 = vrot.slane %v634, 1
        %v896 = vrot.slane %v635, 1
        %v897 = vsel %vm874, %v895, %v896
        %v898 = vrot.slane %v636, 1
        %v899 = vrot.slane %v637, 1
        %v900 = vsel %vm874, %v898, %v899
        %v901 = vrot.slane %v638, 1
        %v902 = vrot.slane %v639, 1
        %v903 = vsel %vm874, %v901, %v902
        %v904 = vrot.slane %v640, 1
        %v905 = vrot.slane %v641, 1
        %v906 = vsel %vm874, %v904, %v905
        %v907 = vrot.slane %v642, 1
        %v908 = vrot.slane %v643, 1
        %v909 = vsel %vm874, %v907, %v908
        %v910 = vrot.slane %v644, 1
        %v911 = vrot.slane %v645, 1
        %v912 = vsel %vm874, %v910, %v911
        %v913 = vrot.slane %v646, 1
        %v914 = vrot.slane %v647, 1
        %v915 = vsel %vm874, %v913, %v914
        %v916 = vrot.slane %v648, 1
        %v917 = vrot.slane %v649, 1
        %v918 = vsel %vm874, %v916, %v917
        %v919 = vrot.slane %v650, 1
        %v920 = vrot.slane %v651, 1
        %v921 = vsel %vm874, %v919, %v920
        %v923 = vshrl.u32 %v652, 16
        %v925 = vshll.u32 %v652, 16
        %v927 = vrot.slane %v925, 1
        %v928 = vor.u32 %v923, %v927
        %v930 = vshll.u32 %v653, 16
        %v932 = vrot.slane %v930, 1
        %v933 = vsel %vm654, %v928, %v932
        %v936 = vrot.slane %v652, 1
        %v937 = vrot.slane %v653, 1
        %v938 = vsel %vm874, %v936, %v937
        %939 = vrot.lane.b32.xlu0 %v662, 4
        %v940 = vpop.permute.xlu0 %939
        %941 = vrot.lane.b32.xlu0 %v674, 4
        %v942 = vpop.permute.xlu0 %941
        %943 = vrot.lane.b32.xlu0 %v686, 4
        %v944 = vpop.permute.xlu0 %943
        %945 = vrot.lane.b32.xlu0 %v698, 4
        %v946 = vpop.permute.xlu0 %945
        %947 = vrot.lane.b32.xlu0 %v710, 4
        %v948 = vpop.permute.xlu0 %947
        %949 = vrot.lane.b32.xlu0 %v722, 4
        %v950 = vpop.permute.xlu0 %949
        %951 = vrot.lane.b32.xlu0 %v734, 4
        %v952 = vpop.permute.xlu0 %951
        %953 = vrot.lane.b32.xlu0 %v746, 4
        %v954 = vpop.permute.xlu0 %953
        %955 = vrot.lane.b32.xlu0 %v758, 4
        %v956 = vpop.permute.xlu0 %955
        %957 = vrot.lane.b32.xlu0 %v770, 4
        %v958 = vpop.permute.xlu0 %957
        %959 = vrot.lane.b32.xlu0 %v782, 4
        %v960 = vpop.permute.xlu0 %959
        %961 = vrot.lane.b32.xlu0 %v794, 4
        %v962 = vpop.permute.xlu0 %961
        %963 = vrot.lane.b32.xlu0 %v806, 4
        %v964 = vpop.permute.xlu0 %963
        %965 = vrot.lane.b32.xlu0 %v818, 4
        %v966 = vpop.permute.xlu0 %965
        %967 = vrot.lane.b32.xlu0 %v830, 4
        %v968 = vpop.permute.xlu0 %967
        %969 = vrot.lane.b32.xlu0 %v842, 4
        %v970 = vpop.permute.xlu0 %969
        %971 = vrot.lane.b32.xlu0 %v876, 8
        %v972 = vpop.permute.xlu0 %971
        %973 = vrot.lane.b32.xlu0 %v879, 8
        %v974 = vpop.permute.xlu0 %973
        %975 = vrot.lane.b32.xlu0 %v882, 8
        %v976 = vpop.permute.xlu0 %975
        %977 = vrot.lane.b32.xlu0 %v885, 8
        %v978 = vpop.permute.xlu0 %977
        %979 = vrot.lane.b32.xlu0 %v888, 8
        %v980 = vpop.permute.xlu0 %979
        %981 = vrot.lane.b32.xlu0 %v891, 8
        %v982 = vpop.permute.xlu0 %981
        %983 = vrot.lane.b32.xlu0 %v894, 8
        %v984 = vpop.permute.xlu0 %983
        %985 = vrot.lane.b32.xlu0 %v897, 8
        %v986 = vpop.permute.xlu0 %985
        %987 = vrot.lane.b32.xlu0 %v900, 8
        %v988 = vpop.permute.xlu0 %987
        %989 = vrot.lane.b32.xlu0 %v903, 8
        %v990 = vpop.permute.xlu0 %989
        %991 = vrot.lane.b32.xlu0 %v906, 8
        %v992 = vpop.permute.xlu0 %991
        %993 = vrot.lane.b32.xlu0 %v909, 8
        %v994 = vpop.permute.xlu0 %993
        %995 = vrot.lane.b32.xlu0 %v912, 8
        %v996 = vpop.permute.xlu0 %995
        %997 = vrot.lane.b32.xlu0 %v915, 8
        %v998 = vpop.permute.xlu0 %997
        %999 = vrot.lane.b32.xlu0 %v918, 8
        %v1000 = vpop.permute.xlu0 %999
        %1001 = vrot.lane.b32.xlu0 %v921, 8
        %v1002 = vpop.permute.xlu0 %1001
        %1003 = vrot.lane.b32.xlu0 %v622, 12
        %v1004 = vpop.permute.xlu0 %1003
        %1005 = vrot.lane.b32.xlu0 %v624, 12
        %v1006 = vpop.permute.xlu0 %1005
        %1007 = vrot.lane.b32.xlu0 %v626, 12
        %v1008 = vpop.permute.xlu0 %1007
        %1009 = vrot.lane.b32.xlu0 %v628, 12
        %v1010 = vpop.permute.xlu0 %1009
        %1011 = vrot.lane.b32.xlu0 %v630, 12
        %v1012 = vpop.permute.xlu0 %1011
        %1013 = vrot.lane.b32.xlu0 %v632, 12
        %v1014 = vpop.permute.xlu0 %1013
        %1015 = vrot.lane.b32.xlu0 %v634, 12
        %v1016 = vpop.permute.xlu0 %1015
        %1017 = vrot.lane.b32.xlu0 %v636, 12
        %v1018 = vpop.permute.xlu0 %1017
        %1019 = vrot.lane.b32.xlu0 %v638, 12
        %v1020 = vpop.permute.xlu0 %1019
        %1021 = vrot.lane.b32.xlu0 %v640, 12
        %v1022 = vpop.permute.xlu0 %1021
        %1023 = vrot.lane.b32.xlu0 %v642, 12
        %v1024 = vpop.permute.xlu0 %1023
        %1025 = vrot.lane.b32.xlu0 %v644, 12
        %v1026 = vpop.permute.xlu0 %1025
        %1027 = vrot.lane.b32.xlu0 %v646, 12
        %v1028 = vpop.permute.xlu0 %1027
        %1029 = vrot.lane.b32.xlu0 %v648, 12
        %v1030 = vpop.permute.xlu0 %1029
        %1031 = vrot.lane.b32.xlu0 %v650, 12
        %v1032 = vpop.permute.xlu0 %1031
        %1033 = vrot.lane.b32.xlu0 %v652, 12
        %v1034 = vpop.permute.xlu0 %1033
        %1035 = vrot.lane.b32.xlu0 %v674, 16
        %v1036 = vpop.permute.xlu0 %1035
        %1037 = vrot.lane.b32.xlu0 %v686, 16
        %v1038 = vpop.permute.xlu0 %1037
        %1039 = vrot.lane.b32.xlu0 %v698, 16
        %v1040 = vpop.permute.xlu0 %1039
        %1041 = vrot.lane.b32.xlu0 %v710, 16
        %v1042 = vpop.permute.xlu0 %1041
        %1043 = vrot.lane.b32.xlu0 %v722, 16
        %v1044 = vpop.permute.xlu0 %1043
        %1045 = vrot.lane.b32.xlu0 %v734, 16
        %v1046 = vpop.permute.xlu0 %1045
        %1047 = vrot.lane.b32.xlu0 %v746, 16
        %v1048 = vpop.permute.xlu0 %1047
        %1049 = vrot.lane.b32.xlu0 %v758, 16
        %v1050 = vpop.permute.xlu0 %1049
        %1051 = vrot.lane.b32.xlu0 %v770, 16
        %v1052 = vpop.permute.xlu0 %1051
        %1053 = vrot.lane.b32.xlu0 %v782, 16
        %v1054 = vpop.permute.xlu0 %1053
        %1055 = vrot.lane.b32.xlu0 %v794, 16
        %v1056 = vpop.permute.xlu0 %1055
        %1057 = vrot.lane.b32.xlu0 %v806, 16
        %v1058 = vpop.permute.xlu0 %1057
        %1059 = vrot.lane.b32.xlu0 %v818, 16
        %v1060 = vpop.permute.xlu0 %1059
        %1061 = vrot.lane.b32.xlu0 %v830, 16
        %v1062 = vpop.permute.xlu0 %1061
        %1063 = vrot.lane.b32.xlu0 %v842, 16
        %v1064 = vpop.permute.xlu0 %1063
        %1065 = vrot.lane.b32.xlu0 %v933, 16
        %v1066 = vpop.permute.xlu0 %1065
        %1067 = vrot.lane.b32.xlu0 %v879, 20
        %v1068 = vpop.permute.xlu0 %1067
        %1069 = vrot.lane.b32.xlu0 %v882, 20
        %v1070 = vpop.permute.xlu0 %1069
        %1071 = vrot.lane.b32.xlu0 %v885, 20
        %v1072 = vpop.permute.xlu0 %1071
        %1073 = vrot.lane.b32.xlu0 %v888, 20
        %v1074 = vpop.permute.xlu0 %1073
        %1075 = vrot.lane.b32.xlu0 %v891, 20
        %v1076 = vpop.permute.xlu0 %1075
        %1077 = vrot.lane.b32.xlu0 %v894, 20
        %v1078 = vpop.permute.xlu0 %1077
        %1079 = vrot.lane.b32.xlu0 %v897, 20
        %v1080 = vpop.permute.xlu0 %1079
        %1081 = vrot.lane.b32.xlu0 %v900, 20
        %v1082 = vpop.permute.xlu0 %1081
        %1083 = vrot.lane.b32.xlu0 %v903, 20
        %v1084 = vpop.permute.xlu0 %1083
        %1085 = vrot.lane.b32.xlu0 %v906, 20
        %v1086 = vpop.permute.xlu0 %1085
        %1087 = vrot.lane.b32.xlu0 %v909, 20
        %v1088 = vpop.permute.xlu0 %1087
        %1089 = vrot.lane.b32.xlu0 %v912, 20
        %v1090 = vpop.permute.xlu0 %1089
        %1091 = vrot.lane.b32.xlu0 %v915, 20
        %v1092 = vpop.permute.xlu0 %1091
        %1093 = vrot.lane.b32.xlu0 %v918, 20
        %v1094 = vpop.permute.xlu0 %1093
        %1095 = vrot.lane.b32.xlu0 %v921, 20
        %v1096 = vpop.permute.xlu0 %1095
        %1097 = vrot.lane.b32.xlu0 %v938, 20
        %v1098 = vpop.permute.xlu0 %1097
        %1099 = vrot.lane.b32.xlu0 %v624, 24
        %v1100 = vpop.permute.xlu0 %1099
        %1101 = vrot.lane.b32.xlu0 %v626, 24
        %v1102 = vpop.permute.xlu0 %1101
        %1103 = vrot.lane.b32.xlu0 %v628, 24
        %v1104 = vpop.permute.xlu0 %1103
        %1105 = vrot.lane.b32.xlu0 %v630, 24
        %v1106 = vpop.permute.xlu0 %1105
        %1107 = vrot.lane.b32.xlu0 %v632, 24
        %v1108 = vpop.permute.xlu0 %1107
        %1109 = vrot.lane.b32.xlu0 %v634, 24
        %v1110 = vpop.permute.xlu0 %1109
        %1111 = vrot.lane.b32.xlu0 %v636, 24
        %v1112 = vpop.permute.xlu0 %1111
        %1113 = vrot.lane.b32.xlu0 %v638, 24
        %v1114 = vpop.permute.xlu0 %1113
        %1115 = vrot.lane.b32.xlu0 %v640, 24
        %v1116 = vpop.permute.xlu0 %1115
        %1117 = vrot.lane.b32.xlu0 %v642, 24
        %v1118 = vpop.permute.xlu0 %1117
        %1119 = vrot.lane.b32.xlu0 %v644, 24
        %v1120 = vpop.permute.xlu0 %1119
        %1121 = vrot.lane.b32.xlu0 %v646, 24
        %v1122 = vpop.permute.xlu0 %1121
        %1123 = vrot.lane.b32.xlu0 %v648, 24
        %v1124 = vpop.permute.xlu0 %1123
        %1125 = vrot.lane.b32.xlu0 %v650, 24
        %v1126 = vpop.permute.xlu0 %1125
        %1127 = vrot.lane.b32.xlu0 %v652, 24
        %v1128 = vpop.permute.xlu0 %1127
        %1129 = vrot.lane.b32.xlu0 %v621, 24
        %v1130 = vpop.permute.xlu0 %1129
        %1131 = vrot.lane.b32.xlu0 %v686, 28
        %v1132 = vpop.permute.xlu0 %1131
        %1133 = vrot.lane.b32.xlu0 %v698, 28
        %v1134 = vpop.permute.xlu0 %1133
        %1135 = vrot.lane.b32.xlu0 %v710, 28
        %v1136 = vpop.permute.xlu0 %1135
        %1137 = vrot.lane.b32.xlu0 %v722, 28
        %v1138 = vpop.permute.xlu0 %1137
        %1139 = vrot.lane.b32.xlu0 %v734, 28
        %v1140 = vpop.permute.xlu0 %1139
        %1141 = vrot.lane.b32.xlu0 %v746, 28
        %v1142 = vpop.permute.xlu0 %1141
        %1143 = vrot.lane.b32.xlu0 %v758, 28
        %v1144 = vpop.permute.xlu0 %1143
        %1145 = vrot.lane.b32.xlu0 %v770, 28
        %v1146 = vpop.permute.xlu0 %1145
        %1147 = vrot.lane.b32.xlu0 %v782, 28
        %v1148 = vpop.permute.xlu0 %1147
        %1149 = vrot.lane.b32.xlu0 %v794, 28
        %v1150 = vpop.permute.xlu0 %1149
        %1151 = vrot.lane.b32.xlu0 %v806, 28
        %v1152 = vpop.permute.xlu0 %1151
        %1153 = vrot.lane.b32.xlu0 %v818, 28
        %v1154 = vpop.permute.xlu0 %1153
        %1155 = vrot.lane.b32.xlu0 %v830, 28
        %v1156 = vpop.permute.xlu0 %1155
        %1157 = vrot.lane.b32.xlu0 %v842, 28
        %v1158 = vpop.permute.xlu0 %1157
        %1159 = vrot.lane.b32.xlu0 %v933, 28
        %v1160 = vpop.permute.xlu0 %1159
        %1161 = vrot.lane.b32.xlu0 %v662, 28
        %v1162 = vpop.permute.xlu0 %1161
        %1163 = vrot.lane.b32.xlu0 %v882, 32
        %v1164 = vpop.permute.xlu0 %1163
        %1165 = vrot.lane.b32.xlu0 %v885, 32
        %v1166 = vpop.permute.xlu0 %1165
        %1167 = vrot.lane.b32.xlu0 %v888, 32
        %v1168 = vpop.permute.xlu0 %1167
        %1169 = vrot.lane.b32.xlu0 %v891, 32
        %v1170 = vpop.permute.xlu0 %1169
        %1171 = vrot.lane.b32.xlu0 %v894, 32
        %v1172 = vpop.permute.xlu0 %1171
        %1173 = vrot.lane.b32.xlu0 %v897, 32
        %v1174 = vpop.permute.xlu0 %1173
        %1175 = vrot.lane.b32.xlu0 %v900, 32
        %v1176 = vpop.permute.xlu0 %1175
        %1177 = vrot.lane.b32.xlu0 %v903, 32
        %v1178 = vpop.permute.xlu0 %1177
        %1179 = vrot.lane.b32.xlu0 %v906, 32
        %v1180 = vpop.permute.xlu0 %1179
        %1181 = vrot.lane.b32.xlu0 %v909, 32
        %v1182 = vpop.permute.xlu0 %1181
        %1183 = vrot.lane.b32.xlu0 %v912, 32
        %v1184 = vpop.permute.xlu0 %1183
        %1185 = vrot.lane.b32.xlu0 %v915, 32
        %v1186 = vpop.permute.xlu0 %1185
        %1187 = vrot.lane.b32.xlu0 %v918, 32
        %v1188 = vpop.permute.xlu0 %1187
        %1189 = vrot.lane.b32.xlu0 %v921, 32
        %v1190 = vpop.permute.xlu0 %1189
        %1191 = vrot.lane.b32.xlu0 %v938, 32
        %v1192 = vpop.permute.xlu0 %1191
        %1193 = vrot.lane.b32.xlu0 %v876, 32
        %v1194 = vpop.permute.xlu0 %1193
        %vm1195 = vcmask 31744
        %v1197 = vsel %vm1195, %v621, %v940
        %v1199 = vsel %vm1195, %v622, %v942
        %v1201 = vsel %vm1195, %v624, %v944
        %v1203 = vsel %vm1195, %v626, %v946
        %v1205 = vsel %vm1195, %v628, %v948
        %v1207 = vsel %vm1195, %v630, %v950
        %v1209 = vsel %vm1195, %v632, %v952
        %v1211 = vsel %vm1195, %v634, %v954
        %v1213 = vsel %vm1195, %v636, %v956
        %v1215 = vsel %vm1195, %v638, %v958
        %v1217 = vsel %vm1195, %v640, %v960
        %v1219 = vsel %vm1195, %v642, %v962
        %v1221 = vsel %vm1195, %v644, %v964
        %v1223 = vsel %vm1195, %v646, %v966
        %v1225 = vsel %vm1195, %v648, %v968
        %v1227 = vsel %vm1195, %v650, %v970
        %vm1228 = vcmask 64512
        %v1230 = vsel %vm1228, %v1197, %v972
        %v1232 = vsel %vm1228, %v1199, %v974
        %v1234 = vsel %vm1228, %v1201, %v976
        %v1236 = vsel %vm1228, %v1203, %v978
        %v1238 = vsel %vm1228, %v1205, %v980
        %v1240 = vsel %vm1228, %v1207, %v982
        %v1242 = vsel %vm1228, %v1209, %v984
        %v1244 = vsel %vm1228, %v1211, %v986
        %v1246 = vsel %vm1228, %v1213, %v988
        %v1248 = vsel %vm1228, %v1215, %v990
        %v1250 = vsel %vm1228, %v1217, %v992
        %v1252 = vsel %vm1228, %v1219, %v994
        %v1254 = vsel %vm1228, %v1221, %v996
        %v1256 = vsel %vm1228, %v1223, %v998
        %v1258 = vsel %vm1228, %v1225, %v1000
        %v1260 = vsel %vm1228, %v1227, %v1002
        %vm1261 = vcmask 97280
        %v1263 = vsel %vm1261, %v1230, %v1004
        %v1265 = vsel %vm1261, %v1232, %v1006
        %v1267 = vsel %vm1261, %v1234, %v1008
        %v1269 = vsel %vm1261, %v1236, %v1010
        %v1271 = vsel %vm1261, %v1238, %v1012
        %v1273 = vsel %vm1261, %v1240, %v1014
        %v1275 = vsel %vm1261, %v1242, %v1016
        %v1277 = vsel %vm1261, %v1244, %v1018
        %v1279 = vsel %vm1261, %v1246, %v1020
        %v1281 = vsel %vm1261, %v1248, %v1022
        %v1283 = vsel %vm1261, %v1250, %v1024
        %v1285 = vsel %vm1261, %v1252, %v1026
        %v1287 = vsel %vm1261, %v1254, %v1028
        %v1289 = vsel %vm1261, %v1256, %v1030
        %v1291 = vsel %vm1261, %v1258, %v1032
        %v1293 = vsel %vm1261, %v1260, %v1034
        %vm1294 = vcmask 130048
        %v1296 = vsel %vm1294, %v1263, %v1036
        %v1298 = vsel %vm1294, %v1265, %v1038
        %v1300 = vsel %vm1294, %v1267, %v1040
        %v1302 = vsel %vm1294, %v1269, %v1042
        %v1304 = vsel %vm1294, %v1271, %v1044
        %v1306 = vsel %vm1294, %v1273, %v1046
        %v1308 = vsel %vm1294, %v1275, %v1048
        %v1310 = vsel %vm1294, %v1277, %v1050
        %v1312 = vsel %vm1294, %v1279, %v1052
        %v1314 = vsel %vm1294, %v1281, %v1054
        %v1316 = vsel %vm1294, %v1283, %v1056
        %v1318 = vsel %vm1294, %v1285, %v1058
        %v1320 = vsel %vm1294, %v1287, %v1060
        %v1322 = vsel %vm1294, %v1289, %v1062
        %v1324 = vsel %vm1294, %v1291, %v1064
        %v1326 = vsel %vm1294, %v1293, %v1066
        %vm1327 = vcmask 162816
        %v1329 = vsel %vm1327, %v1296, %v1068
        %v1331 = vsel %vm1327, %v1298, %v1070
        %v1333 = vsel %vm1327, %v1300, %v1072
        %v1335 = vsel %vm1327, %v1302, %v1074
        %v1337 = vsel %vm1327, %v1304, %v1076
        %v1339 = vsel %vm1327, %v1306, %v1078
        %v1341 = vsel %vm1327, %v1308, %v1080
        %v1343 = vsel %vm1327, %v1310, %v1082
        %v1345 = vsel %vm1327, %v1312, %v1084
        %v1347 = vsel %vm1327, %v1314, %v1086
        %v1349 = vsel %vm1327, %v1316, %v1088
        %v1351 = vsel %vm1327, %v1318, %v1090
        %v1353 = vsel %vm1327, %v1320, %v1092
        %v1355 = vsel %vm1327, %v1322, %v1094
        %v1357 = vsel %vm1327, %v1324, %v1096
        %v1359 = vsel %vm1327, %v1326, %v1098
        %vm1360 = vcmask 195584
        %v1362 = vsel %vm1360, %v1329, %v1100
        %v1364 = vsel %vm1360, %v1331, %v1102
        %v1366 = vsel %vm1360, %v1333, %v1104
        %v1368 = vsel %vm1360, %v1335, %v1106
        %v1370 = vsel %vm1360, %v1337, %v1108
        %v1372 = vsel %vm1360, %v1339, %v1110
        %v1374 = vsel %vm1360, %v1341, %v1112
        %v1376 = vsel %vm1360, %v1343, %v1114
        %v1378 = vsel %vm1360, %v1345, %v1116
        %v1380 = vsel %vm1360, %v1347, %v1118
        %v1382 = vsel %vm1360, %v1349, %v1120
        %v1384 = vsel %vm1360, %v1351, %v1122
        %v1386 = vsel %vm1360, %v1353, %v1124
        %v1388 = vsel %vm1360, %v1355, %v1126
        %v1390 = vsel %vm1360, %v1357, %v1128
        %v1392 = vsel %vm1360, %v1359, %v1130
        %vm1393 = vcmask 228352
        %v1395 = vsel %vm1393, %v1362, %v1132
        %v1397 = vsel %vm1393, %v1364, %v1134
        %v1399 = vsel %vm1393, %v1366, %v1136
        %v1401 = vsel %vm1393, %v1368, %v1138
        %v1403 = vsel %vm1393, %v1370, %v1140
        %v1405 = vsel %vm1393, %v1372, %v1142
        %v1407 = vsel %vm1393, %v1374, %v1144
        %v1409 = vsel %vm1393, %v1376, %v1146
        %v1411 = vsel %vm1393, %v1378, %v1148
        %v1413 = vsel %vm1393, %v1380, %v1150
        %v1415 = vsel %vm1393, %v1382, %v1152
        %v1417 = vsel %vm1393, %v1384, %v1154
        %v1419 = vsel %vm1393, %v1386, %v1156
        %v1421 = vsel %vm1393, %v1388, %v1158
        %v1423 = vsel %vm1393, %v1390, %v1160
        %v1425 = vsel %vm1393, %v1392, %v1162
        %vm1426 = vcmask 261120
        %v1428 = vsel %vm1426, %v1395, %v1164
        %v1431 = vsel %vm1426, %v1397, %v1166
        %v1434 = vsel %vm1426, %v1399, %v1168
        %v1437 = vsel %vm1426, %v1401, %v1170
        %v1440 = vsel %vm1426, %v1403, %v1172
        %v1443 = vsel %vm1426, %v1405, %v1174
        %v1446 = vsel %vm1426, %v1407, %v1176
        %v1449 = vsel %vm1426, %v1409, %v1178
        %v1452 = vsel %vm1426, %v1411, %v1180
        %v1455 = vsel %vm1426, %v1413, %v1182
        %v1458 = vsel %vm1426, %v1415, %v1184
        %v1461 = vsel %vm1426, %v1417, %v1186
        %v1464 = vsel %vm1426, %v1419, %v1188
        %v1467 = vsel %vm1426, %v1421, %v1190
        %v1470 = vsel %vm1426, %v1423, %v1192
        %v1473 = vsel %vm1426, %v1425, %v1194
        %vm1475 = vcmask 293888
        %1476 = vst.msk [vmem:[#allocation2] sm:$0xff] %vm1475, %v1428
        %1477 = vst.msk [vmem:[#allocation2 + $0x8] sm:$0xff] %vm1475, %v1431
        %1478 = vst.msk [vmem:[#allocation2 + $0x10] sm:$0xff] %vm1475, %v1434
        %1479 = vst.msk [vmem:[#allocation2 + $0x18] sm:$0xff] %vm1475, %v1437
        %1480 = vst.msk [vmem:[#allocation2 + $0x20] sm:$0xff] %vm1475, %v1440
        %1481 = vst.msk [vmem:[#allocation2 + $0x28] sm:$0xff] %vm1475, %v1443
        %1482 = vst.msk [vmem:[#allocation2 + $0x30] sm:$0xff] %vm1475, %v1446
        %1483 = vst.msk [vmem:[#allocation2 + $0x38] sm:$0xff] %vm1475, %v1449
        %1484 = vst.msk [vmem:[#allocation2 + $0x40] sm:$0xff] %vm1475, %v1452
        %1485 = vst.msk [vmem:[#allocation2 + $0x48] sm:$0xff] %vm1475, %v1455
        %1486 = vst.msk [vmem:[#allocation2 + $0x50] sm:$0xff] %vm1475, %v1458
        %1487 = vst.msk [vmem:[#allocation2 + $0x58] sm:$0xff] %vm1475, %v1461
        %1488 = vst.msk [vmem:[#allocation2 + $0x60] sm:$0xff] %vm1475, %v1464
        %1489 = vst.msk [vmem:[#allocation2 + $0x68] sm:$0xff] %vm1475, %v1467
        %1490 = vst.msk [vmem:[#allocation2 + $0x70] sm:$0xff] %vm1475, %v1470
        %1491 = vst.msk [vmem:[#allocation2 + $0x78] sm:$0xff] %vm1475, %v1473
      $region40: #{residual_block.4} parent=35 // pred_fallthru
        _
      %v1492 = vld [vmem:[#allocation2] sm:$0xff]
      %v1493 = vld [vmem:[#allocation2 + $0x8] sm:$0xff]
      %v1494 = vld [vmem:[#allocation2 + $0x10] sm:$0xff]
      %v1495 = vld [vmem:[#allocation2 + $0x18] sm:$0xff]
      %v1496 = vld [vmem:[#allocation2 + $0x20] sm:$0xff]
      %v1497 = vld [vmem:[#allocation2 + $0x28] sm:$0xff]
      %v1498 = vld [vmem:[#allocation2 + $0x30] sm:$0xff]
      %v1499 = vld [vmem:[#allocation2 + $0x38] sm:$0xff]
      %v1500 = vld [vmem:[#allocation2 + $0x40] sm:$0xff]
      %v1501 = vld [vmem:[#allocation2 + $0x48] sm:$0xff]
      %v1502 = vld [vmem:[#allocation2 + $0x50] sm:$0xff]
      %v1503 = vld [vmem:[#allocation2 + $0x58] sm:$0xff]
      %v1504 = vld [vmem:[#allocation2 + $0x60] sm:$0xff]
      %v1505 = vld [vmem:[#allocation2 + $0x68] sm:$0xff]
      %v1506 = vld [vmem:[#allocation2 + $0x70] sm:$0xff]
      %v1507 = vld [vmem:[#allocation2 + $0x78] sm:$0xff]
      %v1508 = vld [vmem:[%s265] sm:$0xf]
      %v1509 = vld [vmem:[%s265 + $0x4] sm:$0xf]
      %v1510 = vld [vmem:[%s265 + $0x8] sm:$0xf]
      %v1511 = vld [vmem:[%s265 + $0xc] sm:$0xf]
      %v1512 = vld [vmem:[%s265 + $0x10] sm:$0x3]
      %v1518 = vunpack.c.l.b16 %v1508
      %v1519 = vunpack.c.l.b16 %v1509
      %v1520 = vunpack.c.l.b16 %v1510
      %v1521 = vunpack.c.l.b16 %v1511
      %v1522 = vunpack.c.l.b16 %v1512
      %v1523 = vpack.c.b16 %v1519, %v1518
      %v1524 = vpack.c.b16 %v1521, %v1520
      %v1525 = vpack.c.b16 %v1522, %v1522
      %vm1528 = vcmask 293888
      %v1530 = vsel %vm1528, %v1492, 0
      %v1533 = vsel %vm1528, %v1493, 0
      %v1536 = vsel %vm1528, %v1494, 0
      %v1539 = vsel %vm1528, %v1495, 0
      %v1542 = vsel %vm1528, %v1496, 0
      %v1545 = vsel %vm1528, %v1497, 0
      %v1548 = vsel %vm1528, %v1498, 0
      %v1551 = vsel %vm1528, %v1499, 0
      %v1554 = vsel %vm1528, %v1500, 0
      %v1557 = vsel %vm1528, %v1501, 0
      %v1560 = vsel %vm1528, %v1502, 0
      %v1563 = vsel %vm1528, %v1503, 0
      %v1566 = vsel %vm1528, %v1504, 0
      %v1569 = vsel %vm1528, %v1505, 0
      %v1572 = vsel %vm1528, %v1506, 0
      %v1575 = vsel %vm1528, %v1507, 0
      %vm1577 = vcmask 1041408
      %v1579 = vsel %vm1577, %v1525, 0
      %1581 = vmatprep.subr.bf16.mxu0 0
      %1582 = vmatpush1.bf16.msra.mxu0 %v1523
      %1583 = vmatprep.subr.bf16.mxu0 0
      %1584 = vmatpush1.bf16.msra.mxu0 %v1524
      %1585 = vmatprep.subr.bf16.mxu0 0
      %1586 = vmatpush1.bf16.msra.mxu0 %v1579
      %1587 = vmatprep.subr.bf16.mxu0 0
      %1588 = vmatpush1.bf16.msra.mxu0 0
      %1589 = vmatprep.subr.bf16.mxu0 0
      %1590 = vmatpush1.bf16.msra.mxu0 0
      %1591 = vmatprep.subr.bf16.mxu0 0
      %1592 = vmatpush1.bf16.msra.mxu0 0
      %1593 = vmatprep.subr.bf16.mxu0 0
      %1594 = vmatpush1.bf16.msra.mxu0 0
      %1595 = vmatprep.subr.bf16.mxu0 0
      %1596 = vmatpush1.bf16.msra.mxu0 0
      %1597 = vmatprep.subr.bf16.mxu0 0
      %1598 = vmatpush1.bf16.msra.mxu0 0
      %1599 = vmatprep.subr.bf16.mxu0 0
      %1600 = vmatpush1.bf16.msra.mxu0 0
      %1601 = vmatprep.subr.bf16.mxu0 0
      %1602 = vmatpush1.bf16.msra.mxu0 0
      %1603 = vmatprep.subr.bf16.mxu0 0
      %1604 = vmatpush1.bf16.msra.mxu0 0
      %1605 = vmatprep.subr.bf16.mxu0 0
      %1606 = vmatpush1.bf16.msra.mxu0 0
      %1607 = vmatprep.subr.bf16.mxu0 0
      %1608 = vmatpush1.bf16.msra.mxu0 0
      %1609 = vmatprep.subr.bf16.mxu0 0
      %1610 = vmatpush1.bf16.msra.mxu0 0
      %1611 = vmatprep.subr.bf16.mxu0 0
      %1612 = vmatpush1.bf16.msra.mxu0 0
      %1613 = vmatprep.mubr.bf16.mxu0 0
      %1614 = vmatmul.mubr.bf16.gmra.mrb[0].mxu0 %v1530
      %v1615 = vpop.f32.mrb[0].mxu0
      %v1616 = vadd.f32 0.0, %v1615
      %v1617 = vpop.f32.mrb[0].mxu0
      %v1618 = vpop.f32.mrb[0].mxu0
      %v1619 = vadd.f32 0.0, %v1618
      %v1620 = vpop.f32.mrb[0].mxu0
      %1621 = vmatprep.mubr.bf16.mxu0 0
      %1622 = vmatmul.mubr.bf16.gmra.mrb[0].mxu0 %v1533
      %v1623 = vpop.f32.mrb[0].mxu0
      %v1624 = vadd.f32 0.0, %v1623
      %v1625 = vpop.f32.mrb[0].mxu0
      %v1626 = vpop.f32.mrb[0].mxu0
      %v1627 = vadd.f32 0.0, %v1626
      %v1628 = vpop.f32.mrb[0].mxu0
      %1629 = vmatprep.mubr.bf16.mxu0 0
      %1630 = vmatmul.mubr.bf16.gmra.mrb[0].mxu0 %v1536
      %v1631 = vpop.f32.mrb[0].mxu0
      %v1632 = vadd.f32 0.0, %v1631
      %v1633 = vpop.f32.mrb[0].mxu0
      %v1634 = vpop.f32.mrb[0].mxu0
      %v1635 = vadd.f32 0.0, %v1634
      %v1636 = vpop.f32.mrb[0].mxu0
      %1637 = vmatprep.mubr.bf16.mxu0 0
      %1638 = vmatmul.mubr.bf16.gmra.mrb[0].mxu0 %v1539
      %v1639 = vpop.f32.mrb[0].mxu0
      %v1640 = vadd.f32 0.0, %v1639
      %v1641 = vpop.f32.mrb[0].mxu0
      %v1642 = vpop.f32.mrb[0].mxu0
      %v1643 = vadd.f32 0.0, %v1642
      %v1644 = vpop.f32.mrb[0].mxu0
      %1645 = vmatprep.mubr.bf16.mxu0 0
      %1646 = vmatmul.mubr.bf16.gmra.mrb[0].mxu0 %v1542
      %v1647 = vpop.f32.mrb[0].mxu0
      %v1648 = vadd.f32 0.0, %v1647
      %v1649 = vpop.f32.mrb[0].mxu0
      %v1650 = vpop.f32.mrb[0].mxu0
      %v1651 = vadd.f32 0.0, %v1650
      %v1652 = vpop.f32.mrb[0].mxu0
      %1653 = vmatprep.mubr.bf16.mxu0 0
      %1654 = vmatmul.mubr.bf16.gmra.mrb[0].mxu0 %v1545
      %v1655 = vpop.f32.mrb[0].mxu0
      %v1656 = vadd.f32 0.0, %v1655
      %v1657 = vpop.f32.mrb[0].mxu0
      %v1658 = vpop.f32.mrb[0].mxu0
      %v1659 = vadd.f32 0.0, %v1658
      %v1660 = vpop.f32.mrb[0].mxu0
      %1661 = vmatprep.mubr.bf16.mxu0 0
      %1662 = vmatmul.mubr.bf16.gmra.mrb[0].mxu0 %v1548
      %v1663 = vpop.f32.mrb[0].mxu0
      %v1664 = vadd.f32 0.0, %v1663
      %v1665 = vpop.f32.mrb[0].mxu0
      %v1666 = vpop.f32.mrb[0].mxu0
      %v1667 = vadd.f32 0.0, %v1666
      %v1668 = vpop.f32.mrb[0].mxu0
      %1669 = vmatprep.mubr.bf16.mxu0 0
      %1670 = vmatmul.mubr.bf16.gmra.mrb[0].mxu0 %v1551
      %v1671 = vpop.f32.mrb[0].mxu0
      %v1672 = vadd.f32 0.0, %v1671
      %v1673 = vpop.f32.mrb[0].mxu0
      %v1674 = vpop.f32.mrb[0].mxu0
      %v1675 = vadd.f32 0.0, %v1674
      %v1676 = vpop.f32.mrb[0].mxu0
      %1677 = vmatprep.mubr.bf16.mxu0 0
      %1678 = vmatmul.mubr.bf16.gmra.mrb[0].mxu0 %v1554
      %v1679 = vpop.f32.mrb[0].mxu0
      %v1680 = vadd.f32 0.0, %v1679
      %v1681 = vpop.f32.mrb[0].mxu0
      %v1682 = vpop.f32.mrb[0].mxu0
      %v1683 = vadd.f32 0.0, %v1682
      %v1684 = vpop.f32.mrb[0].mxu0
      %1685 = vmatprep.mubr.bf16.mxu0 0
      %1686 = vmatmul.mubr.bf16.gmra.mrb[0].mxu0 %v1557
      %v1687 = vpop.f32.mrb[0].mxu0
      %v1688 = vadd.f32 0.0, %v1687
      %v1689 = vpop.f32.mrb[0].mxu0
      %v1690 = vpop.f32.mrb[0].mxu0
      %v1691 = vadd.f32 0.0, %v1690
      %v1692 = vpop.f32.mrb[0].mxu0
      %1693 = vmatprep.mubr.bf16.mxu0 0
      %1694 = vmatmul.mubr.bf16.gmra.mrb[0].mxu0 %v1560
      %v1695 = vpop.f32.mrb[0].mxu0
      %v1696 = vadd.f32 0.0, %v1695
      %v1697 = vpop.f32.mrb[0].mxu0
      %v1698 = vpop.f32.mrb[0].mxu0
      %v1699 = vadd.f32 0.0, %v1698
      %v1700 = vpop.f32.mrb[0].mxu0
      %1701 = vmatprep.mubr.bf16.mxu0 0
      %1702 = vmatmul.mubr.bf16.gmra.mrb[0].mxu0 %v1563
      %v1703 = vpop.f32.mrb[0].mxu0
      %v1704 = vadd.f32 0.0, %v1703
      %v1705 = vpop.f32.mrb[0].mxu0
      %v1706 = vpop.f32.mrb[0].mxu0
      %v1707 = vadd.f32 0.0, %v1706
      %v1708 = vpop.f32.mrb[0].mxu0
      %1709 = vmatprep.mubr.bf16.mxu0 0
      %1710 = vmatmul.mubr.bf16.gmra.mrb[0].mxu0 %v1566
      %v1711 = vpop.f32.mrb[0].mxu0
      %v1712 = vadd.f32 0.0, %v1711
      %v1713 = vpop.f32.mrb[0].mxu0
      %v1714 = vpop.f32.mrb[0].mxu0
      %v1715 = vadd.f32 0.0, %v1714
      %v1716 = vpop.f32.mrb[0].mxu0
      %1717 = vmatprep.mubr.bf16.mxu0 0
      %1718 = vmatmul.mubr.bf16.gmra.mrb[0].mxu0 %v1569
      %v1719 = vpop.f32.mrb[0].mxu0
      %v1720 = vadd.f32 0.0, %v1719
      %v1721 = vpop.f32.mrb[0].mxu0
      %v1722 = vpop.f32.mrb[0].mxu0
      %v1723 = vadd.f32 0.0, %v1722
      %v1724 = vpop.f32.mrb[0].mxu0
      %1725 = vmatprep.mubr.bf16.mxu0 0
      %1726 = vmatmul.mubr.bf16.gmra.mrb[0].mxu0 %v1572
      %v1727 = vpop.f32.mrb[0].mxu0
      %v1728 = vadd.f32 0.0, %v1727
      %v1729 = vpop.f32.mrb[0].mxu0
      %v1730 = vpop.f32.mrb[0].mxu0
      %v1731 = vadd.f32 0.0, %v1730
      %v1732 = vpop.f32.mrb[0].mxu0
      %1733 = vmatprep.mubr.bf16.mxu0 0
      %1734 = vmatmul.mubr.bf16.gmra.mrb[0].mxu0 %v1575
      %v1735 = vpop.f32.mrb[0].mxu0
      %v1736 = vadd.f32 0.0, %v1735
      %v1737 = vpop.f32.mrb[0].mxu0
      %v1738 = vpop.f32.mrb[0].mxu0
      %v1739 = vadd.f32 0.0, %v1738
      %v1740 = vpop.f32.mrb[0].mxu0
      %1741 = vdwg.mxu0
      %v1742 = vpack.c.bf16 %v1619, %v1616
      %v1743 = vpack.c.bf16 %v1627, %v1624
      %v1744 = vpack.c.bf16 %v1635, %v1632
      %v1745 = vpack.c.bf16 %v1643, %v1640
      %v1746 = vpack.c.bf16 %v1651, %v1648
      %v1747 = vpack.c.bf16 %v1659, %v1656
      %v1748 = vpack.c.bf16 %v1667, %v1664
      %v1749 = vpack.c.bf16 %v1675, %v1672
      %v1750 = vpack.c.bf16 %v1683, %v1680
      %v1751 = vpack.c.bf16 %v1691, %v1688
      %v1752 = vpack.c.bf16 %v1699, %v1696
      %v1753 = vpack.c.bf16 %v1707, %v1704
      %v1754 = vpack.c.bf16 %v1715, %v1712
      %v1755 = vpack.c.bf16 %v1723, %v1720
      %v1756 = vpack.c.bf16 %v1731, %v1728
      %v1757 = vpack.c.bf16 %v1739, %v1736
      %v1774 = vunpack.c.l.b16 %v1742
      %v1775 = vunpack.c.h.b16 %v1742
      %v1776 = vunpack.c.l.b16 %v1743
      %v1777 = vunpack.c.h.b16 %v1743
      %v1778 = vunpack.c.l.b16 %v1744
      %v1779 = vunpack.c.h.b16 %v1744
      %v1780 = vunpack.c.l.b16 %v1745
      %v1781 = vunpack.c.h.b16 %v1745
      %v1782 = vunpack.c.l.b16 %v1746
      %v1783 = vunpack.c.h.b16 %v1746
      %v1784 = vunpack.c.l.b16 %v1747
      %v1785 = vunpack.c.h.b16 %v1747
      %v1786 = vunpack.c.l.b16 %v1748
      %v1787 = vunpack.c.h.b16 %v1748
      %v1788 = vunpack.c.l.b16 %v1749
      %v1789 = vunpack.c.h.b16 %v1749
      %v1790 = vunpack.c.l.b16 %v1750
      %v1791 = vunpack.c.h.b16 %v1750
      %v1792 = vunpack.c.l.b16 %v1751
      %v1793 = vunpack.c.h.b16 %v1751
      %v1794 = vunpack.c.l.b16 %v1752
      %v1795 = vunpack.c.h.b16 %v1752
      %v1796 = vunpack.c.l.b16 %v1753
      %v1797 = vunpack.c.h.b16 %v1753
      %v1798 = vunpack.c.l.b16 %v1754
      %v1799 = vunpack.c.h.b16 %v1754
      %v1800 = vunpack.c.l.b16 %v1755
      %v1801 = vunpack.c.h.b16 %v1755
      %v1802 = vunpack.c.l.b16 %v1756
      %v1803 = vunpack.c.h.b16 %v1756
      %v1804 = vunpack.c.l.b16 %v1757
      %v1805 = vunpack.c.h.b16 %v1757
      %v1806 = vpack.c.b16 %v1774, %v1774
      %v1807 = vpack.c.b16 %v1775, %v1775
      %v1808 = vpack.c.b16 %v1776, %v1776
      %v1809 = vpack.c.b16 %v1777, %v1777
      %v1810 = vpack.c.b16 %v1778, %v1778
      %v1811 = vpack.c.b16 %v1779, %v1779
      %v1812 = vpack.c.b16 %v1780, %v1780
      %v1813 = vpack.c.b16 %v1781, %v1781
      %v1814 = vpack.c.b16 %v1782, %v1782
      %v1815 = vpack.c.b16 %v1783, %v1783
      %v1816 = vpack.c.b16 %v1784, %v1784
      %v1817 = vpack.c.b16 %v1785, %v1785
      %v1818 = vpack.c.b16 %v1786, %v1786
      %v1819 = vpack.c.b16 %v1787, %v1787
      %v1820 = vpack.c.b16 %v1788, %v1788
      %v1821 = vpack.c.b16 %v1789, %v1789
      %v1822 = vpack.c.b16 %v1790, %v1790
      %v1823 = vpack.c.b16 %v1791, %v1791
      %v1824 = vpack.c.b16 %v1792, %v1792
      %v1825 = vpack.c.b16 %v1793, %v1793
      %v1826 = vpack.c.b16 %v1794, %v1794
      %v1827 = vpack.c.b16 %v1795, %v1795
      %v1828 = vpack.c.b16 %v1796, %v1796
      %v1829 = vpack.c.b16 %v1797, %v1797
      %v1830 = vpack.c.b16 %v1798, %v1798
      %v1831 = vpack.c.b16 %v1799, %v1799
      %v1832 = vpack.c.b16 %v1800, %v1800
      %v1833 = vpack.c.b16 %v1801, %v1801
      %v1834 = vpack.c.b16 %v1802, %v1802
      %v1835 = vpack.c.b16 %v1803, %v1803
      %v1836 = vpack.c.b16 %v1804, %v1804
      %v1837 = vpack.c.b16 %v1805, %v1805
      %1870 = vst [vmem:[%s273] sm:$0xf] %v1806
      %1871 = vst [vmem:[%s273 + $0x4] sm:$0xf] %v1807
      %1872 = vst [vmem:[%s273 + $0x8] sm:$0xf] %v1808
      %1873 = vst [vmem:[%s273 + $0xc] sm:$0xf] %v1809
      %1874 = vst [vmem:[%s273 + $0x10] sm:$0xf] %v1810
      %1875 = vst [vmem:[%s273 + $0x14] sm:$0xf] %v1811
      %1876 = vst [vmem:[%s273 + $0x18] sm:$0xf] %v1812
      %1877 = vst [vmem:[%s273 + $0x1c] sm:$0xf] %v1813
      %1878 = vst [vmem:[%s273 + $0x20] sm:$0xf] %v1814
      %1879 = vst [vmem:[%s273 + $0x24] sm:$0xf] %v1815
      %1880 = vst [vmem:[%s273 + $0x28] sm:$0xf] %v1816
      %1881 = vst [vmem:[%s273 + $0x2c] sm:$0xf] %v1817
      %1882 = vst [vmem:[%s273 + $0x30] sm:$0xf] %v1818
      %1883 = vst [vmem:[%s273 + $0x34] sm:$0xf] %v1819
      %1884 = vst [vmem:[%s273 + $0x38] sm:$0xf] %v1820
      %1885 = vst [vmem:[%s273 + $0x3c] sm:$0xf] %v1821
      %1886 = vst [vmem:[%s273 + $0x40] sm:$0xf] %v1822
      %1887 = vst [vmem:[%s273 + $0x44] sm:$0xf] %v1823
      %1888 = vst [vmem:[%s273 + $0x48] sm:$0xf] %v1824
      %1889 = vst [vmem:[%s273 + $0x4c] sm:$0xf] %v1825
      %1890 = vst [vmem:[%s273 + $0x50] sm:$0xf] %v1826
      %1891 = vst [vmem:[%s273 + $0x54] sm:$0xf] %v1827
      %1892 = vst [vmem:[%s273 + $0x58] sm:$0xf] %v1828
      %1893 = vst [vmem:[%s273 + $0x5c] sm:$0xf] %v1829
      %1894 = vst [vmem:[%s273 + $0x60] sm:$0xf] %v1830
      %1895 = vst [vmem:[%s273 + $0x64] sm:$0xf] %v1831
      %1896 = vst [vmem:[%s273 + $0x68] sm:$0xf] %v1832
      %1897 = vst [vmem:[%s273 + $0x6c] sm:$0xf] %v1833
      %1898 = vst [vmem:[%s273 + $0x70] sm:$0xf] %v1834
      %1899 = vst [vmem:[%s273 + $0x74] sm:$0xf] %v1835
      %1900 = vst [vmem:[%s273 + $0x78] sm:$0xf] %v1836
      %1901 = vst [vmem:[%s273 + $0x7c] sm:$0xf] %v1837
      %v1902 = vadd.f32 %v1616, %v1619
      %v1903 = vadd.f32 %v1902, %v1624
      %v1904 = vadd.f32 %v1903, %v1627
      %v1905 = vadd.f32 %v1904, %v1632
      %v1906 = vadd.f32 %v1905, %v1635
      %v1907 = vadd.f32 %v1906, %v1640
      %v1908 = vadd.f32 %v1907, %v1643
      %v1909 = vadd.f32 %v1908, %v1648
      %v1910 = vadd.f32 %v1909, %v1651
      %v1911 = vadd.f32 %v1910, %v1656
      %v1912 = vadd.f32 %v1911, %v1659
      %v1913 = vadd.f32 %v1912, %v1664
      %v1914 = vadd.f32 %v1913, %v1667
      %v1915 = vadd.f32 %v1914, %v1672
      %v1916 = vadd.f32 %v1915, %v1675
      %v1917 = vadd.f32 %v1916, %v1680
      %v1918 = vadd.f32 %v1917, %v1683
      %v1919 = vadd.f32 %v1918, %v1688
      %v1920 = vadd.f32 %v1919, %v1691
      %v1921 = vadd.f32 %v1920, %v1696
      %v1922 = vadd.f32 %v1921, %v1699
      %v1923 = vadd.f32 %v1922, %v1704
      %v1924 = vadd.f32 %v1923, %v1707
      %v1925 = vadd.f32 %v1924, %v1712
      %v1926 = vadd.f32 %v1925, %v1715
      %v1927 = vadd.f32 %v1926, %v1720
      %v1928 = vadd.f32 %v1927, %v1723
      %v1929 = vadd.f32 %v1928, %v1728
      %v1930 = vadd.f32 %v1929, %v1731
      %v1931 = vadd.f32 %v1930, %v1736
      %v1932 = vadd.f32 %v1931, %v1739
      %v1933 = vrot.slane %v1932, 4
      %v1934 = vadd.f32 %v1932, %v1933
      %v1935 = vrot.slane %v1934, 2
      %v1936 = vadd.f32 %v1934, %v1935
      %v1937 = vrot.slane %v1936, 1
      %v1938 = vadd.f32 %v1936, %v1937
      %v1939 = vmul.f32 %v1616, %v1616
      %v1940 = vmul.f32 %v1619, %v1619
      %v1941 = vmul.f32 %v1624, %v1624
      %v1942 = vmul.f32 %v1627, %v1627
      %v1943 = vmul.f32 %v1632, %v1632
      %v1944 = vmul.f32 %v1635, %v1635
      %v1945 = vmul.f32 %v1640, %v1640
      %v1946 = vmul.f32 %v1643, %v1643
      %v1947 = vmul.f32 %v1648, %v1648
      %v1948 = vmul.f32 %v1651, %v1651
      %v1949 = vmul.f32 %v1656, %v1656
      %v1950 = vmul.f32 %v1659, %v1659
      %v1951 = vmul.f32 %v1664, %v1664
      %v1952 = vmul.f32 %v1667, %v1667
      %v1953 = vmul.f32 %v1672, %v1672
      %v1954 = vmul.f32 %v1675, %v1675
      %v1955 = vmul.f32 %v1680, %v1680
      %v1956 = vmul.f32 %v1683, %v1683
      %v1957 = vmul.f32 %v1688, %v1688
      %v1958 = vmul.f32 %v1691, %v1691
      %v1959 = vmul.f32 %v1696, %v1696
      %v1960 = vmul.f32 %v1699, %v1699
      %v1961 = vmul.f32 %v1704, %v1704
      %v1962 = vmul.f32 %v1707, %v1707
      %v1963 = vmul.f32 %v1712, %v1712
      %v1964 = vmul.f32 %v1715, %v1715
      %v1965 = vmul.f32 %v1720, %v1720
      %v1966 = vmul.f32 %v1723, %v1723
      %v1967 = vmul.f32 %v1728, %v1728
      %v1968 = vmul.f32 %v1731, %v1731
      %v1969 = vmul.f32 %v1736, %v1736
      %v1970 = vmul.f32 %v1739, %v1739
      %v1971 = vadd.f32 %v1939, %v1940
      %v1972 = vadd.f32 %v1971, %v1941
      %v1973 = vadd.f32 %v1972, %v1942
      %v1974 = vadd.f32 %v1973, %v1943
      %v1975 = vadd.f32 %v1974, %v1944
      %v1976 = vadd.f32 %v1975, %v1945
      %v1977 = vadd.f32 %v1976, %v1946
      %v1978 = vadd.f32 %v1977, %v1947
      %v1979 = vadd.f32 %v1978, %v1948
      %v1980 = vadd.f32 %v1979, %v1949
      %v1981 = vadd.f32 %v1980, %v1950
      %v1982 = vadd.f32 %v1981, %v1951
      %v1983 = vadd.f32 %v1982, %v1952
      %v1984 = vadd.f32 %v1983, %v1953
      %v1985 = vadd.f32 %v1984, %v1954
      %v1986 = vadd.f32 %v1985, %v1955
      %v1987 = vadd.f32 %v1986, %v1956
      %v1988 = vadd.f32 %v1987, %v1957
      %v1989 = vadd.f32 %v1988, %v1958
      %v1990 = vadd.f32 %v1989, %v1959
      %v1991 = vadd.f32 %v1990, %v1960
      %v1992 = vadd.f32 %v1991, %v1961
      %v1993 = vadd.f32 %v1992, %v1962
      %v1994 = vadd.f32 %v1993, %v1963
      %v1995 = vadd.f32 %v1994, %v1964
      %v1996 = vadd.f32 %v1995, %v1965
      %v1997 = vadd.f32 %v1996, %v1966
      %v1998 = vadd.f32 %v1997, %v1967
      %v1999 = vadd.f32 %v1998, %v1968
      %v2000 = vadd.f32 %v1999, %v1969
      %v2001 = vadd.f32 %v2000, %v1970
      %v2002 = vrot.slane %v2001, 4
      %v2003 = vadd.f32 %v2001, %v2002
      %v2004 = vrot.slane %v2003, 2
      %v2005 = vadd.f32 %v2003, %v2004
      %v2006 = vrot.slane %v2005, 1
      %v2007 = vadd.f32 %v2005, %v2006
      %vm2008 = vcmask 1040384
      %v2009 = vsel %vm2008, %v1938, %v2007
      %2010 = vst [vmem:[%s280] sm:$0x3] %v2009
      %p2011 = scmp.lt.s32.totalorder %s21, 1
      %s2012 = scalar_select %p2011, %s21, 1
      %p2013 = scmp.lt.s32.totalorder %s22, 0
      %s2014 = scalar_select %p2013, %s22, 0
      %s2015 = smul.addr %s2012, 32
      %s2016 = sadd.s32 %s2014, %s2015
      %s2017 = smul.addr %s2016, 4
      %s2018 = scalar_lea.vmem %s4, %s2017
      %p2019 = scmp.lt.s32.totalorder %s21, 1
      %s2020 = scalar_select %p2019, %s21, 1
      %p2021 = scmp.lt.s32.totalorder %s22, 0
      %s2022 = scalar_select %p2021, %s22, 0
      %s2023 = sadd.s32 %s2022, %s2020
      %s2024 = smul.addr %s2023, 2
      %s2025 = scalar_lea.vmem %s5, %s2024
      // Predicated region
      $region41: #{residual_block.4} parent=35 // pred_check
        %p2026 = pneg %p143
      $region42: #{residual_block.4} parent=35 // pred_check_branch
        %2028 = sbr.rel (%p2026) target = $region44
      $region43: #{residual_block.4} parent=35 // pred_region
        _
      $region44: #{residual_block.4} parent=35 // pred_fallthru
        _
      // Predicated region
      $region45: #{residual_block.4} parent=35 // pred_check
        %p2029 = pneg %p171
      $region46: #{residual_block.4} parent=35 // pred_check_branch
        %2031 = sbr.rel (%p2029) target = $region48
      $region47: #{residual_block.4} parent=35 // pred_region
        _
      $region48: #{residual_block.4} parent=35 // pred_fallthru
        _
    $region36: #{residual_block.4} parent=5 // pred_fallthru
      _
    %p2032 = scmp.le.s32.totalorder 2, %s12
    // Predicated region
    $region49: #{residual_block.4} parent=5 // pred_check
      %p2033 = pneg %p2032
    $region50: #{residual_block.4} parent=5 // pred_check_branch
      %2035 = sbr.rel (%p2033) target = $region52
    $region51: #{residual_block.4} parent=5 // pred_region
      %s2036 = ssub.s32 %s12, 2
      // Predicated region
      $region53: #{residual_block.4} parent=51 // pred_check
        %p2037 = pneg %p149
      $region54: #{residual_block.4} parent=51 // pred_check_branch
        %2039 = sbr.rel (%p2037) target = $region56
      $region55: #{residual_block.4} parent=51 // pred_region
        %p2040 = scmp.lt.s32.totalorder %s23, 1
        %s2041 = scalar_select %p2040, %s23, 1
        %p2042 = scmp.lt.s32.totalorder %s24, 0
        %s2043 = scalar_select %p2042, %s24, 0
        %s2044 = smul.addr %s2041, 32
        %s2045 = sadd.s32 %s2043, %s2044
        %s2046 = smul.addr %s2045, 4
        %s2047 = scalar_lea.vmem %s4, %s2046
      $region56: #{residual_block.4} parent=51 // pred_fallthru
        _
      // Predicated region
      $region57: #{residual_block.4} parent=51 // pred_check
        %p2048 = pneg %p177
      $region58: #{residual_block.4} parent=51 // pred_check_branch
        %2050 = sbr.rel (%p2048) target = $region60
      $region59: #{residual_block.4} parent=51 // pred_region
        %p2051 = scmp.lt.s32.totalorder %s23, 1
        %s2052 = scalar_select %p2051, %s23, 1
        %p2053 = scmp.lt.s32.totalorder %s24, 0
        %s2054 = scalar_select %p2053, %s24, 0
        %s2055 = sadd.s32 %s2054, %s2052
        %s2056 = smul.addr %s2055, 2
        %s2057 = scalar_lea.vmem %s5, %s2056
      $region60: #{residual_block.4} parent=51 // pred_fallthru
        _
    $region52: #{residual_block.4} parent=5 // pred_fallthru
      _
  $region6: #{residual_block.4} parent=0 // loop_footer
    %s16 = sadd.s32 1, %s12
  $region7: #{residual_block.4} parent=0 // loop_footer_branch
    %11 = sbr.rel target = $region3
  $region8: #{residual_block.4} parent=0 // loop_exit
    _

// kernel: residual_block.3
$region0: #{residual_block.3}
  #allocation0 [shape = 'u32[]', space=smem, size = 0x4, offset = 0x4, fixed_abs, tag = 'smem constant byte address 0x4 - core index']
  #allocation1 [shape = 'u32[144,128]{1,0:T(1,128)}', space=vmem, size = 0x12000, scoped, tag = 'internal scratch']
  #allocation2 [shape = 'bf16[256,36]{1,0:T(16,128)(2,1)}', space=vmem, size = 0x10000, scoped, tag = 'scratch operand']
  %s0 = inlined_call_operand.vmem [shape: bf16[2,18,18,4], index: 0, kind: input, shape index: {}]
  %s1 = inlined_call_operand.vmem [shape: bf16[36,128], index: 1, kind: input, shape index: {}]
  %s2 = inlined_call_operand.vmem [shape: bf16[2,256,128], index: 2, kind: output, shape index: {0}]
  %s3 = inlined_call_operand.vmem [shape: f32[2,2,128], index: 3, kind: output, shape index: {1}]
  %4 = xla_tuple %s2, %s3
  %s5 = sld [smem:[#allocation0]]
  $region53: #{residual_block.3} parent=0
    _
  %s7 = ssub.s32 1, %s5
  %s8 = scalar_select 0, %s7, %s5
  loop: start=0, step=1, limit=4
  $region2: #{residual_block.3} parent=0 // loop_pre_header
    _
  $region3: #{residual_block.3} parent=0 // loop_header
    %s10 = sphi 0, %s14
    %p11 = scmp.ge.s32.totalorder %s10, 4
    %s17 = sphi 0, %s29
    %s18 = sphi 0, %s25
    %s19 = sphi 0, %s17
    %s20 = sphi 0, %s18
    %s21 = sphi 0, %s19
    %s22 = sphi 0, %s20
    %s32 = sphi 0, %s34
    %s35 = sphi 0, %s32
    %s36 = sphi 0, %s35
    %s52 = sphi 0, %s36
    %s58 = sphi 0, %s60
    %s61 = sphi 0, %s58
    %s62 = sphi 0, %s61
    %s78 = sphi 0, %s62
    %s86 = sphi 0, %s88
    %s89 = sphi 0, %s86
    %s90 = sphi 0, %s89
    %s106 = sphi 0, %s90
    %s114 = sphi 0, %s116
    %s117 = sphi 0, %s114
    %s118 = sphi 0, %s117
    %s134 = sphi 0, %s118
  $region4: #{residual_block.3} parent=0 // loop_header_branch
    %13 = sbr.rel (%p11) target = $region8
  $region5: #{residual_block.3} parent=0 // loop_body
    %s15 = ssub.s32 %s10, 1
    %s16 = ssub.s32 %s10, 2
    %s23 = sadd.s32 1, %s18
    %p24 = scmp.ge.s32.totalorder %s23, 1
    %s25 = scalar_select %p24, 0, %s23
    %s26 = sadd.s32 1, %s17
    %s27 = scalar_select %p24, %s26, %s17
    %p28 = scmp.ge.s32.totalorder %s27, 2
    %s29 = scalar_select %p28, 0, %s27
    %s30 = ssub.s32 %s17, %s29
    %p31 = scmp.eq.s32.totalorder %s30, 0
    %s33 = sadd.s32 %s32, 1
    %s34 = scalar_select %p31, %s32, %s33
    %p37 = pneg %p31
    %p38 = scmp.eq.s32.totalorder %s10, 1
    %p39 = por %p37, %p38
    %p40 = scmp.ne.s32.totalorder %s32, %s35
    %p41 = scmp.eq.s32.totalorder %s10, 0
    %p42 = por %p40, %p41
    %p43 = scmp.ne.s32.totalorder %s32, %s35
    %p44 = scmp.eq.s32.totalorder %s15, 1
    %p45 = por %p43, %p44
    %p46 = scmp.ne.s32.totalorder %s35, %s36
    %p47 = scmp.eq.s32.totalorder %s15, 0
    %p48 = por %p46, %p47
    %p49 = scmp.ne.s32.totalorder %s35, %s36
    %p50 = scmp.eq.s32.totalorder %s16, 1
    %p51 = por %p49, %p50
    %p53 = scmp.ne.s32.totalorder %s36, %s52
    %p54 = scmp.eq.s32.totalorder %s16, 0
    %p55 = por %p53, %p54
    %s56 = ssub.s32 %s18, %s25
    %p57 = scmp.eq.s32.totalorder %s56, 0
    %s59 = sadd.s32 %s58, 1
    %s60 = scalar_select %p57, %s58, %s59
    %p63 = pneg %p57
    %p64 = scmp.eq.s32.totalorder %s10, 1
    %p65 = por %p63, %p64
    %p66 = scmp.ne.s32.totalorder %s58, %s61
    %p67 = scmp.eq.s32.totalorder %s10, 0
    %p68 = por %p66, %p67
    %p69 = scmp.ne.s32.totalorder %s58, %s61
    %p70 = scmp.eq.s32.totalorder %s15, 1
    %p71 = por %p69, %p70
    %p72 = scmp.ne.s32.totalorder %s61, %s62
    %p73 = scmp.eq.s32.totalorder %s15, 0
    %p74 = por %p72, %p73
    %p75 = scmp.ne.s32.totalorder %s61, %s62
    %p76 = scmp.eq.s32.totalorder %s16, 1
    %p77 = por %p75, %p76
    %p79 = scmp.ne.s32.totalorder %s62, %s78
    %p80 = scmp.eq.s32.totalorder %s16, 0
    %p81 = por %p79, %p80
    %s82 = ssub.s32 %s17, %s29
    %s83 = ssub.s32 %s18, %s25
    %s84 = sor.u32 %s82, %s83
    %p85 = scmp.eq.s32.totalorder %s84, 0
    %s87 = sadd.s32 %s86, 1
    %s88 = scalar_select %p85, %s86, %s87
    %p91 = pneg %p85
    %p92 = scmp.eq.s32.totalorder %s10, 1
    %p93 = por %p91, %p92
    %p94 = scmp.ne.s32.totalorder %s86, %s89
    %p95 = scmp.eq.s32.totalorder %s10, 0
    %p96 = por %p94, %p95
    %p97 = scmp.ne.s32.totalorder %s86, %s89
    %p98 = scmp.eq.s32.totalorder %s15, 1
    %p99 = por %p97, %p98
    %p100 = scmp.ne.s32.totalorder %s89, %s90
    %p101 = scmp.eq.s32.totalorder %s15, 0
    %p102 = por %p100, %p101
    %p103 = scmp.ne.s32.totalorder %s89, %s90
    %p104 = scmp.eq.s32.totalorder %s16, 1
    %p105 = por %p103, %p104
    %p107 = scmp.ne.s32.totalorder %s90, %s106
    %p108 = scmp.eq.s32.totalorder %s16, 0
    %p109 = por %p107, %p108
    %s110 = ssub.s32 %s17, %s29
    %s111 = ssub.s32 %s18, %s25
    %s112 = sor.u32 %s110, %s111
    %p113 = scmp.eq.s32.totalorder %s112, 0
    %s115 = sadd.s32 %s114, 1
    %s116 = scalar_select %p113, %s114, %s115
    %p119 = pneg %p113
    %p120 = scmp.eq.s32.totalorder %s10, 1
    %p121 = por %p119, %p120
    %p122 = scmp.ne.s32.totalorder %s114, %s117
    %p123 = scmp.eq.s32.totalorder %s10, 0
    %p124 = por %p122, %p123
    %p125 = scmp.ne.s32.totalorder %s114, %s117
    %p126 = scmp.eq.s32.totalorder %s15, 1
    %p127 = por %p125, %p126
    %p128 = scmp.ne.s32.totalorder %s117, %s118
    %p129 = scmp.eq.s32.totalorder %s15, 0
    %p130 = por %p128, %p129
    %p131 = scmp.ne.s32.totalorder %s117, %s118
    %p132 = scmp.eq.s32.totalorder %s16, 1
    %p133 = por %p131, %p132
    %p135 = scmp.ne.s32.totalorder %s118, %s134
    %p136 = scmp.eq.s32.totalorder %s16, 0
    %p137 = por %p135, %p136
    %p138 = scmp.le.s32.totalorder 1, %s10
    %p139 = scmp.lt.s32.totalorder %s10, 3
    %p140 = pnand %p138, %p139
    %p141 = pneg %p140
    // Predicated region
    $region9: #{residual_block.3} parent=5 // pred_check
      _
    $region10: #{residual_block.3} parent=5 // pred_check_branch
      %143 = sbr.rel (%p140) target = $region12
    $region11: #{residual_block.3} parent=5 // pred_region
      %s144 = ssub.s32 %s10, 1
      // Predicated region
      $region13: #{residual_block.3} parent=11 // pred_check
        %p145 = pneg %p74
      $region14: #{residual_block.3} parent=11 // pred_check_branch
        %147 = sbr.rel (%p145) target = $region16
      $region15: #{residual_block.3} parent=11 // pred_region
        %p148 = scmp.lt.s32.totalorder %s20, 0
        %s149 = scalar_select %p148, %s20, 0
        %s150 = smul.addr %s149, 4
        %s151 = scalar_lea.vmem %s1, %s150
      $region16: #{residual_block.3} parent=11 // pred_fallthru
        _
    $region12: #{residual_block.3} parent=5 // pred_fallthru
      _
    %p152 = scmp.lt.s32.totalorder %s10, 2
    // Predicated region
    $region17: #{residual_block.3} parent=5 // pred_check
      %p153 = pneg %p152
    $region18: #{residual_block.3} parent=5 // pred_check_branch
      %155 = sbr.rel (%p153) target = $region20
    $region19: #{residual_block.3} parent=5 // pred_region
      // Predicated region
      $region21: #{residual_block.3} parent=19 // pred_check
        %p156 = pneg %p42
      $region22: #{residual_block.3} parent=19 // pred_check_branch
        %158 = sbr.rel (%p156) target = $region24
      $region23: #{residual_block.3} parent=19 // pred_region
        %p159 = scmp.lt.s32.totalorder %s17, 1
        %s160 = scalar_select %p159, %s17, 1
        %s161 = smul.addr %s160, 54
        %s162 = smul.addr %s161, 4
        %s163 = scalar_lea.vmem %s0, %s162
      $region24: #{residual_block.3} parent=19 // pred_fallthru
        _
    $region20: #{residual_block.3} parent=5 // pred_fallthru
      _
    %p164 = scmp.le.s32.totalorder 1, %s10
    %p165 = scmp.lt.s32.totalorder %s10, 3
    %p166 = pnand %p164, %p165
    %p167 = pneg %p166
    // Predicated region
    $region25: #{residual_block.3} parent=5 // pred_check
      _
    $region26: #{residual_block.3} parent=5 // pred_check_branch
      %169 = sbr.rel (%p166) target = $region28
    $region27: #{residual_block.3} parent=5 // pred_region
      %s170 = ssub.s32 %s10, 1
      %p171 = scmp.lt.s32.totalorder %s19, 1
      %s172 = scalar_select %p171, %s19, 1
      %s173 = smul.addr %s172, 54
      %s174 = smul.addr %s173, 4
      %s175 = scalar_lea.vmem %s0, %s174
      %p176 = pneg %p48
      %p177 = pneg %p45
      %p178 = scmp.lt.s32.totalorder %s20, 0
      %s179 = scalar_select %p178, %s20, 0
      %s180 = smul.addr %s179, 4
      %s181 = scalar_lea.vmem %s1, %s180
      %p182 = pneg %p74
      %p183 = pneg %p71
      %p184 = pneg %p102
      %p185 = pneg %p99
      %p186 = scmp.lt.s32.totalorder %s19, 1
      %s187 = scalar_select %p186, %s19, 1
      %p188 = scmp.lt.s32.totalorder %s20, 0
      %s189 = scalar_select %p188, %s20, 0
      %s190 = smul.addr %s187, 32
      %s191 = sadd.s32 %s189, %s190
      %s192 = smul.addr %s191, 4
      %s193 = scalar_lea.vmem %s2, %s192
      %p194 = pneg %p130
      %p195 = pneg %p127
      %p196 = scmp.lt.s32.totalorder %s19, 1
      %s197 = scalar_select %p196, %s19, 1
      %p198 = scmp.lt.s32.totalorder %s20, 0
      %s199 = scalar_select %p198, %s20, 0
      %s200 = sadd.s32 %s199, %s197
      %s201 = smul.addr %s200, 2
      %s202 = scalar_lea.vmem %s3, %s201
      %p203 = scmp.lt.s32.totalorder %s19, 1
      %s204 = scalar_select %p203, %s19, 1
      %s205 = smul.addr %s204, 54
      %s206 = smul.addr %s205, 4
      %s207 = scalar_lea.vmem %s0, %s206
      %p208 = scmp.lt.s32.totalorder %s20, 0
      %s209 = scalar_select %p208, %s20, 0
      %s210 = smul.addr %s209, 4
      %s211 = scalar_lea.vmem %s1, %s210
      %p212 = scmp.lt.s32.totalorder %s19, 1
      %s213 = scalar_select %p212, %s19, 1
      %p214 = scmp.lt.s32.totalorder %s20, 0
      %s215 = scalar_select %p214, %s20, 0
      %s216 = smul.addr %s213, 32
      %s217 = sadd.s32 %s215, %s216
      %s218 = smul.addr %s217, 4
      %s219 = scalar_lea.vmem %s2, %s218
      %p220 = scmp.lt.s32.totalorder %s19, 1
      %s221 = scalar_select %p220, %s19, 1
      %p222 = scmp.lt.s32.totalorder %s20, 0
      %s223 = scalar_select %p222, %s20, 0
      %s224 = sadd.s32 %s223, %s221
      %s225 = smul.addr %s224, 2
      %s226 = scalar_lea.vmem %s3, %s225
      %p228 = scmp.eq.s32.totalorder %s20, 0
      // Predicated region
      $region29: #{residual_block.3} parent=27 // pred_check
        %p229 = pneg %p228
      $region30: #{residual_block.3} parent=27 // pred_check_branch
        %231 = sbr.rel (%p229) target = $region32
      $region31: #{residual_block.3} parent=27 // pred_region
        %v232 = vld [vmem:[%s207] sm:$0xf]
        %v233 = vld [vmem:[%s207 + $0x4] sm:$0xf]
        %v234 = vld [vmem:[%s207 + $0xc] sm:$0xf]
        %v235 = vld [vmem:[%s207 + $0x10] sm:$0xf]
        %v236 = vld [vmem:[%s207 + $0x18] sm:$0xf]
        %v237 = vld [vmem:[%s207 + $0x1c] sm:$0xf]
        %v238 = vld [vmem:[%s207 + $0x24] sm:$0xf]
        %v239 = vld [vmem:[%s207 + $0x28] sm:$0xf]
        %v240 = vld [vmem:[%s207 + $0x30] sm:$0xf]
        %v241 = vld [vmem:[%s207 + $0x34] sm:$0xf]
        %v242 = vld [vmem:[%s207 + $0x3c] sm:$0xf]
        %v243 = vld [vmem:[%s207 + $0x40] sm:$0xf]
        %v244 = vld [vmem:[%s207 + $0x48] sm:$0xf]
        %v245 = vld [vmem:[%s207 + $0x4c] sm:$0xf]
        %v246 = vld [vmem:[%s207 + $0x54] sm:$0xf]
        %v247 = vld [vmem:[%s207 + $0x58] sm:$0xf]
        %v248 = vld [vmem:[%s207 + $0x60] sm:$0xf]
        %v249 = vld [vmem:[%s207 + $0x64] sm:$0xf]
        %v250 = vld [vmem:[%s207 + $0x6c] sm:$0xf]
        %v251 = vld [vmem:[%s207 + $0x70] sm:$0xf]
        %v252 = vld [vmem:[%s207 + $0x78] sm:$0xf]
        %v253 = vld [vmem:[%s207 + $0x7c] sm:$0xf]
        %v254 = vld [vmem:[%s207 + $0x84] sm:$0xf]
        %v255 = vld [vmem:[%s207 + $0x88] sm:$0xf]
        %v256 = vld [vmem:[%s207 + $0x90] sm:$0xf]
        %v257 = vld [vmem:[%s207 + $0x94] sm:$0xf]
        %v258 = vld [vmem:[%s207 + $0x9c] sm:$0xf]
        %v259 = vld [vmem:[%s207 + $0xa0] sm:$0xf]
        %v260 = vld [vmem:[%s207 + $0xa8] sm:$0xf]
        %v261 = vld [vmem:[%s207 + $0xac] sm:$0xf]
        %v262 = vld [vmem:[%s207 + $0xb4] sm:$0xf]
        %v263 = vld [vmem:[%s207 + $0xb8] sm:$0xf]
        %v264 = vld [vmem:[%s207 + $0x8] sm:$0x1]
        %v265 = vld [vmem:[%s207 + $0x14] sm:$0x1]
        %v266 = vld [vmem:[%s207 + $0x20] sm:$0x1]
        %v267 = vld [vmem:[%s207 + $0x2c] sm:$0x1]
        %v268 = vld [vmem:[%s207 + $0x38] sm:$0x1]
        %v269 = vld [vmem:[%s207 + $0x44] sm:$0x1]
        %v270 = vld [vmem:[%s207 + $0x50] sm:$0x1]
        %v271 = vld [vmem:[%s207 + $0x5c] sm:$0x1]
        %v272 = vld [vmem:[%s207 + $0x68] sm:$0x1]
        %v273 = vld [vmem:[%s207 + $0x74] sm:$0x1]
        %v274 = vld [vmem:[%s207 + $0x80] sm:$0x1]
        %v275 = vld [vmem:[%s207 + $0x8c] sm:$0x1]
        %v276 = vld [vmem:[%s207 + $0x98] sm:$0x1]
        %v277 = vld [vmem:[%s207 + $0xa4] sm:$0x1]
        %v278 = vld [vmem:[%s207 + $0xb0] sm:$0x1]
        %v279 = vld [vmem:[%s207 + $0xbc] sm:$0x1]
        %vm280 = vsmask.f32 3328
        %vm281 = vsmask.f32 7440
        %vm282 = vmor %vm280, %vm281
        %v284 = vshrl.u32 %v232, 16
        %v286 = vrot.slane %v284, 4
        %v287 = vshll.u32 %v232, 16
        %v289 = vrot.slane %v287, 5
        %v290 = vor.u32 %v286, %v289
        %v291 = vrot.slane %v290, 4
        %v293 = vshll.u32 %v233, 16
        %v295 = vrot.slane %v293, 5
        %v296 = vsel %vm282, %v291, %v295
        %v297 = vshrl.u32 %v233, 16
        %v299 = vrot.slane %v297, 4
        %v300 = vor.u32 %v299, %v295
        %v301 = vrot.slane %v300, 4
        %v303 = vshll.u32 %v264, 16
        %v305 = vrot.slane %v303, 5
        %v306 = vsel %vm282, %v301, %v305
        %v308 = vshrl.u32 %v234, 16
        %v310 = vrot.slane %v308, 4
        %v311 = vshll.u32 %v234, 16
        %v313 = vrot.slane %v311, 5
        %v314 = vor.u32 %v310, %v313
        %v315 = vrot.slane %v314, 4
        %v317 = vshll.u32 %v235, 16
        %v319 = vrot.slane %v317, 5
        %v320 = vsel %vm282, %v315, %v319
        %v321 = vshrl.u32 %v235, 16
        %v323 = vrot.slane %v321, 4
        %v324 = vor.u32 %v323, %v319
        %v325 = vrot.slane %v324, 4
        %v327 = vshll.u32 %v265, 16
        %v329 = vrot.slane %v327, 5
        %v330 = vsel %vm282, %v325, %v329
        %v332 = vshrl.u32 %v236, 16
        %v334 = vrot.slane %v332, 4
        %v335 = vshll.u32 %v236, 16
        %v337 = vrot.slane %v335, 5
        %v338 = vor.u32 %v334, %v337
        %v339 = vrot.slane %v338, 4
        %v341 = vshll.u32 %v237, 16
        %v343 = vrot.slane %v341, 5
        %v344 = vsel %vm282, %v339, %v343
        %v345 = vshrl.u32 %v237, 16
        %v347 = vrot.slane %v345, 4
        %v348 = vor.u32 %v347, %v343
        %v349 = vrot.slane %v348, 4
        %v351 = vshll.u32 %v266, 16
        %v353 = vrot.slane %v351, 5
        %v354 = vsel %vm282, %v349, %v353
        %v356 = vshrl.u32 %v238, 16
        %v358 = vrot.slane %v356, 4
        %v359 = vshll.u32 %v238, 16
        %v361 = vrot.slane %v359, 5
        %v362 = vor.u32 %v358, %v361
        %v363 = vrot.slane %v362, 4
        %v365 = vshll.u32 %v239, 16
        %v367 = vrot.slane %v365, 5
        %v368 = vsel %vm282, %v363, %v367
        %v369 = vshrl.u32 %v239, 16
        %v371 = vrot.slane %v369, 4
        %v372 = vor.u32 %v371, %v367
        %v373 = vrot.slane %v372, 4
        %v375 = vshll.u32 %v267, 16
        %v377 = vrot.slane %v375, 5
        %v378 = vsel %vm282, %v373, %v377
        %v380 = vshrl.u32 %v240, 16
        %v382 = vrot.slane %v380, 4
        %v383 = vshll.u32 %v240, 16
        %v385 = vrot.slane %v383, 5
        %v386 = vor.u32 %v382, %v385
        %v387 = vrot.slane %v386, 4
        %v389 = vshll.u32 %v241, 16
        %v391 = vrot.slane %v389, 5
        %v392 = vsel %vm282, %v387, %v391
        %v393 = vshrl.u32 %v241, 16
        %v395 = vrot.slane %v393, 4
        %v396 = vor.u32 %v395, %v391
        %v397 = vrot.slane %v396, 4
        %v399 = vshll.u32 %v268, 16
        %v401 = vrot.slane %v399, 5
        %v402 = vsel %vm282, %v397, %v401
        %v404 = vshrl.u32 %v242, 16
        %v406 = vrot.slane %v404, 4
        %v407 = vshll.u32 %v242, 16
        %v409 = vrot.slane %v407, 5
        %v410 = vor.u32 %v406, %v409
        %v411 = vrot.slane %v410, 4
        %v413 = vshll.u32 %v243, 16
        %v415 = vrot.slane %v413, 5
        %v416 = vsel %vm282, %v411, %v415
        %v417 = vshrl.u32 %v243, 16
        %v419 = vrot.slane %v417, 4
        %v420 = vor.u32 %v419, %v415
        %v421 = vrot.slane %v420, 4
        %v423 = vshll.u32 %v269, 16
        %v425 = vrot.slane %v423, 5
        %v426 = vsel %vm282, %v421, %v425
        %v428 = vshrl.u32 %v244, 16
        %v430 = vrot.slane %v428, 4
        %v431 = vshll.u32 %v244, 16
        %v433 = vrot.slane %v431, 5
        %v434 = vor.u32 %v430, %v433
        %v435 = vrot.slane %v434, 4
        %v437 = vshll.u32 %v245, 16
        %v439 = vrot.slane %v437, 5
        %v440 = vsel %vm282, %v435, %v439
        %v441 = vshrl.u32 %v245, 16
        %v443 = vrot.slane %v441, 4
        %v444 = vor.u32 %v443, %v439
        %v445 = vrot.slane %v444, 4
        %v447 = vshll.u32 %v270, 16
        %v449 = vrot.slane %v447, 5
        %v450 = vsel %vm282, %v445, %v449
        %v452 = vshrl.u32 %v246, 16
        %v454 = vrot.slane %v452, 4
        %v455 = vshll.u32 %v246, 16
        %v457 = vrot.slane %v455, 5
        %v458 = vor.u32 %v454, %v457
        %v459 = vrot.slane %v458, 4
        %v461 = vshll.u32 %v247, 16
        %v463 = vrot.slane %v461, 5
        %v464 = vsel %vm282, %v459, %v463
        %v465 = vshrl.u32 %v247, 16
        %v467 = vrot.slane %v465, 4
        %v468 = vor.u32 %v467, %v463
        %v469 = vrot.slane %v468, 4
        %v471 = vshll.u32 %v271, 16
        %v473 = vrot.slane %v471, 5
        %v474 = vsel %vm282, %v469, %v473
        %v476 = vshrl.u32 %v248, 16
        %v478 = vrot.slane %v476, 4
        %v479 = vshll.u32 %v248, 16
        %v481 = vrot.slane %v479, 5
        %v482 = vor.u32 %v478, %v481
        %v483 = vrot.slane %v482, 4
        %v485 = vshll.u32 %v249, 16
        %v487 = vrot.slane %v485, 5
        %v488 = vsel %vm282, %v483, %v487
        %v489 = vshrl.u32 %v249, 16
        %v491 = vrot.slane %v489, 4
        %v492 = vor.u32 %v491, %v487
        %v493 = vrot.slane %v492, 4
        %v495 = vshll.u32 %v272, 16
        %v497 = vrot.slane %v495, 5
        %v498 = vsel %vm282, %v493, %v497
        %v500 = vshrl.u32 %v250, 16
        %v502 = vrot.slane %v500, 4
        %v503 = vshll.u32 %v250, 16
        %v505 = vrot.slane %v503, 5
        %v506 = vor.u32 %v502, %v505
        %v507 = vrot.slane %v506, 4
        %v509 = vshll.u32 %v251, 16
        %v511 = vrot.slane %v509, 5
        %v512 = vsel %vm282, %v507, %v511
        %v513 = vshrl.u32 %v251, 16
        %v515 = vrot.slane %v513, 4
        %v516 = vor.u32 %v515, %v511
        %v517 = vrot.slane %v516, 4
        %v519 = vshll.u32 %v273, 16
        %v521 = vrot.slane %v519, 5
        %v522 = vsel %vm282, %v517, %v521
        %v524 = vshrl.u32 %v252, 16
        %v526 = vrot.slane %v524, 4
        %v527 = vshll.u32 %v252, 16
        %v529 = vrot.slane %v527, 5
        %v530 = vor.u32 %v526, %v529
        %v531 = vrot.slane %v530, 4
        %v533 = vshll.u32 %v253, 16
        %v535 = vrot.slane %v533, 5
        %v536 = vsel %vm282, %v531, %v535
        %v537 = vshrl.u32 %v253, 16
        %v539 = vrot.slane %v537, 4
        %v540 = vor.u32 %v539, %v535
        %v541 = vrot.slane %v540, 4
        %v543 = vshll.u32 %v274, 16
        %v545 = vrot.slane %v543, 5
        %v546 = vsel %vm282, %v541, %v545
        %v548 = vshrl.u32 %v254, 16
        %v550 = vrot.slane %v548, 4
        %v551 = vshll.u32 %v254, 16
        %v553 = vrot.slane %v551, 5
        %v554 = vor.u32 %v550, %v553
        %v555 = vrot.slane %v554, 4
        %v557 = vshll.u32 %v255, 16
        %v559 = vrot.slane %v557, 5
        %v560 = vsel %vm282, %v555, %v559
        %v561 = vshrl.u32 %v255, 16
        %v563 = vrot.slane %v561, 4
        %v564 = vor.u32 %v563, %v559
        %v565 = vrot.slane %v564, 4
        %v567 = vshll.u32 %v275, 16
        %v569 = vrot.slane %v567, 5
        %v570 = vsel %vm282, %v565, %v569
        %v572 = vshrl.u32 %v256, 16
        %v574 = vrot.slane %v572, 4
        %v575 = vshll.u32 %v256, 16
        %v577 = vrot.slane %v575, 5
        %v578 = vor.u32 %v574, %v577
        %v579 = vrot.slane %v578, 4
        %v581 = vshll.u32 %v257, 16
        %v583 = vrot.slane %v581, 5
        %v584 = vsel %vm282, %v579, %v583
        %v585 = vshrl.u32 %v257, 16
        %v587 = vrot.slane %v585, 4
        %v588 = vor.u32 %v587, %v583
        %v589 = vrot.slane %v588, 4
        %v591 = vshll.u32 %v276, 16
        %v593 = vrot.slane %v591, 5
        %v594 = vsel %vm282, %v589, %v593
        %v596 = vshrl.u32 %v258, 16
        %v598 = vrot.slane %v596, 4
        %v599 = vshll.u32 %v258, 16
        %v601 = vrot.slane %v599, 5
        %v602 = vor.u32 %v598, %v601
        %v603 = vrot.slane %v602, 4
        %v605 = vshll.u32 %v259, 16
        %v607 = vrot.slane %v605, 5
        %v608 = vsel %vm282, %v603, %v607
        %v609 = vshrl.u32 %v259, 16
        %v611 = vrot.slane %v609, 4
        %v612 = vor.u32 %v611, %v607
        %v613 = vrot.slane %v612, 4
        %v615 = vshll.u32 %v277, 16
        %v617 = vrot.slane %v615, 5
        %v618 = vsel %vm282, %v613, %v617
        %v620 = vshrl.u32 %v260, 16
        %v622 = vrot.slane %v620, 4
        %v623 = vshll.u32 %v260, 16
        %v625 = vrot.slane %v623, 5
        %v626 = vor.u32 %v622, %v625
        %v627 = vrot.slane %v626, 4
        %v629 = vshll.u32 %v261, 16
        %v631 = vrot.slane %v629, 5
        %v632 = vsel %vm282, %v627, %v631
        %v633 = vshrl.u32 %v261, 16
        %v635 = vrot.slane %v633, 4
        %v636 = vor.u32 %v635, %v631
        %v637 = vrot.slane %v636, 4
        %v639 = vshll.u32 %v278, 16
        %v641 = vrot.slane %v639, 5
        %v642 = vsel %vm282, %v637, %v641
        %v644 = vshrl.u32 %v262, 16
        %v646 = vrot.slane %v644, 4
        %v647 = vshll.u32 %v262, 16
        %v649 = vrot.slane %v647, 5
        %v650 = vor.u32 %v646, %v649
        %v651 = vrot.slane %v650, 4
        %v653 = vshll.u32 %v263, 16
        %v655 = vrot.slane %v653, 5
        %v656 = vsel %vm282, %v651, %v655
        %v657 = vshrl.u32 %v263, 16
        %v659 = vrot.slane %v657, 4
        %v660 = vor.u32 %v659, %v655
        %v661 = vrot.slane %v660, 4
        %v663 = vshll.u32 %v279, 16
        %v665 = vrot.slane %v663, 5
        %v666 = vsel %vm282, %v661, %v665
        %v667 = vld [vmem:[%s207] sm:$0xe]
        %v668 = vld [vmem:[%s207 + $0xc] sm:$0xe]
        %v669 = vld [vmem:[%s207 + $0x18] sm:$0xe]
        %v670 = vld [vmem:[%s207 + $0x24] sm:$0xe]
        %v671 = vld [vmem:[%s207 + $0x30] sm:$0xe]
        %v672 = vld [vmem:[%s207 + $0x3c] sm:$0xe]
        %v673 = vld [vmem:[%s207 + $0x48] sm:$0xe]
        %v674 = vld [vmem:[%s207 + $0x54] sm:$0xe]
        %v675 = vld [vmem:[%s207 + $0x60] sm:$0xe]
        %v676 = vld [vmem:[%s207 + $0x6c] sm:$0xe]
        %v677 = vld [vmem:[%s207 + $0x78] sm:$0xe]
        %v678 = vld [vmem:[%s207 + $0x84] sm:$0xe]
        %v679 = vld [vmem:[%s207 + $0x90] sm:$0xe]
        %v680 = vld [vmem:[%s207 + $0x9c] sm:$0xe]
        %v681 = vld [vmem:[%s207 + $0xa8] sm:$0xe]
        %v682 = vld [vmem:[%s207 + $0xb4] sm:$0xe]
        %vm731 = vcmask 1042432
        %vm732 = vcmask 1046532
        %vm733 = vmor %vm731, %vm732
        %v734 = vrot.slane %v667, 5
        %v735 = vrot.slane %v734, 4
        %v736 = vrot.slane %v233, 5
        %v737 = vsel %vm733, %v735, %v736
        %v738 = vrot.slane %v736, 4
        %v739 = vrot.slane %v264, 5
        %v740 = vsel %vm733, %v738, %v739
        %v741 = vrot.slane %v668, 5
        %v742 = vrot.slane %v741, 4
        %v743 = vrot.slane %v235, 5
        %v744 = vsel %vm733, %v742, %v743
        %v745 = vrot.slane %v743, 4
        %v746 = vrot.slane %v265, 5
        %v747 = vsel %vm733, %v745, %v746
        %v748 = vrot.slane %v669, 5
        %v749 = vrot.slane %v748, 4
        %v750 = vrot.slane %v237, 5
        %v751 = vsel %vm733, %v749, %v750
        %v752 = vrot.slane %v750, 4
        %v753 = vrot.slane %v266, 5
        %v754 = vsel %vm733, %v752, %v753
        %v755 = vrot.slane %v670, 5
        %v756 = vrot.slane %v755, 4
        %v757 = vrot.slane %v239, 5
        %v758 = vsel %vm733, %v756, %v757
        %v759 = vrot.slane %v757, 4
        %v760 = vrot.slane %v267, 5
        %v761 = vsel %vm733, %v759, %v760
        %v762 = vrot.slane %v671, 5
        %v763 = vrot.slane %v762, 4
        %v764 = vrot.slane %v241, 5
        %v765 = vsel %vm733, %v763, %v764
        %v766 = vrot.slane %v764, 4
        %v767 = vrot.slane %v268, 5
        %v768 = vsel %vm733, %v766, %v767
        %v769 = vrot.slane %v672, 5
        %v770 = vrot.slane %v769, 4
        %v771 = vrot.slane %v243, 5
        %v772 = vsel %vm733, %v770, %v771
        %v773 = vrot.slane %v771, 4
        %v774 = vrot.slane %v269, 5
        %v775 = vsel %vm733, %v773, %v774
        %v776 = vrot.slane %v673, 5
        %v777 = vrot.slane %v776, 4
        %v778 = vrot.slane %v245, 5
        %v779 = vsel %vm733, %v777, %v778
        %v780 = vrot.slane %v778, 4
        %v781 = vrot.slane %v270, 5
        %v782 = vsel %vm733, %v780, %v781
        %v783 = vrot.slane %v674, 5
        %v784 = vrot.slane %v783, 4
        %v785 = vrot.slane %v247, 5
        %v786 = vsel %vm733, %v784, %v785
        %v787 = vrot.slane %v785, 4
        %v788 = vrot.slane %v271, 5
        %v789 = vsel %vm733, %v787, %v788
        %v790 = vrot.slane %v675, 5
        %v791 = vrot.slane %v790, 4
        %v792 = vrot.slane %v249, 5
        %v793 = vsel %vm733, %v791, %v792
        %v794 = vrot.slane %v792, 4
        %v795 = vrot.slane %v272, 5
        %v796 = vsel %vm733, %v794, %v795
        %v797 = vrot.slane %v676, 5
        %v798 = vrot.slane %v797, 4
        %v799 = vrot.slane %v251, 5
        %v800 = vsel %vm733, %v798, %v799
        %v801 = vrot.slane %v799, 4
        %v802 = vrot.slane %v273, 5
        %v803 = vsel %vm733, %v801, %v802
        %v804 = vrot.slane %v677, 5
        %v805 = vrot.slane %v804, 4
        %v806 = vrot.slane %v253, 5
        %v807 = vsel %vm733, %v805, %v806
        %v808 = vrot.slane %v806, 4
        %v809 = vrot.slane %v274, 5
        %v810 = vsel %vm733, %v808, %v809
        %v811 = vrot.slane %v678, 5
        %v812 = vrot.slane %v811, 4
        %v813 = vrot.slane %v255, 5
        %v814 = vsel %vm733, %v812, %v813
        %v815 = vrot.slane %v813, 4
        %v816 = vrot.slane %v275, 5
        %v817 = vsel %vm733, %v815, %v816
        %v818 = vrot.slane %v679, 5
        %v819 = vrot.slane %v818, 4
        %v820 = vrot.slane %v257, 5
        %v821 = vsel %vm733, %v819, %v820
        %v822 = vrot.slane %v820, 4
        %v823 = vrot.slane %v276, 5
        %v824 = vsel %vm733, %v822, %v823
        %v825 = vrot.slane %v680, 5
        %v826 = vrot.slane %v825, 4
        %v827 = vrot.slane %v259, 5
        %v828 = vsel %vm733, %v826, %v827
        %v829 = vrot.slane %v827, 4
        %v830 = vrot.slane %v277, 5
        %v831 = vsel %vm733, %v829, %v830
        %v832 = vrot.slane %v681, 5
        %v833 = vrot.slane %v832, 4
        %v834 = vrot.slane %v261, 5
        %v835 = vsel %vm733, %v833, %v834
        %v836 = vrot.slane %v834, 4
        %v837 = vrot.slane %v278, 5
        %v838 = vsel %vm733, %v836, %v837
        %v839 = vrot.slane %v682, 5
        %v840 = vrot.slane %v839, 4
        %v841 = vrot.slane %v263, 5
        %v842 = vsel %vm733, %v840, %v841
        %v843 = vrot.slane %v841, 4
        %v844 = vrot.slane %v279, 5
        %v845 = vsel %vm733, %v843, %v844
        %s846 = scalar_lea.vmem %s207, 12
        %v847 = vld [vmem:[%s846] sm:$0xf]
        %v848 = vld [vmem:[%s846 + $0x4] sm:$0xf]
        %v849 = vld [vmem:[%s846 + $0xc] sm:$0xf]
        %v850 = vld [vmem:[%s846 + $0x10] sm:$0xf]
        %v851 = vld [vmem:[%s846 + $0x18] sm:$0xf]
        %v852 = vld [vmem:[%s846 + $0x1c] sm:$0xf]
        %v853 = vld [vmem:[%s846 + $0x24] sm:$0xf]
        %v854 = vld [vmem:[%s846 + $0x28] sm:$0xf]
        %v855 = vld [vmem:[%s846 + $0x30] sm:$0xf]
        %v856 = vld [vmem:[%s846 + $0x34] sm:$0xf]
        %v857 = vld [vmem:[%s846 + $0x3c] sm:$0xf]
        %v858 = vld [vmem:[%s846 + $0x40] sm:$0xf]
        %v859 = vld [vmem:[%s846 + $0x48] sm:$0xf]
        %v860 = vld [vmem:[%s846 + $0x4c] sm:$0xf]
        %v861 = vld [vmem:[%s846 + $0x54] sm:$0xf]
        %v862 = vld [vmem:[%s846 + $0x58] sm:$0xf]
        %v863 = vld [vmem:[%s846 + $0x60] sm:$0xf]
        %v864 = vld [vmem:[%s846 + $0x64] sm:$0xf]
        %v865 = vld [vmem:[%s846 + $0x6c] sm:$0xf]
        %v866 = vld [vmem:[%s846 + $0x70] sm:$0xf]
        %v867 = vld [vmem:[%s846 + $0x78] sm:$0xf]
        %v868 = vld [vmem:[%s846 + $0x7c] sm:$0xf]
        %v869 = vld [vmem:[%s846 + $0x84] sm:$0xf]
        %v870 = vld [vmem:[%s846 + $0x88] sm:$0xf]
        %v871 = vld [vmem:[%s846 + $0x90] sm:$0xf]
        %v872 = vld [vmem:[%s846 + $0x94] sm:$0xf]
        %v873 = vld [vmem:[%s846 + $0x9c] sm:$0xf]
        %v874 = vld [vmem:[%s846 + $0xa0] sm:$0xf]
        %v875 = vld [vmem:[%s846 + $0xa8] sm:$0xf]
        %v876 = vld [vmem:[%s846 + $0xac] sm:$0xf]
        %v877 = vld [vmem:[%s846 + $0xb4] sm:$0xf]
        %v878 = vld [vmem:[%s846 + $0xb8] sm:$0xf]
        %v879 = vld [vmem:[%s846 + $0x8] sm:$0x1]
        %v880 = vld [vmem:[%s846 + $0x14] sm:$0x1]
        %v881 = vld [vmem:[%s846 + $0x20] sm:$0x1]
        %v882 = vld [vmem:[%s846 + $0x2c] sm:$0x1]
        %v883 = vld [vmem:[%s846 + $0x38] sm:$0x1]
        %v884 = vld [vmem:[%s846 + $0x44] sm:$0x1]
        %v885 = vld [vmem:[%s846 + $0x50] sm:$0x1]
        %v886 = vld [vmem:[%s846 + $0x5c] sm:$0x1]
        %v887 = vld [vmem:[%s846 + $0x68] sm:$0x1]
        %v888 = vld [vmem:[%s846 + $0x74] sm:$0x1]
        %v889 = vld [vmem:[%s846 + $0x80] sm:$0x1]
        %v890 = vld [vmem:[%s846 + $0x8c] sm:$0x1]
        %v891 = vld [vmem:[%s846 + $0x98] sm:$0x1]
        %v892 = vld [vmem:[%s846 + $0xa4] sm:$0x1]
        %v893 = vld [vmem:[%s846 + $0xb0] sm:$0x1]
        %v894 = vld [vmem:[%s846 + $0xbc] sm:$0x1]
        %v896 = vshrl.u32 %v847, 16
        %v898 = vrot.slane %v896, 4
        %v899 = vshll.u32 %v847, 16
        %v901 = vrot.slane %v899, 5
        %v902 = vor.u32 %v898, %v901
        %v903 = vrot.slane %v902, 4
        %v905 = vshll.u32 %v848, 16
        %v907 = vrot.slane %v905, 5
        %v908 = vsel %vm282, %v903, %v907
        %v909 = vshrl.u32 %v848, 16
        %v911 = vrot.slane %v909, 4
        %v912 = vor.u32 %v911, %v907
        %v913 = vrot.slane %v912, 4
        %v915 = vshll.u32 %v879, 16
        %v917 = vrot.slane %v915, 5
        %v918 = vsel %vm282, %v913, %v917
        %v920 = vshrl.u32 %v849, 16
        %v922 = vrot.slane %v920, 4
        %v923 = vshll.u32 %v849, 16
        %v925 = vrot.slane %v923, 5
        %v926 = vor.u32 %v922, %v925
        %v927 = vrot.slane %v926, 4
        %v929 = vshll.u32 %v850, 16
        %v931 = vrot.slane %v929, 5
        %v932 = vsel %vm282, %v927, %v931
        %v933 = vshrl.u32 %v850, 16
        %v935 = vrot.slane %v933, 4
        %v936 = vor.u32 %v935, %v931
        %v937 = vrot.slane %v936, 4
        %v939 = vshll.u32 %v880, 16
        %v941 = vrot.slane %v939, 5
        %v942 = vsel %vm282, %v937, %v941
        %v944 = vshrl.u32 %v851, 16
        %v946 = vrot.slane %v944, 4
        %v947 = vshll.u32 %v851, 16
        %v949 = vrot.slane %v947, 5
        %v950 = vor.u32 %v946, %v949
        %v951 = vrot.slane %v950, 4
        %v953 = vshll.u32 %v852, 16
        %v955 = vrot.slane %v953, 5
        %v956 = vsel %vm282, %v951, %v955
        %v957 = vshrl.u32 %v852, 16
        %v959 = vrot.slane %v957, 4
        %v960 = vor.u32 %v959, %v955
        %v961 = vrot.slane %v960, 4
        %v963 = vshll.u32 %v881, 16
        %v965 = vrot.slane %v963, 5
        %v966 = vsel %vm282, %v961, %v965
        %v968 = vshrl.u32 %v853, 16
        %v970 = vrot.slane %v968, 4
        %v971 = vshll.u32 %v853, 16
        %v973 = vrot.slane %v971, 5
        %v974 = vor.u32 %v970, %v973
        %v975 = vrot.slane %v974, 4
        %v977 = vshll.u32 %v854, 16
        %v979 = vrot.slane %v977, 5
        %v980 = vsel %vm282, %v975, %v979
        %v981 = vshrl.u32 %v854, 16
        %v983 = vrot.slane %v981, 4
        %v984 = vor.u32 %v983, %v979
        %v985 = vrot.slane %v984, 4
        %v987 = vshll.u32 %v882, 16
        %v989 = vrot.slane %v987, 5
        %v990 = vsel %vm282, %v985, %v989
        %v992 = vshrl.u32 %v855, 16
        %v994 = vrot.slane %v992, 4
        %v995 = vshll.u32 %v855, 16
        %v997 = vrot.slane %v995, 5
        %v998 = vor.u32 %v994, %v997
        %v999 = vrot.slane %v998, 4
        %v1001 = vshll.u32 %v856, 16
        %v1003 = vrot.slane %v1001, 5
        %v1004 = vsel %vm282, %v999, %v1003
        %v1005 = vshrl.u32 %v856, 16
        %v1007 = vrot.slane %v1005, 4
        %v1008 = vor.u32 %v1007, %v1003
        %v1009 = vrot.slane %v1008, 4
        %v1011 = vshll.u32 %v883, 16
        %v1013 = vrot.slane %v1011, 5
        %v1014 = vsel %vm282, %v1009, %v1013
        %v1016 = vshrl.u32 %v857, 16
        %v1018 = vrot.slane %v1016, 4
        %v1019 = vshll.u32 %v857, 16
        %v1021 = vrot.slane %v1019, 5
        %v1022 = vor.u32 %v1018, %v1021
        %v1023 = vrot.slane %v1022, 4
        %v1025 = vshll.u32 %v858, 16
        %v1027 = vrot.slane %v1025, 5
        %v1028 = vsel %vm282, %v1023, %v1027
        %v1029 = vshrl.u32 %v858, 16
        %v1031 = vrot.slane %v1029, 4
        %v1032 = vor.u32 %v1031, %v1027
        %v1033 = vrot.slane %v1032, 4
        %v1035 = vshll.u32 %v884, 16
        %v1037 = vrot.slane %v1035, 5
        %v1038 = vsel %vm282, %v1033, %v1037
        %v1040 = vshrl.u32 %v859, 16
        %v1042 = vrot.slane %v1040, 4
        %v1043 = vshll.u32 %v859, 16
        %v1045 = vrot.slane %v1043, 5
        %v1046 = vor.u32 %v1042, %v1045
        %v1047 = vrot.slane %v1046, 4
        %v1049 = vshll.u32 %v860, 16
        %v1051 = vrot.slane %v1049, 5
        %v1052 = vsel %vm282, %v1047, %v1051
        %v1053 = vshrl.u32 %v860, 16
        %v1055 = vrot.slane %v1053, 4
        %v1056 = vor.u32 %v1055, %v1051
        %v1057 = vrot.slane %v1056, 4
        %v1059 = vshll.u32 %v885, 16
        %v1061 = vrot.slane %v1059, 5
        %v1062 = vsel %vm282, %v1057, %v1061
        %v1064 = vshrl.u32 %v861, 16
        %v1066 = vrot.slane %v1064, 4
        %v1067 = vshll.u32 %v861, 16
        %v1069 = vrot.slane %v1067, 5
        %v1070 = vor.u32 %v1066, %v1069
        %v1071 = vrot.slane %v1070, 4
        %v1073 = vshll.u32 %v862, 16
        %v1075 = vrot.slane %v1073, 5
        %v1076 = vsel %vm282, %v1071, %v1075
        %v1077 = vshrl.u32 %v862, 16
        %v1079 = vrot.slane %v1077, 4
        %v1080 = vor.u32 %v1079, %v1075
        %v1081 = vrot.slane %v1080, 4
        %v1083 = vshll.u32 %v886, 16
        %v1085 = vrot.slane %v1083, 5
        %v1086 = vsel %vm282, %v1081, %v1085
        %v1088 = vshrl.u32 %v863, 16
        %v1090 = vrot.slane %v1088, 4
        %v1091 = vshll.u32 %v863, 16
        %v1093 = vrot.slane %v1091, 5
        %v1094 = vor.u32 %v1090, %v1093
        %v1095 = vrot.slane %v1094, 4
        %v1097 = vshll.u32 %v864, 16
        %v1099 = vrot.slane %v1097, 5
        %v1100 = vsel %vm282, %v1095, %v1099
        %v1101 = vshrl.u32 %v864, 16
        %v1103 = vrot.slane %v1101, 4
        %v1104 = vor.u32 %v1103, %v1099
        %v1105 = vrot.slane %v1104, 4
        %v1107 = vshll.u32 %v887, 16
        %v1109 = vrot.slane %v1107, 5
        %v1110 = vsel %vm282, %v1105, %v1109
        %v1112 = vshrl.u32 %v865, 16
        %v1114 = vrot.slane %v1112, 4
        %v1115 = vshll.u32 %v865, 16
        %v1117 = vrot.slane %v1115, 5
        %v1118 = vor.u32 %v1114, %v1117
        %v1119 = vrot.slane %v1118, 4
        %v1121 = vshll.u32 %v866, 16
        %v1123 = vrot.slane %v1121, 5
        %v1124 = vsel %vm282, %v1119, %v1123
        %v1125 = vshrl.u32 %v866, 16
        %v1127 = vrot.slane %v1125, 4
        %v1128 = vor.u32 %v1127, %v1123
        %v1129 = vrot.slane %v1128, 4
        %v1131 = vshll.u32 %v888, 16
        %v1133 = vrot.slane %v1131, 5
        %v1134 = vsel %vm282, %v1129, %v1133
        %v1136 = vshrl.u32 %v867, 16
        %v1138 = vrot.slane %v1136, 4
        %v1139 = vshll.u32 %v867, 16
        %v1141 = vrot.slane %v1139, 5
        %v1142 = vor.u32 %v1138, %v1141
        %v1143 = vrot.slane %v1142, 4
        %v1145 = vshll.u32 %v868, 16
        %v1147 = vrot.slane %v1145, 5
        %v1148 = vsel %vm282, %v1143, %v1147
        %v1149 = vshrl.u32 %v868, 16
        %v1151 = vrot.slane %v1149, 4
        %v1152 = vor.u32 %v1151, %v1147
        %v1153 = vrot.slane %v1152, 4
        %v1155 = vshll.u32 %v889, 16
        %v1157 = vrot.slane %v1155, 5
        %v1158 = vsel %vm282, %v1153, %v1157
        %v1160 = vshrl.u32 %v869, 16
        %v1162 = vrot.slane %v1160, 4
        %v1163 = vshll.u32 %v869, 16
        %v1165 = vrot.slane %v1163, 5
        %v1166 = vor.u32 %v1162, %v1165
        %v1167 = vrot.slane %v1166, 4
        %v1169 = vshll.u32 %v870, 16
        %v1171 = vrot.slane %v1169, 5
        %v1172 = vsel %vm282, %v1167, %v1171
        %v1173 = vshrl.u32 %v870, 16
        %v1175 = vrot.slane %v1173, 4
        %v1176 = vor.u32 %v1175, %v1171
        %v1177 = vrot.slane %v1176, 4
        %v1179 = vshll.u32 %v890, 16
        %v1181 = vrot.slane %v1179, 5
        %v1182 = vsel %vm282, %v1177, %v1181
        %v1184 = vshrl.u32 %v871, 16
        %v1186 = vrot.slane %v1184, 4
        %v1187 = vshll.u32 %v871, 16
        %v1189 = vrot.slane %v1187, 5
        %v1190 = vor.u32 %v1186, %v1189
        %v1191 = vrot.slane %v1190, 4
        %v1193 = vshll.u32 %v872, 16
        %v1195 = vrot.slane %v1193, 5
        %v1196 = vsel %vm282, %v1191, %v1195
        %v1197 = vshrl.u32 %v872, 16
        %v1199 = vrot.slane %v1197, 4
        %v1200 = vor.u32 %v1199, %v1195
        %v1201 = vrot.slane %v1200, 4
        %v1203 = vshll.u32 %v891, 16
        %v1205 = vrot.slane %v1203, 5
        %v1206 = vsel %vm282, %v1201, %v1205
        %v1208 = vshrl.u32 %v873, 16
        %v1210 = vrot.slane %v1208, 4
        %v1211 = vshll.u32 %v873, 16
        %v1213 = vrot.slane %v1211, 5
        %v1214 = vor.u32 %v1210, %v1213
        %v1215 = vrot.slane %v1214, 4
        %v1217 = vshll.u32 %v874, 16
        %v1219 = vrot.slane %v1217, 5
        %v1220 = vsel %vm282, %v1215, %v1219
        %v1221 = vshrl.u32 %v874, 16
        %v1223 = vrot.slane %v1221, 4
        %v1224 = vor.u32 %v1223, %v1219
        %v1225 = vrot.slane %v1224, 4
        %v1227 = vshll.u32 %v892, 16
        %v1229 = vrot.slane %v1227, 5
        %v1230 = vsel %vm282, %v1225, %v1229
        %v1232 = vshrl.u32 %v875, 16
        %v1234 = vrot.slane %v1232, 4
        %v1235 = vshll.u32 %v875, 16
        %v1237 = vrot.slane %v1235, 5
        %v1238 = vor.u32 %v1234, %v1237
        %v1239 = vrot.slane %v1238, 4
        %v1241 = vshll.u32 %v876, 16
        %v1243 = vrot.slane %v1241, 5
        %v1244 = vsel %vm282, %v1239, %v1243
        %v1245 = vshrl.u32 %v876, 16
        %v1247 = vrot.slane %v1245, 4
        %v1248 = vor.u32 %v1247, %v1243
        %v1249 = vrot.slane %v1248, 4
        %v1251 = vshll.u32 %v893, 16
        %v1253 = vrot.slane %v1251, 5
        %v1254 = vsel %vm282, %v1249, %v1253
        %v1256 = vshrl.u32 %v877, 16
        %v1258 = vrot.slane %v1256, 4
        %v1259 = vshll.u32 %v877, 16
        %v1261 = vrot.slane %v1259, 5
        %v1262 = vor.u32 %v1258, %v1261
        %v1263 = vrot.slane %v1262, 4
        %v1265 = vshll.u32 %v878, 16
        %v1267 = vrot.slane %v1265, 5
        %v1268 = vsel %vm282, %v1263, %v1267
        %v1269 = vshrl.u32 %v878, 16
        %v1271 = vrot.slane %v1269, 4
        %v1272 = vor.u32 %v1271, %v1267
        %v1273 = vrot.slane %v1272, 4
        %v1275 = vshll.u32 %v894, 16
        %v1277 = vrot.slane %v1275, 5
        %v1278 = vsel %vm282, %v1273, %v1277
        %v1279 = vld [vmem:[%s846] sm:$0xe]
        %v1280 = vld [vmem:[%s846 + $0xc] sm:$0xe]
        %v1281 = vld [vmem:[%s846 + $0x18] sm:$0xe]
        %v1282 = vld [vmem:[%s846 + $0x24] sm:$0xe]
        %v1283 = vld [vmem:[%s846 + $0x30] sm:$0xe]
        %v1284 = vld [vmem:[%s846 + $0x3c] sm:$0xe]
        %v1285 = vld [vmem:[%s846 + $0x48] sm:$0xe]
        %v1286 = vld [vmem:[%s846 + $0x54] sm:$0xe]
        %v1287 = vld [vmem:[%s846 + $0x60] sm:$0xe]
        %v1288 = vld [vmem:[%s846 + $0x6c] sm:$0xe]
        %v1289 = vld [vmem:[%s846 + $0x78] sm:$0xe]
        %v1290 = vld [vmem:[%s846 + $0x84] sm:$0xe]
        %v1291 = vld [vmem:[%s846 + $0x90] sm:$0xe]
        %v1292 = vld [vmem:[%s846 + $0x9c] sm:$0xe]
        %v1293 = vld [vmem:[%s846 + $0xa8] sm:$0xe]
        %v1294 = vld [vmem:[%s846 + $0xb4] sm:$0xe]
        %v1343 = vrot.slane %v1279, 5
        %v1344 = vrot.slane %v1343, 4
        %v1345 = vrot.slane %v848, 5
        %v1346 = vsel %vm733, %v1344, %v1345
        %v1347 = vrot.slane %v1345, 4
        %v1348 = vrot.slane %v879, 5
        %v1349 = vsel %vm733, %v1347, %v1348
        %v1350 = vrot.slane %v1280, 5
        %v1351 = vrot.slane %v1350, 4
        %v1352 = vrot.slane %v850, 5
        %v1353 = vsel %vm733, %v1351, %v1352
        %v1354 = vrot.slane %v1352, 4
        %v1355 = vrot.slane %v880, 5
        %v1356 = vsel %vm733, %v1354, %v1355
        %v1357 = vrot.slane %v1281, 5
        %v1358 = vrot.slane %v1357, 4
        %v1359 = vrot.slane %v852, 5
        %v1360 = vsel %vm733, %v1358, %v1359
        %v1361 = vrot.slane %v1359, 4
        %v1362 = vrot.slane %v881, 5
        %v1363 = vsel %vm733, %v1361, %v1362
        %v1364 = vrot.slane %v1282, 5
        %v1365 = vrot.slane %v1364, 4
        %v1366 = vrot.slane %v854, 5
        %v1367 = vsel %vm733, %v1365, %v1366
        %v1368 = vrot.slane %v1366, 4
        %v1369 = vrot.slane %v882, 5
        %v1370 = vsel %vm733, %v1368, %v1369
        %v1371 = vrot.slane %v1283, 5
        %v1372 = vrot.slane %v1371, 4
        %v1373 = vrot.slane %v856, 5
        %v1374 = vsel %vm733, %v1372, %v1373
        %v1375 = vrot.slane %v1373, 4
        %v1376 = vrot.slane %v883, 5
        %v1377 = vsel %vm733, %v1375, %v1376
        %v1378 = vrot.slane %v1284, 5
        %v1379 = vrot.slane %v1378, 4
        %v1380 = vrot.slane %v858, 5
        %v1381 = vsel %vm733, %v1379, %v1380
        %v1382 = vrot.slane %v1380, 4
        %v1383 = vrot.slane %v884, 5
        %v1384 = vsel %vm733, %v1382, %v1383
        %v1385 = vrot.slane %v1285, 5
        %v1386 = vrot.slane %v1385, 4
        %v1387 = vrot.slane %v860, 5
        %v1388 = vsel %vm733, %v1386, %v1387
        %v1389 = vrot.slane %v1387, 4
        %v1390 = vrot.slane %v885, 5
        %v1391 = vsel %vm733, %v1389, %v1390
        %v1392 = vrot.slane %v1286, 5
        %v1393 = vrot.slane %v1392, 4
        %v1394 = vrot.slane %v862, 5
        %v1395 = vsel %vm733, %v1393, %v1394
        %v1396 = vrot.slane %v1394, 4
        %v1397 = vrot.slane %v886, 5
        %v1398 = vsel %vm733, %v1396, %v1397
        %v1399 = vrot.slane %v1287, 5
        %v1400 = vrot.slane %v1399, 4
        %v1401 = vrot.slane %v864, 5
        %v1402 = vsel %vm733, %v1400, %v1401
        %v1403 = vrot.slane %v1401, 4
        %v1404 = vrot.slane %v887, 5
        %v1405 = vsel %vm733, %v1403, %v1404
        %v1406 = vrot.slane %v1288, 5
        %v1407 = vrot.slane %v1406, 4
        %v1408 = vrot.slane %v866, 5
        %v1409 = vsel %vm733, %v1407, %v1408
        %v1410 = vrot.slane %v1408, 4
        %v1411 = vrot.slane %v888, 5
        %v1412 = vsel %vm733, %v1410, %v1411
        %v1413 = vrot.slane %v1289, 5
        %v1414 = vrot.slane %v1413, 4
        %v1415 = vrot.slane %v868, 5
        %v1416 = vsel %vm733, %v1414, %v1415
        %v1417 = vrot.slane %v1415, 4
        %v1418 = vrot.slane %v889, 5
        %v1419 = vsel %vm733, %v1417, %v1418
        %v1420 = vrot.slane %v1290, 5
        %v1421 = vrot.slane %v1420, 4
        %v1422 = vrot.slane %v870, 5
        %v1423 = vsel %vm733, %v1421, %v1422
        %v1424 = vrot.slane %v1422, 4
        %v1425 = vrot.slane %v890, 5
        %v1426 = vsel %vm733, %v1424, %v1425
        %v1427 = vrot.slane %v1291, 5
        %v1428 = vrot.slane %v1427, 4
        %v1429 = vrot.slane %v872, 5
        %v1430 = vsel %vm733, %v1428, %v1429
        %v1431 = vrot.slane %v1429, 4
        %v1432 = vrot.slane %v891, 5
        %v1433 = vsel %vm733, %v1431, %v1432
        %v1434 = vrot.slane %v1292, 5
        %v1435 = vrot.slane %v1434, 4
        %v1436 = vrot.slane %v874, 5
        %v1437 = vsel %vm733, %v1435, %v1436
        %v1438 = vrot.slane %v1436, 4
        %v1439 = vrot.slane %v892, 5
        %v1440 = vsel %vm733, %v1438, %v1439
        %v1441 = vrot.slane %v1293, 5
        %v1442 = vrot.slane %v1441, 4
        %v1443 = vrot.slane %v876, 5
        %v1444 = vsel %vm733, %v1442, %v1443
        %v1445 = vrot.slane %v1443, 4
        %v1446 = vrot.slane %v893, 5
        %v1447 = vsel %vm733, %v1445, %v1446
        %v1448 = vrot.slane %v1294, 5
        %v1449 = vrot.slane %v1448, 4
        %v1450 = vrot.slane %v878, 5
        %v1451 = vsel %vm733, %v1449, %v1450
        %v1452 = vrot.slane %v1450, 4
        %v1453 = vrot.slane %v894, 5
        %v1454 = vsel %vm733, %v1452, %v1453
        %s1455 = scalar_lea.vmem %s207, 24
        %v1456 = vld [vmem:[%s1455] sm:$0xf]
        %v1457 = vld [vmem:[%s1455 + $0x4] sm:$0xf]
        %v1458 = vld [vmem:[%s1455 + $0xc] sm:$0xf]
        %v1459 = vld [vmem:[%s1455 + $0x10] sm:$0xf]
        %v1460 = vld [vmem:[%s1455 + $0x18] sm:$0xf]
        %v1461 = vld [vmem:[%s1455 + $0x1c] sm:$0xf]
        %v1462 = vld [vmem:[%s1455 + $0x24] sm:$0xf]
        %v1463 = vld [vmem:[%s1455 + $0x28] sm:$0xf]
        %v1464 = vld [vmem:[%s1455 + $0x30] sm:$0xf]
        %v1465 = vld [vmem:[%s1455 + $0x34] sm:$0xf]
        %v1466 = vld [vmem:[%s1455 + $0x3c] sm:$0xf]
        %v1467 = vld [vmem:[%s1455 + $0x40] sm:$0xf]
        %v1468 = vld [vmem:[%s1455 + $0x48] sm:$0xf]
        %v1469 = vld [vmem:[%s1455 + $0x4c] sm:$0xf]
        %v1470 = vld [vmem:[%s1455 + $0x54] sm:$0xf]
        %v1471 = vld [vmem:[%s1455 + $0x58] sm:$0xf]
        %v1472 = vld [vmem:[%s1455 + $0x60] sm:$0xf]
        %v1473 = vld [vmem:[%s1455 + $0x64] sm:$0xf]
        %v1474 = vld [vmem:[%s1455 + $0x6c] sm:$0xf]
        %v1475 = vld [vmem:[%s1455 + $0x70] sm:$0xf]
        %v1476 = vld [vmem:[%s1455 + $0x78] sm:$0xf]
        %v1477 = vld [vmem:[%s1455 + $0x7c] sm:$0xf]
        %v1478 = vld [vmem:[%s1455 + $0x84] sm:$0xf]
        %v1479 = vld [vmem:[%s1455 + $0x88] sm:$0xf]
        %v1480 = vld [vmem:[%s1455 + $0x90] sm:$0xf]
        %v1481 = vld [vmem:[%s1455 + $0x94] sm:$0xf]
        %v1482 = vld [vmem:[%s1455 + $0x9c] sm:$0xf]
        %v1483 = vld [vmem:[%s1455 + $0xa0] sm:$0xf]
        %v1484 = vld [vmem:[%s1455 + $0xa8] sm:$0xf]
        %v1485 = vld [vmem:[%s1455 + $0xac] sm:$0xf]
        %v1486 = vld [vmem:[%s1455 + $0xb4] sm:$0xf]
        %v1487 = vld [vmem:[%s1455 + $0xb8] sm:$0xf]
        %v1488 = vld [vmem:[%s1455 + $0x8] sm:$0x1]
        %v1489 = vld [vmem:[%s1455 + $0x14] sm:$0x1]
        %v1490 = vld [vmem:[%s1455 + $0x20] sm:$0x1]
        %v1491 = vld [vmem:[%s1455 + $0x2c] sm:$0x1]
        %v1492 = vld [vmem:[%s1455 + $0x38] sm:$0x1]
        %v1493 = vld [vmem:[%s1455 + $0x44] sm:$0x1]
        %v1494 = vld [vmem:[%s1455 + $0x50] sm:$0x1]
        %v1495 = vld [vmem:[%s1455 + $0x5c] sm:$0x1]
        %v1496 = vld [vmem:[%s1455 + $0x68] sm:$0x1]
        %v1497 = vld [vmem:[%s1455 + $0x74] sm:$0x1]
        %v1498 = vld [vmem:[%s1455 + $0x80] sm:$0x1]
        %v1499 = vld [vmem:[%s1455 + $0x8c] sm:$0x1]
        %v1500 = vld [vmem:[%s1455 + $0x98] sm:$0x1]
        %v1501 = vld [vmem:[%s1455 + $0xa4] sm:$0x1]
        %v1502 = vld [vmem:[%s1455 + $0xb0] sm:$0x1]
        %v1503 = vld [vmem:[%s1455 + $0xbc] sm:$0x1]
        %v1505 = vshrl.u32 %v1456, 16
        %v1507 = vrot.slane %v1505, 4
        %v1508 = vshll.u32 %v1456, 16
        %v1510 = vrot.slane %v1508, 5
        %v1511 = vor.u32 %v1507, %v1510
        %v1512 = vrot.slane %v1511, 4
        %v1514 = vshll.u32 %v1457, 16
        %v1516 = vrot.slane %v1514, 5
        %v1517 = vsel %vm282, %v1512, %v1516
        %v1518 = vshrl.u32 %v1457, 16
        %v1520 = vrot.slane %v1518, 4
        %v1521 = vor.u32 %v1520, %v1516
        %v1522 = vrot.slane %v1521, 4
        %v1524 = vshll.u32 %v1488, 16
        %v1526 = vrot.slane %v1524, 5
        %v1527 = vsel %vm282, %v1522, %v1526
        %v1529 = vshrl.u32 %v1458, 16
        %v1531 = vrot.slane %v1529, 4
        %v1532 = vshll.u32 %v1458, 16
        %v1534 = vrot.slane %v1532, 5
        %v1535 = vor.u32 %v1531, %v1534
        %v1536 = vrot.slane %v1535, 4
        %v1538 = vshll.u32 %v1459, 16
        %v1540 = vrot.slane %v1538, 5
        %v1541 = vsel %vm282, %v1536, %v1540
        %v1542 = vshrl.u32 %v1459, 16
        %v1544 = vrot.slane %v1542, 4
        %v1545 = vor.u32 %v1544, %v1540
        %v1546 = vrot.slane %v1545, 4
        %v1548 = vshll.u32 %v1489, 16
        %v1550 = vrot.slane %v1548, 5
        %v1551 = vsel %vm282, %v1546, %v1550
        %v1553 = vshrl.u32 %v1460, 16
        %v1555 = vrot.slane %v1553, 4
        %v1556 = vshll.u32 %v1460, 16
        %v1558 = vrot.slane %v1556, 5
        %v1559 = vor.u32 %v1555, %v1558
        %v1560 = vrot.slane %v1559, 4
        %v1562 = vshll.u32 %v1461, 16
        %v1564 = vrot.slane %v1562, 5
        %v1565 = vsel %vm282, %v1560, %v1564
        %v1566 = vshrl.u32 %v1461, 16
        %v1568 = vrot.slane %v1566, 4
        %v1569 = vor.u32 %v1568, %v1564
        %v1570 = vrot.slane %v1569, 4
        %v1572 = vshll.u32 %v1490, 16
        %v1574 = vrot.slane %v1572, 5
        %v1575 = vsel %vm282, %v1570, %v1574
        %v1577 = vshrl.u32 %v1462, 16
        %v1579 = vrot.slane %v1577, 4
        %v1580 = vshll.u32 %v1462, 16
        %v1582 = vrot.slane %v1580, 5
        %v1583 = vor.u32 %v1579, %v1582
        %v1584 = vrot.slane %v1583, 4
        %v1586 = vshll.u32 %v1463, 16
        %v1588 = vrot.slane %v1586, 5
        %v1589 = vsel %vm282, %v1584, %v1588
        %v1590 = vshrl.u32 %v1463, 16
        %v1592 = vrot.slane %v1590, 4
        %v1593 = vor.u32 %v1592, %v1588
        %v1594 = vrot.slane %v1593, 4
        %v1596 = vshll.u32 %v1491, 16
        %v1598 = vrot.slane %v1596, 5
        %v1599 = vsel %vm282, %v1594, %v1598
        %v1601 = vshrl.u32 %v1464, 16
        %v1603 = vrot.slane %v1601, 4
        %v1604 = vshll.u32 %v1464, 16
        %v1606 = vrot.slane %v1604, 5
        %v1607 = vor.u32 %v1603, %v1606
        %v1608 = vrot.slane %v1607, 4
        %v1610 = vshll.u32 %v1465, 16
        %v1612 = vrot.slane %v1610, 5
        %v1613 = vsel %vm282, %v1608, %v1612
        %v1614 = vshrl.u32 %v1465, 16
        %v1616 = vrot.slane %v1614, 4
        %v1617 = vor.u32 %v1616, %v1612
        %v1618 = vrot.slane %v1617, 4
        %v1620 = vshll.u32 %v1492, 16
        %v1622 = vrot.slane %v1620, 5
        %v1623 = vsel %vm282, %v1618, %v1622
        %v1625 = vshrl.u32 %v1466, 16
        %v1627 = vrot.slane %v1625, 4
        %v1628 = vshll.u32 %v1466, 16
        %v1630 = vrot.slane %v1628, 5
        %v1631 = vor.u32 %v1627, %v1630
        %v1632 = vrot.slane %v1631, 4
        %v1634 = vshll.u32 %v1467, 16
        %v1636 = vrot.slane %v1634, 5
        %v1637 = vsel %vm282, %v1632, %v1636
        %v1638 = vshrl.u32 %v1467, 16
        %v1640 = vrot.slane %v1638, 4
        %v1641 = vor.u32 %v1640, %v1636
        %v1642 = vrot.slane %v1641, 4
        %v1644 = vshll.u32 %v1493, 16
        %v1646 = vrot.slane %v1644, 5
        %v1647 = vsel %vm282, %v1642, %v1646
        %v1649 = vshrl.u32 %v1468, 16
        %v1651 = vrot.slane %v1649, 4
        %v1652 = vshll.u32 %v1468, 16
        %v1654 = vrot.slane %v1652, 5
        %v1655 = vor.u32 %v1651, %v1654
        %v1656 = vrot.slane %v1655, 4
        %v1658 = vshll.u32 %v1469, 16
        %v1660 = vrot.slane %v1658, 5
        %v1661 = vsel %vm282, %v1656, %v1660
        %v1662 = vshrl.u32 %v1469, 16
        %v1664 = vrot.slane %v1662, 4
        %v1665 = vor.u32 %v1664, %v1660
        %v1666 = vrot.slane %v1665, 4
        %v1668 = vshll.u32 %v1494, 16
        %v1670 = vrot.slane %v1668, 5
        %v1671 = vsel %vm282, %v1666, %v1670
        %v1673 = vshrl.u32 %v1470, 16
        %v1675 = vrot.slane %v1673, 4
        %v1676 = vshll.u32 %v1470, 16
        %v1678 = vrot.slane %v1676, 5
        %v1679 = vor.u32 %v1675, %v1678
        %v1680 = vrot.slane %v1679, 4
        %v1682 = vshll.u32 %v1471, 16
        %v1684 = vrot.slane %v1682, 5
        %v1685 = vsel %vm282, %v1680, %v1684
        %v1686 = vshrl.u32 %v1471, 16
        %v1688 = vrot.slane %v1686, 4
        %v1689 = vor.u32 %v1688, %v1684
        %v1690 = vrot.slane %v1689, 4
        %v1692 = vshll.u32 %v1495, 16
        %v1694 = vrot.slane %v1692, 5
        %v1695 = vsel %vm282, %v1690, %v1694
        %v1697 = vshrl.u32 %v1472, 16
        %v1699 = vrot.slane %v1697, 4
        %v1700 = vshll.u32 %v1472, 16
        %v1702 = vrot.slane %v1700, 5
        %v1703 = vor.u32 %v1699, %v1702
        %v1704 = vrot.slane %v1703, 4
        %v1706 = vshll.u32 %v1473, 16
        %v1708 = vrot.slane %v1706, 5
        %v1709 = vsel %vm282, %v1704, %v1708
        %v1710 = vshrl.u32 %v1473, 16
        %v1712 = vrot.slane %v1710, 4
        %v1713 = vor.u32 %v1712, %v1708
        %v1714 = vrot.slane %v1713, 4
        %v1716 = vshll.u32 %v1496, 16
        %v1718 = vrot.slane %v1716, 5
        %v1719 = vsel %vm282, %v1714, %v1718
        %v1721 = vshrl.u32 %v1474, 16
        %v1723 = vrot.slane %v1721, 4
        %v1724 = vshll.u32 %v1474, 16
        %v1726 = vrot.slane %v1724, 5
        %v1727 = vor.u32 %v1723, %v1726
        %v1728 = vrot.slane %v1727, 4
        %v1730 = vshll.u32 %v1475, 16
        %v1732 = vrot.slane %v1730, 5
        %v1733 = vsel %vm282, %v1728, %v1732
        %v1734 = vshrl.u32 %v1475, 16
        %v1736 = vrot.slane %v1734, 4
        %v1737 = vor.u32 %v1736, %v1732
        %v1738 = vrot.slane %v1737, 4
        %v1740 = vshll.u32 %v1497, 16
        %v1742 = vrot.slane %v1740, 5
        %v1743 = vsel %vm282, %v1738, %v1742
        %v1745 = vshrl.u32 %v1476, 16
        %v1747 = vrot.slane %v1745, 4
        %v1748 = vshll.u32 %v1476, 16
        %v1750 = vrot.slane %v1748, 5
        %v1751 = vor.u32 %v1747, %v1750
        %v1752 = vrot.slane %v1751, 4
        %v1754 = vshll.u32 %v1477, 16
        %v1756 = vrot.slane %v1754, 5
        %v1757 = vsel %vm282, %v1752, %v1756
        %v1758 = vshrl.u32 %v1477, 16
        %v1760 = vrot.slane %v1758, 4
        %v1761 = vor.u32 %v1760, %v1756
        %v1762 = vrot.slane %v1761, 4
        %v1764 = vshll.u32 %v1498, 16
        %v1766 = vrot.slane %v1764, 5
        %v1767 = vsel %vm282, %v1762, %v1766
        %v1769 = vshrl.u32 %v1478, 16
        %v1771 = vrot.slane %v1769, 4
        %v1772 = vshll.u32 %v1478, 16
        %v1774 = vrot.slane %v1772, 5
        %v1775 = vor.u32 %v1771, %v1774
        %v1776 = vrot.slane %v1775, 4
        %v1778 = vshll.u32 %v1479, 16
        %v1780 = vrot.slane %v1778, 5
        %v1781 = vsel %vm282, %v1776, %v1780
        %v1782 = vshrl.u32 %v1479, 16
        %v1784 = vrot.slane %v1782, 4
        %v1785 = vor.u32 %v1784, %v1780
        %v1786 = vrot.slane %v1785, 4
        %v1788 = vshll.u32 %v1499, 16
        %v1790 = vrot.slane %v1788, 5
        %v1791 = vsel %vm282, %v1786, %v1790
        %v1793 = vshrl.u32 %v1480, 16
        %v1795 = vrot.slane %v1793, 4
        %v1796 = vshll.u32 %v1480, 16
        %v1798 = vrot.slane %v1796, 5
        %v1799 = vor.u32 %v1795, %v1798
        %v1800 = vrot.slane %v1799, 4
        %v1802 = vshll.u32 %v1481, 16
        %v1804 = vrot.slane %v1802, 5
        %v1805 = vsel %vm282, %v1800, %v1804
        %v1806 = vshrl.u32 %v1481, 16
        %v1808 = vrot.slane %v1806, 4
        %v1809 = vor.u32 %v1808, %v1804
        %v1810 = vrot.slane %v1809, 4
        %v1812 = vshll.u32 %v1500, 16
        %v1814 = vrot.slane %v1812, 5
        %v1815 = vsel %vm282, %v1810, %v1814
        %v1817 = vshrl.u32 %v1482, 16
        %v1819 = vrot.slane %v1817, 4
        %v1820 = vshll.u32 %v1482, 16
        %v1822 = vrot.slane %v1820, 5
        %v1823 = vor.u32 %v1819, %v1822
        %v1824 = vrot.slane %v1823, 4
        %v1826 = vshll.u32 %v1483, 16
        %v1828 = vrot.slane %v1826, 5
        %v1829 = vsel %vm282, %v1824, %v1828
        %v1830 = vshrl.u32 %v1483, 16
        %v1832 = vrot.slane %v1830, 4
        %v1833 = vor.u32 %v1832, %v1828
        %v1834 = vrot.slane %v1833, 4
        %v1836 = vshll.u32 %v1501, 16
        %v1838 = vrot.slane %v1836, 5
        %v1839 = vsel %vm282, %v1834, %v1838
        %v1841 = vshrl.u32 %v1484, 16
        %v1843 = vrot.slane %v1841, 4
        %v1844 = vshll.u32 %v1484, 16
        %v1846 = vrot.slane %v1844, 5
        %v1847 = vor.u32 %v1843, %v1846
        %v1848 = vrot.slane %v1847, 4
        %v1850 = vshll.u32 %v1485, 16
        %v1852 = vrot.slane %v1850, 5
        %v1853 = vsel %vm282, %v1848, %v1852
        %v1854 = vshrl.u32 %v1485, 16
        %v1856 = vrot.slane %v1854, 4
        %v1857 = vor.u32 %v1856, %v1852
        %v1858 = vrot.slane %v1857, 4
        %v1860 = vshll.u32 %v1502, 16
        %v1862 = vrot.slane %v1860, 5
        %v1863 = vsel %vm282, %v1858, %v1862
        %v1865 = vshrl.u32 %v1486, 16
        %v1867 = vrot.slane %v1865, 4
        %v1868 = vshll.u32 %v1486, 16
        %v1870 = vrot.slane %v1868, 5
        %v1871 = vor.u32 %v1867, %v1870
        %v1872 = vrot.slane %v1871, 4
        %v1874 = vshll.u32 %v1487, 16
        %v1876 = vrot.slane %v1874, 5
        %v1877 = vsel %vm282, %v1872, %v1876
        %v1878 = vshrl.u32 %v1487, 16
        %v1880 = vrot.slane %v1878, 4
        %v1881 = vor.u32 %v1880, %v1876
        %v1882 = vrot.slane %v1881, 4
        %v1884 = vshll.u32 %v1503, 16
        %v1886 = vrot.slane %v1884, 5
        %v1887 = vsel %vm282, %v1882, %v1886
        %v1888 = vld [vmem:[%s1455] sm:$0xe]
        %v1889 = vld [vmem:[%s1455 + $0xc] sm:$0xe]
        %v1890 = vld [vmem:[%s1455 + $0x18] sm:$0xe]
        %v1891 = vld [vmem:[%s1455 + $0x24] sm:$0xe]
        %v1892 = vld [vmem:[%s1455 + $0x30] sm:$0xe]
        %v1893 = vld [vmem:[%s1455 + $0x3c] sm:$0xe]
        %v1894 = vld [vmem:[%s1455 + $0x48] sm:$0xe]
        %v1895 = vld [vmem:[%s1455 + $0x54] sm:$0xe]
        %v1896 = vld [vmem:[%s1455 + $0x60] sm:$0xe]
        %v1897 = vld [vmem:[%s1455 + $0x6c] sm:$0xe]
        %v1898 = vld [vmem:[%s1455 + $0x78] sm:$0xe]
        %v1899 = vld [vmem:[%s1455 + $0x84] sm:$0xe]
        %v1900 = vld [vmem:[%s1455 + $0x90] sm:$0xe]
        %v1901 = vld [vmem:[%s1455 + $0x9c] sm:$0xe]
        %v1902 = vld [vmem:[%s1455 + $0xa8] sm:$0xe]
        %v1903 = vld [vmem:[%s1455 + $0xb4] sm:$0xe]
        %v1952 = vrot.slane %v1888, 5
        %v1953 = vrot.slane %v1952, 4
        %v1954 = vrot.slane %v1457, 5
        %v1955 = vsel %vm733, %v1953, %v1954
        %v1956 = vrot.slane %v1954, 4
        %v1957 = vrot.slane %v1488, 5
        %v1958 = vsel %vm733, %v1956, %v1957
        %v1959 = vrot.slane %v1889, 5
        %v1960 = vrot.slane %v1959, 4
        %v1961 = vrot.slane %v1459, 5
        %v1962 = vsel %vm733, %v1960, %v1961
        %v1963 = vrot.slane %v1961, 4
        %v1964 = vrot.slane %v1489, 5
        %v1965 = vsel %vm733, %v1963, %v1964
        %v1966 = vrot.slane %v1890, 5
        %v1967 = vrot.slane %v1966, 4
        %v1968 = vrot.slane %v1461, 5
        %v1969 = vsel %vm733, %v1967, %v1968
        %v1970 = vrot.slane %v1968, 4
        %v1971 = vrot.slane %v1490, 5
        %v1972 = vsel %vm733, %v1970, %v1971
        %v1973 = vrot.slane %v1891, 5
        %v1974 = vrot.slane %v1973, 4
        %v1975 = vrot.slane %v1463, 5
        %v1976 = vsel %vm733, %v1974, %v1975
        %v1977 = vrot.slane %v1975, 4
        %v1978 = vrot.slane %v1491, 5
        %v1979 = vsel %vm733, %v1977, %v1978
        %v1980 = vrot.slane %v1892, 5
        %v1981 = vrot.slane %v1980, 4
        %v1982 = vrot.slane %v1465, 5
        %v1983 = vsel %vm733, %v1981, %v1982
        %v1984 = vrot.slane %v1982, 4
        %v1985 = vrot.slane %v1492, 5
        %v1986 = vsel %vm733, %v1984, %v1985
        %v1987 = vrot.slane %v1893, 5
        %v1988 = vrot.slane %v1987, 4
        %v1989 = vrot.slane %v1467, 5
        %v1990 = vsel %vm733, %v1988, %v1989
        %v1991 = vrot.slane %v1989, 4
        %v1992 = vrot.slane %v1493, 5
        %v1993 = vsel %vm733, %v1991, %v1992
        %v1994 = vrot.slane %v1894, 5
        %v1995 = vrot.slane %v1994, 4
        %v1996 = vrot.slane %v1469, 5
        %v1997 = vsel %vm733, %v1995, %v1996
        %v1998 = vrot.slane %v1996, 4
        %v1999 = vrot.slane %v1494, 5
        %v2000 = vsel %vm733, %v1998, %v1999
        %v2001 = vrot.slane %v1895, 5
        %v2002 = vrot.slane %v2001, 4
        %v2003 = vrot.slane %v1471, 5
        %v2004 = vsel %vm733, %v2002, %v2003
        %v2005 = vrot.slane %v2003, 4
        %v2006 = vrot.slane %v1495, 5
        %v2007 = vsel %vm733, %v2005, %v2006
        %v2008 = vrot.slane %v1896, 5
        %v2009 = vrot.slane %v2008, 4
        %v2010 = vrot.slane %v1473, 5
        %v2011 = vsel %vm733, %v2009, %v2010
        %v2012 = vrot.slane %v2010, 4
        %v2013 = vrot.slane %v1496, 5
        %v2014 = vsel %vm733, %v2012, %v2013
        %v2015 = vrot.slane %v1897, 5
        %v2016 = vrot.slane %v2015, 4
        %v2017 = vrot.slane %v1475, 5
        %v2018 = vsel %vm733, %v2016, %v2017
        %v2019 = vrot.slane %v2017, 4
        %v2020 = vrot.slane %v1497, 5
        %v2021 = vsel %vm733, %v2019, %v2020
        %v2022 = vrot.slane %v1898, 5
        %v2023 = vrot.slane %v2022, 4
        %v2024 = vrot.slane %v1477, 5
        %v2025 = vsel %vm733, %v2023, %v2024
        %v2026 = vrot.slane %v2024, 4
        %v2027 = vrot.slane %v1498, 5
        %v2028 = vsel %vm733, %v2026, %v2027
        %v2029 = vrot.slane %v1899, 5
        %v2030 = vrot.slane %v2029, 4
        %v2031 = vrot.slane %v1479, 5
        %v2032 = vsel %vm733, %v2030, %v2031
        %v2033 = vrot.slane %v2031, 4
        %v2034 = vrot.slane %v1499, 5
        %v2035 = vsel %vm733, %v2033, %v2034
        %v2036 = vrot.slane %v1900, 5
        %v2037 = vrot.slane %v2036, 4
        %v2038 = vrot.slane %v1481, 5
        %v2039 = vsel %vm733, %v2037, %v2038
        %v2040 = vrot.slane %v2038, 4
        %v2041 = vrot.slane %v1500, 5
        %v2042 = vsel %vm733, %v2040, %v2041
        %v2043 = vrot.slane %v1901, 5
        %v2044 = vrot.slane %v2043, 4
        %v2045 = vrot.slane %v1483, 5
        %v2046 = vsel %vm733, %v2044, %v2045
        %v2047 = vrot.slane %v2045, 4
        %v2048 = vrot.slane %v1501, 5
        %v2049 = vsel %vm733, %v2047, %v2048
        %v2050 = vrot.slane %v1902, 5
        %v2051 = vrot.slane %v2050, 4
        %v2052 = vrot.slane %v1485, 5
        %v2053 = vsel %vm733, %v2051, %v2052
        %v2054 = vrot.slane %v2052, 4
        %v2055 = vrot.slane %v1502, 5
        %v2056 = vsel %vm733, %v2054, %v2055
        %v2057 = vrot.slane %v1903, 5
        %v2058 = vrot.slane %v2057, 4
        %v2059 = vrot.slane %v1487, 5
        %v2060 = vsel %vm733, %v2058, %v2059
        %v2061 = vrot.slane %v2059, 4
        %v2062 = vrot.slane %v1503, 5
        %v2063 = vsel %vm733, %v2061, %v2062
        %v2080 = vunpack.c.l.b16 %v232
        %v2081 = vunpack.c.l.b16 %v233
        %v2082 = vunpack.c.l.b16 %v234
        %v2083 = vunpack.c.l.b16 %v235
        %v2084 = vunpack.c.l.b16 %v236
        %v2085 = vunpack.c.l.b16 %v237
        %v2086 = vunpack.c.l.b16 %v238
        %v2087 = vunpack.c.l.b16 %v239
        %v2088 = vunpack.c.l.b16 %v240
        %v2089 = vunpack.c.l.b16 %v241
        %v2090 = vunpack.c.l.b16 %v242
        %v2091 = vunpack.c.l.b16 %v243
        %v2092 = vunpack.c.l.b16 %v244
        %v2093 = vunpack.c.l.b16 %v245
        %v2094 = vunpack.c.l.b16 %v246
        %v2095 = vunpack.c.l.b16 %v247
        %v2096 = vunpack.c.l.b16 %v248
        %v2097 = vunpack.c.l.b16 %v249
        %v2098 = vunpack.c.l.b16 %v250
        %v2099 = vunpack.c.l.b16 %v251
        %v2100 = vunpack.c.l.b16 %v252
        %v2101 = vunpack.c.l.b16 %v253
        %v2102 = vunpack.c.l.b16 %v254
        %v2103 = vunpack.c.l.b16 %v255
        %v2104 = vunpack.c.l.b16 %v256
        %v2105 = vunpack.c.l.b16 %v257
        %v2106 = vunpack.c.l.b16 %v258
        %v2107 = vunpack.c.l.b16 %v259
        %v2108 = vunpack.c.l.b16 %v260
        %v2109 = vunpack.c.l.b16 %v261
        %v2110 = vunpack.c.l.b16 %v262
        %v2111 = vunpack.c.l.b16 %v263
        %v2112 = vpack.c.b16 %v2081, %v2080
        %v2113 = vpack.c.b16 %v2083, %v2082
        %v2114 = vpack.c.b16 %v2085, %v2084
        %v2115 = vpack.c.b16 %v2087, %v2086
        %v2116 = vpack.c.b16 %v2089, %v2088
        %v2117 = vpack.c.b16 %v2091, %v2090
        %v2118 = vpack.c.b16 %v2093, %v2092
        %v2119 = vpack.c.b16 %v2095, %v2094
        %v2120 = vpack.c.b16 %v2097, %v2096
        %v2121 = vpack.c.b16 %v2099, %v2098
        %v2122 = vpack.c.b16 %v2101, %v2100
        %v2123 = vpack.c.b16 %v2103, %v2102
        %v2124 = vpack.c.b16 %v2105, %v2104
        %v2125 = vpack.c.b16 %v2107, %v2106
        %v2126 = vpack.c.b16 %v2109, %v2108
        %v2127 = vpack.c.b16 %v2111, %v2110
        %v2128 = vunpack.c.l.b16 %v296
        %v2129 = vunpack.c.l.b16 %v306
        %v2130 = vunpack.c.l.b16 %v320
        %v2131 = vunpack.c.l.b16 %v330
        %v2132 = vunpack.c.l.b16 %v344
        %v2133 = vunpack.c.l.b16 %v354
        %v2134 = vunpack.c.l.b16 %v368
        %v2135 = vunpack.c.l.b16 %v378
        %v2136 = vunpack.c.l.b16 %v392
        %v2137 = vunpack.c.l.b16 %v402
        %v2138 = vunpack.c.l.b16 %v416
        %v2139 = vunpack.c.l.b16 %v426
        %v2140 = vunpack.c.l.b16 %v440
        %v2141 = vunpack.c.l.b16 %v450
        %v2142 = vunpack.c.l.b16 %v464
        %v2143 = vunpack.c.l.b16 %v474
        %v2144 = vunpack.c.l.b16 %v488
        %v2145 = vunpack.c.l.b16 %v498
        %v2146 = vunpack.c.l.b16 %v512
        %v2147 = vunpack.c.l.b16 %v522
        %v2148 = vunpack.c.l.b16 %v536
        %v2149 = vunpack.c.l.b16 %v546
        %v2150 = vunpack.c.l.b16 %v560
        %v2151 = vunpack.c.l.b16 %v570
        %v2152 = vunpack.c.l.b16 %v584
        %v2153 = vunpack.c.l.b16 %v594
        %v2154 = vunpack.c.l.b16 %v608
        %v2155 = vunpack.c.l.b16 %v618
        %v2156 = vunpack.c.l.b16 %v632
        %v2157 = vunpack.c.l.b16 %v642
        %v2158 = vunpack.c.l.b16 %v656
        %v2159 = vunpack.c.l.b16 %v666
        %v2160 = vpack.c.b16 %v2129, %v2128
        %v2161 = vpack.c.b16 %v2131, %v2130
        %v2162 = vpack.c.b16 %v2133, %v2132
        %v2163 = vpack.c.b16 %v2135, %v2134
        %v2164 = vpack.c.b16 %v2137, %v2136
        %v2165 = vpack.c.b16 %v2139, %v2138
        %v2166 = vpack.c.b16 %v2141, %v2140
        %v2167 = vpack.c.b16 %v2143, %v2142
        %v2168 = vpack.c.b16 %v2145, %v2144
        %v2169 = vpack.c.b16 %v2147, %v2146
        %v2170 = vpack.c.b16 %v2149, %v2148
        %v2171 = vpack.c.b16 %v2151, %v2150
        %v2172 = vpack.c.b16 %v2153, %v2152
        %v2173 = vpack.c.b16 %v2155, %v2154
        %v2174 = vpack.c.b16 %v2157, %v2156
        %v2175 = vpack.c.b16 %v2159, %v2158
        %2176 = vrot.lane.b32.xlu0 %v2160, 4
        %v2177 = vpop.permute.xlu0 %2176
        %2178 = vrot.lane.b32.xlu0 %v2161, 4
        %v2179 = vpop.permute.xlu0 %2178
        %2180 = vrot.lane.b32.xlu0 %v2162, 4
        %v2181 = vpop.permute.xlu0 %2180
        %2182 = vrot.lane.b32.xlu0 %v2163, 4
        %v2183 = vpop.permute.xlu0 %2182
        %2184 = vrot.lane.b32.xlu0 %v2164, 4
        %v2185 = vpop.permute.xlu0 %2184
        %2186 = vrot.lane.b32.xlu0 %v2165, 4
        %v2187 = vpop.permute.xlu0 %2186
        %2188 = vrot.lane.b32.xlu0 %v2166, 4
        %v2189 = vpop.permute.xlu0 %2188
        %2190 = vrot.lane.b32.xlu0 %v2167, 4
        %v2191 = vpop.permute.xlu0 %2190
        %2192 = vrot.lane.b32.xlu0 %v2168, 4
        %v2193 = vpop.permute.xlu0 %2192
        %2194 = vrot.lane.b32.xlu0 %v2169, 4
        %v2195 = vpop.permute.xlu0 %2194
        %2196 = vrot.lane.b32.xlu0 %v2170, 4
        %v2197 = vpop.permute.xlu0 %2196
        %2198 = vrot.lane.b32.xlu0 %v2171, 4
        %v2199 = vpop.permute.xlu0 %2198
        %2200 = vrot.lane.b32.xlu0 %v2172, 4
        %v2201 = vpop.permute.xlu0 %2200
        %2202 = vrot.lane.b32.xlu0 %v2173, 4
        %v2203 = vpop.permute.xlu0 %2202
        %2204 = vrot.lane.b32.xlu0 %v2174, 4
        %v2205 = vpop.permute.xlu0 %2204
        %2206 = vrot.lane.b32.xlu0 %v2175, 4
        %v2207 = vpop.permute.xlu0 %2206
        %v2208 = vunpack.c.l.b16 %v737
        %v2209 = vunpack.c.l.b16 %v740
        %v2210 = vunpack.c.l.b16 %v744
        %v2211 = vunpack.c.l.b16 %v747
        %v2212 = vunpack.c.l.b16 %v751
        %v2213 = vunpack.c.l.b16 %v754
        %v2214 = vunpack.c.l.b16 %v758
        %v2215 = vunpack.c.l.b16 %v761
        %v2216 = vunpack.c.l.b16 %v765
        %v2217 = vunpack.c.l.b16 %v768
        %v2218 = vunpack.c.l.b16 %v772
        %v2219 = vunpack.c.l.b16 %v775
        %v2220 = vunpack.c.l.b16 %v779
        %v2221 = vunpack.c.l.b16 %v782
        %v2222 = vunpack.c.l.b16 %v786
        %v2223 = vunpack.c.l.b16 %v789
        %v2224 = vunpack.c.l.b16 %v793
        %v2225 = vunpack.c.l.b16 %v796
        %v2226 = vunpack.c.l.b16 %v800
        %v2227 = vunpack.c.l.b16 %v803
        %v2228 = vunpack.c.l.b16 %v807
        %v2229 = vunpack.c.l.b16 %v810
        %v2230 = vunpack.c.l.b16 %v814
        %v2231 = vunpack.c.l.b16 %v817
        %v2232 = vunpack.c.l.b16 %v821
        %v2233 = vunpack.c.l.b16 %v824
        %v2234 = vunpack.c.l.b16 %v828
        %v2235 = vunpack.c.l.b16 %v831
        %v2236 = vunpack.c.l.b16 %v835
        %v2237 = vunpack.c.l.b16 %v838
        %v2238 = vunpack.c.l.b16 %v842
        %v2239 = vunpack.c.l.b16 %v845
        %v2240 = vpack.c.b16 %v2209, %v2208
        %v2241 = vpack.c.b16 %v2211, %v2210
        %v2242 = vpack.c.b16 %v2213, %v2212
        %v2243 = vpack.c.b16 %v2215, %v2214
        %v2244 = vpack.c.b16 %v2217, %v2216
        %v2245 = vpack.c.b16 %v2219, %v2218
        %v2246 = vpack.c.b16 %v2221, %v2220
        %v2247 = vpack.c.b16 %v2223, %v2222
        %v2248 = vpack.c.b16 %v2225, %v2224
        %v2249 = vpack.c.b16 %v2227, %v2226
        %v2250 = vpack.c.b16 %v2229, %v2228
        %v2251 = vpack.c.b16 %v2231, %v2230
        %v2252 = vpack.c.b16 %v2233, %v2232
        %v2253 = vpack.c.b16 %v2235, %v2234
        %v2254 = vpack.c.b16 %v2237, %v2236
        %v2255 = vpack.c.b16 %v2239, %v2238
        %2256 = vrot.lane.b32.xlu0 %v2240, 8
        %v2257 = vpop.permute.xlu0 %2256
        %2258 = vrot.lane.b32.xlu0 %v2241, 8
        %v2259 = vpop.permute.xlu0 %2258
        %2260 = vrot.lane.b32.xlu0 %v2242, 8
        %v2261 = vpop.permute.xlu0 %2260
        %2262 = vrot.lane.b32.xlu0 %v2243, 8
        %v2263 = vpop.permute.xlu0 %2262
        %2264 = vrot.lane.b32.xlu0 %v2244, 8
        %v2265 = vpop.permute.xlu0 %2264
        %2266 = vrot.lane.b32.xlu0 %v2245, 8
        %v2267 = vpop.permute.xlu0 %2266
        %2268 = vrot.lane.b32.xlu0 %v2246, 8
        %v2269 = vpop.permute.xlu0 %2268
        %2270 = vrot.lane.b32.xlu0 %v2247, 8
        %v2271 = vpop.permute.xlu0 %2270
        %2272 = vrot.lane.b32.xlu0 %v2248, 8
        %v2273 = vpop.permute.xlu0 %2272
        %2274 = vrot.lane.b32.xlu0 %v2249, 8
        %v2275 = vpop.permute.xlu0 %2274
        %2276 = vrot.lane.b32.xlu0 %v2250, 8
        %v2277 = vpop.permute.xlu0 %2276
        %2278 = vrot.lane.b32.xlu0 %v2251, 8
        %v2279 = vpop.permute.xlu0 %2278
        %2280 = vrot.lane.b32.xlu0 %v2252, 8
        %v2281 = vpop.permute.xlu0 %2280
        %2282 = vrot.lane.b32.xlu0 %v2253, 8
        %v2283 = vpop.permute.xlu0 %2282
        %2284 = vrot.lane.b32.xlu0 %v2254, 8
        %v2285 = vpop.permute.xlu0 %2284
        %2286 = vrot.lane.b32.xlu0 %v2255, 8
        %v2287 = vpop.permute.xlu0 %2286
        %v2304 = vunpack.c.l.b16 %v847
        %v2305 = vunpack.c.l.b16 %v848
        %v2306 = vunpack.c.l.b16 %v849
        %v2307 = vunpack.c.l.b16 %v850
        %v2308 = vunpack.c.l.b16 %v851
        %v2309 = vunpack.c.l.b16 %v852
        %v2310 = vunpack.c.l.b16 %v853
        %v2311 = vunpack.c.l.b16 %v854
        %v2312 = vunpack.c.l.b16 %v855
        %v2313 = vunpack.c.l.b16 %v856
        %v2314 = vunpack.c.l.b16 %v857
        %v2315 = vunpack.c.l.b16 %v858
        %v2316 = vunpack.c.l.b16 %v859
        %v2317 = vunpack.c.l.b16 %v860
        %v2318 = vunpack.c.l.b16 %v861
        %v2319 = vunpack.c.l.b16 %v862
        %v2320 = vunpack.c.l.b16 %v863
        %v2321 = vunpack.c.l.b16 %v864
        %v2322 = vunpack.c.l.b16 %v865
        %v2323 = vunpack.c.l.b16 %v866
        %v2324 = vunpack.c.l.b16 %v867
        %v2325 = vunpack.c.l.b16 %v868
        %v2326 = vunpack.c.l.b16 %v869
        %v2327 = vunpack.c.l.b16 %v870
        %v2328 = vunpack.c.l.b16 %v871
        %v2329 = vunpack.c.l.b16 %v872
        %v2330 = vunpack.c.l.b16 %v873
        %v2331 = vunpack.c.l.b16 %v874
        %v2332 = vunpack.c.l.b16 %v875
        %v2333 = vunpack.c.l.b16 %v876
        %v2334 = vunpack.c.l.b16 %v877
        %v2335 = vunpack.c.l.b16 %v878
        %v2336 = vpack.c.b16 %v2305, %v2304
        %v2337 = vpack.c.b16 %v2307, %v2306
        %v2338 = vpack.c.b16 %v2309, %v2308
        %v2339 = vpack.c.b16 %v2311, %v2310
        %v2340 = vpack.c.b16 %v2313, %v2312
        %v2341 = vpack.c.b16 %v2315, %v2314
        %v2342 = vpack.c.b16 %v2317, %v2316
        %v2343 = vpack.c.b16 %v2319, %v2318
        %v2344 = vpack.c.b16 %v2321, %v2320
        %v2345 = vpack.c.b16 %v2323, %v2322
        %v2346 = vpack.c.b16 %v2325, %v2324
        %v2347 = vpack.c.b16 %v2327, %v2326
        %v2348 = vpack.c.b16 %v2329, %v2328
        %v2349 = vpack.c.b16 %v2331, %v2330
        %v2350 = vpack.c.b16 %v2333, %v2332
        %v2351 = vpack.c.b16 %v2335, %v2334
        %2352 = vrot.lane.b32.xlu0 %v2336, 12
        %v2353 = vpop.permute.xlu0 %2352
        %2354 = vrot.lane.b32.xlu0 %v2337, 12
        %v2355 = vpop.permute.xlu0 %2354
        %2356 = vrot.lane.b32.xlu0 %v2338, 12
        %v2357 = vpop.permute.xlu0 %2356
        %2358 = vrot.lane.b32.xlu0 %v2339, 12
        %v2359 = vpop.permute.xlu0 %2358
        %2360 = vrot.lane.b32.xlu0 %v2340, 12
        %v2361 = vpop.permute.xlu0 %2360
        %2362 = vrot.lane.b32.xlu0 %v2341, 12
        %v2363 = vpop.permute.xlu0 %2362
        %2364 = vrot.lane.b32.xlu0 %v2342, 12
        %v2365 = vpop.permute.xlu0 %2364
        %2366 = vrot.lane.b32.xlu0 %v2343, 12
        %v2367 = vpop.permute.xlu0 %2366
        %2368 = vrot.lane.b32.xlu0 %v2344, 12
        %v2369 = vpop.permute.xlu0 %2368
        %2370 = vrot.lane.b32.xlu0 %v2345, 12
        %v2371 = vpop.permute.xlu0 %2370
        %2372 = vrot.lane.b32.xlu0 %v2346, 12
        %v2373 = vpop.permute.xlu0 %2372
        %2374 = vrot.lane.b32.xlu0 %v2347, 12
        %v2375 = vpop.permute.xlu0 %2374
        %2376 = vrot.lane.b32.xlu0 %v2348, 12
        %v2377 = vpop.permute.xlu0 %2376
        %2378 = vrot.lane.b32.xlu0 %v2349, 12
        %v2379 = vpop.permute.xlu0 %2378
        %2380 = vrot.lane.b32.xlu0 %v2350, 12
        %v2381 = vpop.permute.xlu0 %2380
        %2382 = vrot.lane.b32.xlu0 %v2351, 12
        %v2383 = vpop.permute.xlu0 %2382
        %v2384 = vunpack.c.l.b16 %v908
        %v2385 = vunpack.c.l.b16 %v918
        %v2386 = vunpack.c.l.b16 %v932
        %v2387 = vunpack.c.l.b16 %v942
        %v2388 = vunpack.c.l.b16 %v956
        %v2389 = vunpack.c.l.b16 %v966
        %v2390 = vunpack.c.l.b16 %v980
        %v2391 = vunpack.c.l.b16 %v990
        %v2392 = vunpack.c.l.b16 %v1004
        %v2393 = vunpack.c.l.b16 %v1014
        %v2394 = vunpack.c.l.b16 %v1028
        %v2395 = vunpack.c.l.b16 %v1038
        %v2396 = vunpack.c.l.b16 %v1052
        %v2397 = vunpack.c.l.b16 %v1062
        %v2398 = vunpack.c.l.b16 %v1076
        %v2399 = vunpack.c.l.b16 %v1086
        %v2400 = vunpack.c.l.b16 %v1100
        %v2401 = vunpack.c.l.b16 %v1110
        %v2402 = vunpack.c.l.b16 %v1124
        %v2403 = vunpack.c.l.b16 %v1134
        %v2404 = vunpack.c.l.b16 %v1148
        %v2405 = vunpack.c.l.b16 %v1158
        %v2406 = vunpack.c.l.b16 %v1172
        %v2407 = vunpack.c.l.b16 %v1182
        %v2408 = vunpack.c.l.b16 %v1196
        %v2409 = vunpack.c.l.b16 %v1206
        %v2410 = vunpack.c.l.b16 %v1220
        %v2411 = vunpack.c.l.b16 %v1230
        %v2412 = vunpack.c.l.b16 %v1244
        %v2413 = vunpack.c.l.b16 %v1254
        %v2414 = vunpack.c.l.b16 %v1268
        %v2415 = vunpack.c.l.b16 %v1278
        %v2416 = vpack.c.b16 %v2385, %v2384
        %v2417 = vpack.c.b16 %v2387, %v2386
        %v2418 = vpack.c.b16 %v2389, %v2388
        %v2419 = vpack.c.b16 %v2391, %v2390
        %v2420 = vpack.c.b16 %v2393, %v2392
        %v2421 = vpack.c.b16 %v2395, %v2394
        %v2422 = vpack.c.b16 %v2397, %v2396
        %v2423 = vpack.c.b16 %v2399, %v2398
        %v2424 = vpack.c.b16 %v2401, %v2400
        %v2425 = vpack.c.b16 %v2403, %v2402
        %v2426 = vpack.c.b16 %v2405, %v2404
        %v2427 = vpack.c.b16 %v2407, %v2406
        %v2428 = vpack.c.b16 %v2409, %v2408
        %v2429 = vpack.c.b16 %v2411, %v2410
        %v2430 = vpack.c.b16 %v2413, %v2412
        %v2431 = vpack.c.b16 %v2415, %v2414
        %2432 = vrot.lane.b32.xlu0 %v2416, 16
        %v2433 = vpop.permute.xlu0 %2432
        %2434 = vrot.lane.b32.xlu0 %v2417, 16
        %v2435 = vpop.permute.xlu0 %2434
        %2436 = vrot.lane.b32.xlu0 %v2418, 16
        %v2437 = vpop.permute.xlu0 %2436
        %2438 = vrot.lane.b32.xlu0 %v2419, 16
        %v2439 = vpop.permute.xlu0 %2438
        %2440 = vrot.lane.b32.xlu0 %v2420, 16
        %v2441 = vpop.permute.xlu0 %2440
        %2442 = vrot.lane.b32.xlu0 %v2421, 16
        %v2443 = vpop.permute.xlu0 %2442
        %2444 = vrot.lane.b32.xlu0 %v2422, 16
        %v2445 = vpop.permute.xlu0 %2444
        %2446 = vrot.lane.b32.xlu0 %v2423, 16
        %v2447 = vpop.permute.xlu0 %2446
        %2448 = vrot.lane.b32.xlu0 %v2424, 16
        %v2449 = vpop.permute.xlu0 %2448
        %2450 = vrot.lane.b32.xlu0 %v2425, 16
        %v2451 = vpop.permute.xlu0 %2450
        %2452 = vrot.lane.b32.xlu0 %v2426, 16
        %v2453 = vpop.permute.xlu0 %2452
        %2454 = vrot.lane.b32.xlu0 %v2427, 16
        %v2455 = vpop.permute.xlu0 %2454
        %2456 = vrot.lane.b32.xlu0 %v2428, 16
        %v2457 = vpop.permute.xlu0 %2456
        %2458 = vrot.lane.b32.xlu0 %v2429, 16
        %v2459 = vpop.permute.xlu0 %2458
        %2460 = vrot.lane.b32.xlu0 %v2430, 16
        %v2461 = vpop.permute.xlu0 %2460
        %2462 = vrot.lane.b32.xlu0 %v2431, 16
        %v2463 = vpop.permute.xlu0 %2462
        %v2464 = vunpack.c.l.b16 %v1346
        %v2465 = vunpack.c.l.b16 %v1349
        %v2466 = vunpack.c.l.b16 %v1353
        %v2467 = vunpack.c.l.b16 %v1356
        %v2468 = vunpack.c.l.b16 %v1360
        %v2469 = vunpack.c.l.b16 %v1363
        %v2470 = vunpack.c.l.b16 %v1367
        %v2471 = vunpack.c.l.b16 %v1370
        %v2472 = vunpack.c.l.b16 %v1374
        %v2473 = vunpack.c.l.b16 %v1377
        %v2474 = vunpack.c.l.b16 %v1381
        %v2475 = vunpack.c.l.b16 %v1384
        %v2476 = vunpack.c.l.b16 %v1388
        %v2477 = vunpack.c.l.b16 %v1391
        %v2478 = vunpack.c.l.b16 %v1395
        %v2479 = vunpack.c.l.b16 %v1398
        %v2480 = vunpack.c.l.b16 %v1402
        %v2481 = vunpack.c.l.b16 %v1405
        %v2482 = vunpack.c.l.b16 %v1409
        %v2483 = vunpack.c.l.b16 %v1412
        %v2484 = vunpack.c.l.b16 %v1416
        %v2485 = vunpack.c.l.b16 %v1419
        %v2486 = vunpack.c.l.b16 %v1423
        %v2487 = vunpack.c.l.b16 %v1426
        %v2488 = vunpack.c.l.b16 %v1430
        %v2489 = vunpack.c.l.b16 %v1433
        %v2490 = vunpack.c.l.b16 %v1437
        %v2491 = vunpack.c.l.b16 %v1440
        %v2492 = vunpack.c.l.b16 %v1444
        %v2493 = vunpack.c.l.b16 %v1447
        %v2494 = vunpack.c.l.b16 %v1451
        %v2495 = vunpack.c.l.b16 %v1454
        %v2496 = vpack.c.b16 %v2465, %v2464
        %v2497 = vpack.c.b16 %v2467, %v2466
        %v2498 = vpack.c.b16 %v2469, %v2468
        %v2499 = vpack.c.b16 %v2471, %v2470
        %v2500 = vpack.c.b16 %v2473, %v2472
        %v2501 = vpack.c.b16 %v2475, %v2474
        %v2502 = vpack.c.b16 %v2477, %v2476
        %v2503 = vpack.c.b16 %v2479, %v2478
        %v2504 = vpack.c.b16 %v2481, %v2480
        %v2505 = vpack.c.b16 %v2483, %v2482
        %v2506 = vpack.c.b16 %v2485, %v2484
        %v2507 = vpack.c.b16 %v2487, %v2486
        %v2508 = vpack.c.b16 %v2489, %v2488
        %v2509 = vpack.c.b16 %v2491, %v2490
        %v2510 = vpack.c.b16 %v2493, %v2492
        %v2511 = vpack.c.b16 %v2495, %v2494
        %2512 = vrot.lane.b32.xlu0 %v2496, 20
        %v2513 = vpop.permute.xlu0 %2512
        %2514 = vrot.lane.b32.xlu0 %v2497, 20
        %v2515 = vpop.permute.xlu0 %2514
        %2516 = vrot.lane.b32.xlu0 %v2498, 20
        %v2517 = vpop.permute.xlu0 %2516
        %2518 = vrot.lane.b32.xlu0 %v2499, 20
        %v2519 = vpop.permute.xlu0 %2518
        %2520 = vrot.lane.b32.xlu0 %v2500, 20
        %v2521 = vpop.permute.xlu0 %2520
        %2522 = vrot.lane.b32.xlu0 %v2501, 20
        %v2523 = vpop.permute.xlu0 %2522
        %2524 = vrot.lane.b32.xlu0 %v2502, 20
        %v2525 = vpop.permute.xlu0 %2524
        %2526 = vrot.lane.b32.xlu0 %v2503, 20
        %v2527 = vpop.permute.xlu0 %2526
        %2528 = vrot.lane.b32.xlu0 %v2504, 20
        %v2529 = vpop.permute.xlu0 %2528
        %2530 = vrot.lane.b32.xlu0 %v2505, 20
        %v2531 = vpop.permute.xlu0 %2530
        %2532 = vrot.lane.b32.xlu0 %v2506, 20
        %v2533 = vpop.permute.xlu0 %2532
        %2534 = vrot.lane.b32.xlu0 %v2507, 20
        %v2535 = vpop.permute.xlu0 %2534
        %2536 = vrot.lane.b32.xlu0 %v2508, 20
        %v2537 = vpop.permute.xlu0 %2536
        %2538 = vrot.lane.b32.xlu0 %v2509, 20
        %v2539 = vpop.permute.xlu0 %2538
        %2540 = vrot.lane.b32.xlu0 %v2510, 20
        %v2541 = vpop.permute.xlu0 %2540
        %2542 = vrot.lane.b32.xlu0 %v2511, 20
        %v2543 = vpop.permute.xlu0 %2542
        %v2560 = vunpack.c.l.b16 %v1456
        %v2561 = vunpack.c.l.b16 %v1457
        %v2562 = vunpack.c.l.b16 %v1458
        %v2563 = vunpack.c.l.b16 %v1459
        %v2564 = vunpack.c.l.b16 %v1460
        %v2565 = vunpack.c.l.b16 %v1461
        %v2566 = vunpack.c.l.b16 %v1462
        %v2567 = vunpack.c.l.b16 %v1463
        %v2568 = vunpack.c.l.b16 %v1464
        %v2569 = vunpack.c.l.b16 %v1465
        %v2570 = vunpack.c.l.b16 %v1466
        %v2571 = vunpack.c.l.b16 %v1467
        %v2572 = vunpack.c.l.b16 %v1468
        %v2573 = vunpack.c.l.b16 %v1469
        %v2574 = vunpack.c.l.b16 %v1470
        %v2575 = vunpack.c.l.b16 %v1471
        %v2576 = vunpack.c.l.b16 %v1472
        %v2577 = vunpack.c.l.b16 %v1473
        %v2578 = vunpack.c.l.b16 %v1474
        %v2579 = vunpack.c.l.b16 %v1475
        %v2580 = vunpack.c.l.b16 %v1476
        %v2581 = vunpack.c.l.b16 %v1477
        %v2582 = vunpack.c.l.b16 %v1478
        %v2583 = vunpack.c.l.b16 %v1479
        %v2584 = vunpack.c.l.b16 %v1480
        %v2585 = vunpack.c.l.b16 %v1481
        %v2586 = vunpack.c.l.b16 %v1482
        %v2587 = vunpack.c.l.b16 %v1483
        %v2588 = vunpack.c.l.b16 %v1484
        %v2589 = vunpack.c.l.b16 %v1485
        %v2590 = vunpack.c.l.b16 %v1486
        %v2591 = vunpack.c.l.b16 %v1487
        %v2592 = vpack.c.b16 %v2561, %v2560
        %v2593 = vpack.c.b16 %v2563, %v2562
        %v2594 = vpack.c.b16 %v2565, %v2564
        %v2595 = vpack.c.b16 %v2567, %v2566
        %v2596 = vpack.c.b16 %v2569, %v2568
        %v2597 = vpack.c.b16 %v2571, %v2570
        %v2598 = vpack.c.b16 %v2573, %v2572
        %v2599 = vpack.c.b16 %v2575, %v2574
        %v2600 = vpack.c.b16 %v2577, %v2576
        %v2601 = vpack.c.b16 %v2579, %v2578
        %v2602 = vpack.c.b16 %v2581, %v2580
        %v2603 = vpack.c.b16 %v2583, %v2582
        %v2604 = vpack.c.b16 %v2585, %v2584
        %v2605 = vpack.c.b16 %v2587, %v2586
        %v2606 = vpack.c.b16 %v2589, %v2588
        %v2607 = vpack.c.b16 %v2591, %v2590
        %2608 = vrot.lane.b32.xlu0 %v2592, 24
        %v2609 = vpop.permute.xlu0 %2608
        %2610 = vrot.lane.b32.xlu0 %v2593, 24
        %v2611 = vpop.permute.xlu0 %2610
        %2612 = vrot.lane.b32.xlu0 %v2594, 24
        %v2613 = vpop.permute.xlu0 %2612
        %2614 = vrot.lane.b32.xlu0 %v2595, 24
        %v2615 = vpop.permute.xlu0 %2614
        %2616 = vrot.lane.b32.xlu0 %v2596, 24
        %v2617 = vpop.permute.xlu0 %2616
        %2618 = vrot.lane.b32.xlu0 %v2597, 24
        %v2619 = vpop.permute.xlu0 %2618
        %2620 = vrot.lane.b32.xlu0 %v2598, 24
        %v2621 = vpop.permute.xlu0 %2620
        %2622 = vrot.lane.b32.xlu0 %v2599, 24
        %v2623 = vpop.permute.xlu0 %2622
        %2624 = vrot.lane.b32.xlu0 %v2600, 24
        %v2625 = vpop.permute.xlu0 %2624
        %2626 = vrot.lane.b32.xlu0 %v2601, 24
        %v2627 = vpop.permute.xlu0 %2626
        %2628 = vrot.lane.b32.xlu0 %v2602, 24
        %v2629 = vpop.permute.xlu0 %2628
        %2630 = vrot.lane.b32.xlu0 %v2603, 24
        %v2631 = vpop.permute.xlu0 %2630
        %2632 = vrot.lane.b32.xlu0 %v2604, 24
        %v2633 = vpop.permute.xlu0 %2632
        %2634 = vrot.lane.b32.xlu0 %v2605, 24
        %v2635 = vpop.permute.xlu0 %2634
        %2636 = vrot.lane.b32.xlu0 %v2606, 24
        %v2637 = vpop.permute.xlu0 %2636
        %2638 = vrot.lane.b32.xlu0 %v2607, 24
        %v2639 = vpop.permute.xlu0 %2638
        %v2640 = vunpack.c.l.b16 %v1517
        %v2641 = vunpack.c.l.b16 %v1527
        %v2642 = vunpack.c.l.b16 %v1541
        %v2643 = vunpack.c.l.b16 %v1551
        %v2644 = vunpack.c.l.b16 %v1565
        %v2645 = vunpack.c.l.b16 %v1575
        %v2646 = vunpack.c.l.b16 %v1589
        %v2647 = vunpack.c.l.b16 %v1599
        %v2648 = vunpack.c.l.b16 %v1613
        %v2649 = vunpack.c.l.b16 %v1623
        %v2650 = vunpack.c.l.b16 %v1637
        %v2651 = vunpack.c.l.b16 %v1647
        %v2652 = vunpack.c.l.b16 %v1661
        %v2653 = vunpack.c.l.b16 %v1671
        %v2654 = vunpack.c.l.b16 %v1685
        %v2655 = vunpack.c.l.b16 %v1695
        %v2656 = vunpack.c.l.b16 %v1709
        %v2657 = vunpack.c.l.b16 %v1719
        %v2658 = vunpack.c.l.b16 %v1733
        %v2659 = vunpack.c.l.b16 %v1743
        %v2660 = vunpack.c.l.b16 %v1757
        %v2661 = vunpack.c.l.b16 %v1767
        %v2662 = vunpack.c.l.b16 %v1781
        %v2663 = vunpack.c.l.b16 %v1791
        %v2664 = vunpack.c.l.b16 %v1805
        %v2665 = vunpack.c.l.b16 %v1815
        %v2666 = vunpack.c.l.b16 %v1829
        %v2667 = vunpack.c.l.b16 %v1839
        %v2668 = vunpack.c.l.b16 %v1853
        %v2669 = vunpack.c.l.b16 %v1863
        %v2670 = vunpack.c.l.b16 %v1877
        %v2671 = vunpack.c.l.b16 %v1887
        %v2672 = vpack.c.b16 %v2641, %v2640
        %v2673 = vpack.c.b16 %v2643, %v2642
        %v2674 = vpack.c.b16 %v2645, %v2644
        %v2675 = vpack.c.b16 %v2647, %v2646
        %v2676 = vpack.c.b16 %v2649, %v2648
        %v2677 = vpack.c.b16 %v2651, %v2650
        %v2678 = vpack.c.b16 %v2653, %v2652
        %v2679 = vpack.c.b16 %v2655, %v2654
        %v2680 = vpack.c.b16 %v2657, %v2656
        %v2681 = vpack.c.b16 %v2659, %v2658
        %v2682 = vpack.c.b16 %v2661, %v2660
        %v2683 = vpack.c.b16 %v2663, %v2662
        %v2684 = vpack.c.b16 %v2665, %v2664
        %v2685 = vpack.c.b16 %v2667, %v2666
        %v2686 = vpack.c.b16 %v2669, %v2668
        %v2687 = vpack.c.b16 %v2671, %v2670
        %2688 = vrot.lane.b32.xlu0 %v2672, 28
        %v2689 = vpop.permute.xlu0 %2688
        %2690 = vrot.lane.b32.xlu0 %v2673, 28
        %v2691 = vpop.permute.xlu0 %2690
        %2692 = vrot.lane.b32.xlu0 %v2674, 28
        %v2693 = vpop.permute.xlu0 %2692
        %2694 = vrot.lane.b32.xlu0 %v2675, 28
        %v2695 = vpop.permute.xlu0 %2694
        %2696 = vrot.lane.b32.xlu0 %v2676, 28
        %v2697 = vpop.permute.xlu0 %2696
        %2698 = vrot.lane.b32.xlu0 %v2677, 28
        %v2699 = vpop.permute.xlu0 %2698
        %2700 = vrot.lane.b32.xlu0 %v2678, 28
        %v2701 = vpop.permute.xlu0 %2700
        %2702 = vrot.lane.b32.xlu0 %v2679, 28
        %v2703 = vpop.permute.xlu0 %2702
        %2704 = vrot.lane.b32.xlu0 %v2680, 28
        %v2705 = vpop.permute.xlu0 %2704
        %2706 = vrot.lane.b32.xlu0 %v2681, 28
        %v2707 = vpop.permute.xlu0 %2706
        %2708 = vrot.lane.b32.xlu0 %v2682, 28
        %v2709 = vpop.permute.xlu0 %2708
        %2710 = vrot.lane.b32.xlu0 %v2683, 28
        %v2711 = vpop.permute.xlu0 %2710
        %2712 = vrot.lane.b32.xlu0 %v2684, 28
        %v2713 = vpop.permute.xlu0 %2712
        %2714 = vrot.lane.b32.xlu0 %v2685, 28
        %v2715 = vpop.permute.xlu0 %2714
        %2716 = vrot.lane.b32.xlu0 %v2686, 28
        %v2717 = vpop.permute.xlu0 %2716
        %2718 = vrot.lane.b32.xlu0 %v2687, 28
        %v2719 = vpop.permute.xlu0 %2718
        %v2720 = vunpack.c.l.b16 %v1955
        %v2721 = vunpack.c.l.b16 %v1958
        %v2722 = vunpack.c.l.b16 %v1962
        %v2723 = vunpack.c.l.b16 %v1965
        %v2724 = vunpack.c.l.b16 %v1969
        %v2725 = vunpack.c.l.b16 %v1972
        %v2726 = vunpack.c.l.b16 %v1976
        %v2727 = vunpack.c.l.b16 %v1979
        %v2728 = vunpack.c.l.b16 %v1983
        %v2729 = vunpack.c.l.b16 %v1986
        %v2730 = vunpack.c.l.b16 %v1990
        %v2731 = vunpack.c.l.b16 %v1993
        %v2732 = vunpack.c.l.b16 %v1997
        %v2733 = vunpack.c.l.b16 %v2000
        %v2734 = vunpack.c.l.b16 %v2004
        %v2735 = vunpack.c.l.b16 %v2007
        %v2736 = vunpack.c.l.b16 %v2011
        %v2737 = vunpack.c.l.b16 %v2014
        %v2738 = vunpack.c.l.b16 %v2018
        %v2739 = vunpack.c.l.b16 %v2021
        %v2740 = vunpack.c.l.b16 %v2025
        %v2741 = vunpack.c.l.b16 %v2028
        %v2742 = vunpack.c.l.b16 %v2032
        %v2743 = vunpack.c.l.b16 %v2035
        %v2744 = vunpack.c.l.b16 %v2039
        %v2745 = vunpack.c.l.b16 %v2042
        %v2746 = vunpack.c.l.b16 %v2046
        %v2747 = vunpack.c.l.b16 %v2049
        %v2748 = vunpack.c.l.b16 %v2053
        %v2749 = vunpack.c.l.b16 %v2056
        %v2750 = vunpack.c.l.b16 %v2060
        %v2751 = vunpack.c.l.b16 %v2063
        %v2752 = vpack.c.b16 %v2721, %v2720
        %v2753 = vpack.c.b16 %v2723, %v2722
        %v2754 = vpack.c.b16 %v2725, %v2724
        %v2755 = vpack.c.b16 %v2727, %v2726
        %v2756 = vpack.c.b16 %v2729, %v2728
        %v2757 = vpack.c.b16 %v2731, %v2730
        %v2758 = vpack.c.b16 %v2733, %v2732
        %v2759 = vpack.c.b16 %v2735, %v2734
        %v2760 = vpack.c.b16 %v2737, %v2736
        %v2761 = vpack.c.b16 %v2739, %v2738
        %v2762 = vpack.c.b16 %v2741, %v2740
        %v2763 = vpack.c.b16 %v2743, %v2742
        %v2764 = vpack.c.b16 %v2745, %v2744
        %v2765 = vpack.c.b16 %v2747, %v2746
        %v2766 = vpack.c.b16 %v2749, %v2748
        %v2767 = vpack.c.b16 %v2751, %v2750
        %2768 = vrot.lane.b32.xlu0 %v2752, 32
        %v2769 = vpop.permute.xlu0 %2768
        %2770 = vrot.lane.b32.xlu0 %v2753, 32
        %v2771 = vpop.permute.xlu0 %2770
        %2772 = vrot.lane.b32.xlu0 %v2754, 32
        %v2773 = vpop.permute.xlu0 %2772
        %2774 = vrot.lane.b32.xlu0 %v2755, 32
        %v2775 = vpop.permute.xlu0 %2774
        %2776 = vrot.lane.b32.xlu0 %v2756, 32
        %v2777 = vpop.permute.xlu0 %2776
        %2778 = vrot.lane.b32.xlu0 %v2757, 32
        %v2779 = vpop.permute.xlu0 %2778
        %2780 = vrot.lane.b32.xlu0 %v2758, 32
        %v2781 = vpop.permute.xlu0 %2780
        %2782 = vrot.lane.b32.xlu0 %v2759, 32
        %v2783 = vpop.permute.xlu0 %2782
        %2784 = vrot.lane.b32.xlu0 %v2760, 32
        %v2785 = vpop.permute.xlu0 %2784
        %2786 = vrot.lane.b32.xlu0 %v2761, 32
        %v2787 = vpop.permute.xlu0 %2786
        %2788 = vrot.lane.b32.xlu0 %v2762, 32
        %v2789 = vpop.permute.xlu0 %2788
        %2790 = vrot.lane.b32.xlu0 %v2763, 32
        %v2791 = vpop.permute.xlu0 %2790
        %2792 = vrot.lane.b32.xlu0 %v2764, 32
        %v2793 = vpop.permute.xlu0 %2792
        %2794 = vrot.lane.b32.xlu0 %v2765, 32
        %v2795 = vpop.permute.xlu0 %2794
        %2796 = vrot.lane.b32.xlu0 %v2766, 32
        %v2797 = vpop.permute.xlu0 %2796
        %2798 = vrot.lane.b32.xlu0 %v2767, 32
        %v2799 = vpop.permute.xlu0 %2798
        %vm2800 = vcmask 31744
        %v2803 = vsel %vm2800, %v2112, %v2177
        %v2806 = vsel %vm2800, %v2113, %v2179
        %v2809 = vsel %vm2800, %v2114, %v2181
        %v2812 = vsel %vm2800, %v2115, %v2183
        %v2815 = vsel %vm2800, %v2116, %v2185
        %v2818 = vsel %vm2800, %v2117, %v2187
        %v2821 = vsel %vm2800, %v2118, %v2189
        %v2824 = vsel %vm2800, %v2119, %v2191
        %v2827 = vsel %vm2800, %v2120, %v2193
        %v2830 = vsel %vm2800, %v2121, %v2195
        %v2833 = vsel %vm2800, %v2122, %v2197
        %v2836 = vsel %vm2800, %v2123, %v2199
        %v2839 = vsel %vm2800, %v2124, %v2201
        %v2842 = vsel %vm2800, %v2125, %v2203
        %v2845 = vsel %vm2800, %v2126, %v2205
        %v2848 = vsel %vm2800, %v2127, %v2207
        %vm2849 = vcmask 64512
        %v2851 = vsel %vm2849, %v2803, %v2257
        %v2853 = vsel %vm2849, %v2806, %v2259
        %v2855 = vsel %vm2849, %v2809, %v2261
        %v2857 = vsel %vm2849, %v2812, %v2263
        %v2859 = vsel %vm2849, %v2815, %v2265
        %v2861 = vsel %vm2849, %v2818, %v2267
        %v2863 = vsel %vm2849, %v2821, %v2269
        %v2865 = vsel %vm2849, %v2824, %v2271
        %v2867 = vsel %vm2849, %v2827, %v2273
        %v2869 = vsel %vm2849, %v2830, %v2275
        %v2871 = vsel %vm2849, %v2833, %v2277
        %v2873 = vsel %vm2849, %v2836, %v2279
        %v2875 = vsel %vm2849, %v2839, %v2281
        %v2877 = vsel %vm2849, %v2842, %v2283
        %v2879 = vsel %vm2849, %v2845, %v2285
        %v2881 = vsel %vm2849, %v2848, %v2287
        %vm2882 = vcmask 97280
        %v2884 = vsel %vm2882, %v2851, %v2353
        %v2886 = vsel %vm2882, %v2853, %v2355
        %v2888 = vsel %vm2882, %v2855, %v2357
        %v2890 = vsel %vm2882, %v2857, %v2359
        %v2892 = vsel %vm2882, %v2859, %v2361
        %v2894 = vsel %vm2882, %v2861, %v2363
        %v2896 = vsel %vm2882, %v2863, %v2365
        %v2898 = vsel %vm2882, %v2865, %v2367
        %v2900 = vsel %vm2882, %v2867, %v2369
        %v2902 = vsel %vm2882, %v2869, %v2371
        %v2904 = vsel %vm2882, %v2871, %v2373
        %v2906 = vsel %vm2882, %v2873, %v2375
        %v2908 = vsel %vm2882, %v2875, %v2377
        %v2910 = vsel %vm2882, %v2877, %v2379
        %v2912 = vsel %vm2882, %v2879, %v2381
        %v2914 = vsel %vm2882, %v2881, %v2383
        %vm2915 = vcmask 130048
        %v2917 = vsel %vm2915, %v2884, %v2433
        %v2919 = vsel %vm2915, %v2886, %v2435
        %v2921 = vsel %vm2915, %v2888, %v2437
        %v2923 = vsel %vm2915, %v2890, %v2439
        %v2925 = vsel %vm2915, %v2892, %v2441
        %v2927 = vsel %vm2915, %v2894, %v2443
        %v2929 = vsel %vm2915, %v2896, %v2445
        %v2931 = vsel %vm2915, %v2898, %v2447
        %v2933 = vsel %vm2915, %v2900, %v2449
        %v2935 = vsel %vm2915, %v2902, %v2451
        %v2937 = vsel %vm2915, %v2904, %v2453
        %v2939 = vsel %vm2915, %v2906, %v2455
        %v2941 = vsel %vm2915, %v2908, %v2457
        %v2943 = vsel %vm2915, %v2910, %v2459
        %v2945 = vsel %vm2915, %v2912, %v2461
        %v2947 = vsel %vm2915, %v2914, %v2463
        %vm2948 = vcmask 162816
        %v2950 = vsel %vm2948, %v2917, %v2513
        %v2952 = vsel %vm2948, %v2919, %v2515
        %v2954 = vsel %vm2948, %v2921, %v2517
        %v2956 = vsel %vm2948, %v2923, %v2519
        %v2958 = vsel %vm2948, %v2925, %v2521
        %v2960 = vsel %vm2948, %v2927, %v2523
        %v2962 = vsel %vm2948, %v2929, %v2525
        %v2964 = vsel %vm2948, %v2931, %v2527
        %v2966 = vsel %vm2948, %v2933, %v2529
        %v2968 = vsel %vm2948, %v2935, %v2531
        %v2970 = vsel %vm2948, %v2937, %v2533
        %v2972 = vsel %vm2948, %v2939, %v2535
        %v2974 = vsel %vm2948, %v2941, %v2537
        %v2976 = vsel %vm2948, %v2943, %v2539
        %v2978 = vsel %vm2948, %v2945, %v2541
        %v2980 = vsel %vm2948, %v2947, %v2543
        %vm2981 = vcmask 195584
        %v2983 = vsel %vm2981, %v2950, %v2609
        %v2985 = vsel %vm2981, %v2952, %v2611
        %v2987 = vsel %vm2981, %v2954, %v2613
        %v2989 = vsel %vm2981, %v2956, %v2615
        %v2991 = vsel %vm2981, %v2958, %v2617
        %v2993 = vsel %vm2981, %v2960, %v2619
        %v2995 = vsel %vm2981, %v2962, %v2621
        %v2997 = vsel %vm2981, %v2964, %v2623
        %v2999 = vsel %vm2981, %v2966, %v2625
        %v3001 = vsel %vm2981, %v2968, %v2627
        %v3003 = vsel %vm2981, %v2970, %v2629
        %v3005 = vsel %vm2981, %v2972, %v2631
        %v3007 = vsel %vm2981, %v2974, %v2633
        %v3009 = vsel %vm2981, %v2976, %v2635
        %v3011 = vsel %vm2981, %v2978, %v2637
        %v3013 = vsel %vm2981, %v2980, %v2639
        %vm3014 = vcmask 228352
        %v3016 = vsel %vm3014, %v2983, %v2689
        %v3018 = vsel %vm3014, %v2985, %v2691
        %v3020 = vsel %vm3014, %v2987, %v2693
        %v3022 = vsel %vm3014, %v2989, %v2695
        %v3024 = vsel %vm3014, %v2991, %v2697
        %v3026 = vsel %vm3014, %v2993, %v2699
        %v3028 = vsel %vm3014, %v2995, %v2701
        %v3030 = vsel %vm3014, %v2997, %v2703
        %v3032 = vsel %vm3014, %v2999, %v2705
        %v3034 = vsel %vm3014, %v3001, %v2707
        %v3036 = vsel %vm3014, %v3003, %v2709
        %v3038 = vsel %vm3014, %v3005, %v2711
        %v3040 = vsel %vm3014, %v3007, %v2713
        %v3042 = vsel %vm3014, %v3009, %v2715
        %v3044 = vsel %vm3014, %v3011, %v2717
        %v3046 = vsel %vm3014, %v3013, %v2719
        %vm3047 = vcmask 261120
        %v3049 = vsel %vm3047, %v3016, %v2769
        %v3052 = vsel %vm3047, %v3018, %v2771
        %v3055 = vsel %vm3047, %v3020, %v2773
        %v3058 = vsel %vm3047, %v3022, %v2775
        %v3061 = vsel %vm3047, %v3024, %v2777
        %v3064 = vsel %vm3047, %v3026, %v2779
        %v3067 = vsel %vm3047, %v3028, %v2781
        %v3070 = vsel %vm3047, %v3030, %v2783
        %v3073 = vsel %vm3047, %v3032, %v2785
        %v3076 = vsel %vm3047, %v3034, %v2787
        %v3079 = vsel %vm3047, %v3036, %v2789
        %v3082 = vsel %vm3047, %v3038, %v2791
        %v3085 = vsel %vm3047, %v3040, %v2793
        %v3088 = vsel %vm3047, %v3042, %v2795
        %v3091 = vsel %vm3047, %v3044, %v2797
        %v3094 = vsel %vm3047, %v3046, %v2799
        %vm3096 = vcmask 293888
        %3097 = vst.msk [vmem:[#allocation2] sm:$0xff] %vm3096, %v3049
        %3098 = vst.msk [vmem:[#allocation2 + $0x8] sm:$0xff] %vm3096, %v3052
        %3099 = vst.msk [vmem:[#allocation2 + $0x10] sm:$0xff] %vm3096, %v3055
        %3100 = vst.msk [vmem:[#allocation2 + $0x18] sm:$0xff] %vm3096, %v3058
        %3101 = vst.msk [vmem:[#allocation2 + $0x20] sm:$0xff] %vm3096, %v3061
        %3102 = vst.msk [vmem:[#allocation2 + $0x28] sm:$0xff] %vm3096, %v3064
        %3103 = vst.msk [vmem:[#allocation2 + $0x30] sm:$0xff] %vm3096, %v3067
        %3104 = vst.msk [vmem:[#allocation2 + $0x38] sm:$0xff] %vm3096, %v3070
        %3105 = vst.msk [vmem:[#allocation2 + $0x40] sm:$0xff] %vm3096, %v3073
        %3106 = vst.msk [vmem:[#allocation2 + $0x48] sm:$0xff] %vm3096, %v3076
        %3107 = vst.msk [vmem:[#allocation2 + $0x50] sm:$0xff] %vm3096, %v3079
        %3108 = vst.msk [vmem:[#allocation2 + $0x58] sm:$0xff] %vm3096, %v3082
        %3109 = vst.msk [vmem:[#allocation2 + $0x60] sm:$0xff] %vm3096, %v3085
        %3110 = vst.msk [vmem:[#allocation2 + $0x68] sm:$0xff] %vm3096, %v3088
        %3111 = vst.msk [vmem:[#allocation2 + $0x70] sm:$0xff] %vm3096, %v3091
        %3112 = vst.msk [vmem:[#allocation2 + $0x78] sm:$0xff] %vm3096, %v3094
      $region32: #{residual_block.3} parent=27 // pred_fallthru
        _
      %v3113 = vld [vmem:[#allocation2] sm:$0xff]
      %v3114 = vld [vmem:[#allocation2 + $0x8] sm:$0xff]
      %v3115 = vld [vmem:[#allocation2 + $0x10] sm:$0xff]
      %v3116 = vld [vmem:[#allocation2 + $0x18] sm:$0xff]
      %v3117 = vld [vmem:[#allocation2 + $0x20] sm:$0xff]
      %v3118 = vld [vmem:[#allocation2 + $0x28] sm:$0xff]
      %v3119 = vld [vmem:[#allocation2 + $0x30] sm:$0xff]
      %v3120 = vld [vmem:[#allocation2 + $0x38] sm:$0xff]
      %v3121 = vld [vmem:[#allocation2 + $0x40] sm:$0xff]
      %v3122 = vld [vmem:[#allocation2 + $0x48] sm:$0xff]
      %v3123 = vld [vmem:[#allocation2 + $0x50] sm:$0xff]
      %v3124 = vld [vmem:[#allocation2 + $0x58] sm:$0xff]
      %v3125 = vld [vmem:[#allocation2 + $0x60] sm:$0xff]
      %v3126 = vld [vmem:[#allocation2 + $0x68] sm:$0xff]
      %v3127 = vld [vmem:[#allocation2 + $0x70] sm:$0xff]
      %v3128 = vld [vmem:[#allocation2 + $0x78] sm:$0xff]
      %v3129 = vld [vmem:[%s211] sm:$0xf]
      %v3130 = vld [vmem:[%s211 + $0x4] sm:$0xf]
      %v3131 = vld [vmem:[%s211 + $0x8] sm:$0xf]
      %v3132 = vld [vmem:[%s211 + $0xc] sm:$0xf]
      %v3133 = vld [vmem:[%s211 + $0x10] sm:$0x3]
      %v3139 = vunpack.c.l.b16 %v3129
      %v3140 = vunpack.c.l.b16 %v3130
      %v3141 = vunpack.c.l.b16 %v3131
      %v3142 = vunpack.c.l.b16 %v3132
      %v3143 = vunpack.c.l.b16 %v3133
      %v3144 = vpack.c.b16 %v3140, %v3139
      %v3145 = vpack.c.b16 %v3142, %v3141
      %v3146 = vpack.c.b16 %v3143, %v3143
      %vm3149 = vcmask 293888
      %v3151 = vsel %vm3149, %v3113, 0
      %v3154 = vsel %vm3149, %v3114, 0
      %v3157 = vsel %vm3149, %v3115, 0
      %v3160 = vsel %vm3149, %v3116, 0
      %v3163 = vsel %vm3149, %v3117, 0
      %v3166 = vsel %vm3149, %v3118, 0
      %v3169 = vsel %vm3149, %v3119, 0
      %v3172 = vsel %vm3149, %v3120, 0
      %v3175 = vsel %vm3149, %v3121, 0
      %v3178 = vsel %vm3149, %v3122, 0
      %v3181 = vsel %vm3149, %v3123, 0
      %v3184 = vsel %vm3149, %v3124, 0
      %v3187 = vsel %vm3149, %v3125, 0
      %v3190 = vsel %vm3149, %v3126, 0
      %v3193 = vsel %vm3149, %v3127, 0
      %v3196 = vsel %vm3149, %v3128, 0
      %vm3198 = vcmask 1041408
      %v3200 = vsel %vm3198, %v3146, 0
      %3202 = vmatprep.subr.bf16.mxu0 0
      %3203 = vmatpush1.bf16.msra.mxu0 %v3144
      %3204 = vmatprep.subr.bf16.mxu0 0
      %3205 = vmatpush1.bf16.msra.mxu0 %v3145
      %3206 = vmatprep.subr.bf16.mxu0 0
      %3207 = vmatpush1.bf16.msra.mxu0 %v3200
      %3208 = vmatprep.subr.bf16.mxu0 0
      %3209 = vmatpush1.bf16.msra.mxu0 0
      %3210 = vmatprep.subr.bf16.mxu0 0
      %3211 = vmatpush1.bf16.msra.mxu0 0
      %3212 = vmatprep.subr.bf16.mxu0 0
      %3213 = vmatpush1.bf16.msra.mxu0 0
      %3214 = vmatprep.subr.bf16.mxu0 0
      %3215 = vmatpush1.bf16.msra.mxu0 0
      %3216 = vmatprep.subr.bf16.mxu0 0
      %3217 = vmatpush1.bf16.msra.mxu0 0
      %3218 = vmatprep.subr.bf16.mxu0 0
      %3219 = vmatpush1.bf16.msra.mxu0 0
      %3220 = vmatprep.subr.bf16.mxu0 0
      %3221 = vmatpush1.bf16.msra.mxu0 0
      %3222 = vmatprep.subr.bf16.mxu0 0
      %3223 = vmatpush1.bf16.msra.mxu0 0
      %3224 = vmatprep.subr.bf16.mxu0 0
      %3225 = vmatpush1.bf16.msra.mxu0 0
      %3226 = vmatprep.subr.bf16.mxu0 0
      %3227 = vmatpush1.bf16.msra.mxu0 0
      %3228 = vmatprep.subr.bf16.mxu0 0
      %3229 = vmatpush1.bf16.msra.mxu0 0
      %3230 = vmatprep.subr.bf16.mxu0 0
      %3231 = vmatpush1.bf16.msra.mxu0 0
      %3232 = vmatprep.subr.bf16.mxu0 0
      %3233 = vmatpush1.bf16.msra.mxu0 0
      %3234 = vmatprep.mubr.bf16.mxu0 0
      %3235 = vmatmul.mubr.bf16.gmra.mrb[0].mxu0 %v3151
      %v3236 = vpop.f32.mrb[0].mxu0
      %v3237 = vadd.f32 0.0, %v3236
      %v3238 = vpop.f32.mrb[0].mxu0
      %v3239 = vpop.f32.mrb[0].mxu0
      %v3240 = vadd.f32 0.0, %v3239
      %v3241 = vpop.f32.mrb[0].mxu0
      %3242 = vmatprep.mubr.bf16.mxu0 0
      %3243 = vmatmul.mubr.bf16.gmra.mrb[0].mxu0 %v3154
      %v3244 = vpop.f32.mrb[0].mxu0
      %v3245 = vadd.f32 0.0, %v3244
      %v3246 = vpop.f32.mrb[0].mxu0
      %v3247 = vpop.f32.mrb[0].mxu0
      %v3248 = vadd.f32 0.0, %v3247
      %v3249 = vpop.f32.mrb[0].mxu0
      %3250 = vmatprep.mubr.bf16.mxu0 0
      %3251 = vmatmul.mubr.bf16.gmra.mrb[0].mxu0 %v3157
      %v3252 = vpop.f32.mrb[0].mxu0
      %v3253 = vadd.f32 0.0, %v3252
      %v3254 = vpop.f32.mrb[0].mxu0
      %v3255 = vpop.f32.mrb[0].mxu0
      %v3256 = vadd.f32 0.0, %v3255
      %v3257 = vpop.f32.mrb[0].mxu0
      %3258 = vmatprep.mubr.bf16.mxu0 0
      %3259 = vmatmul.mubr.bf16.gmra.mrb[0].mxu0 %v3160
      %v3260 = vpop.f32.mrb[0].mxu0
      %v3261 = vadd.f32 0.0, %v3260
      %v3262 = vpop.f32.mrb[0].mxu0
      %v3263 = vpop.f32.mrb[0].mxu0
      %v3264 = vadd.f32 0.0, %v3263
      %v3265 = vpop.f32.mrb[0].mxu0
      %3266 = vmatprep.mubr.bf16.mxu0 0
      %3267 = vmatmul.mubr.bf16.gmra.mrb[0].mxu0 %v3163
      %v3268 = vpop.f32.mrb[0].mxu0
      %v3269 = vadd.f32 0.0, %v3268
      %v3270 = vpop.f32.mrb[0].mxu0
      %v3271 = vpop.f32.mrb[0].mxu0
      %v3272 = vadd.f32 0.0, %v3271
      %v3273 = vpop.f32.mrb[0].mxu0
      %3274 = vmatprep.mubr.bf16.mxu0 0
      %3275 = vmatmul.mubr.bf16.gmra.mrb[0].mxu0 %v3166
      %v3276 = vpop.f32.mrb[0].mxu0
      %v3277 = vadd.f32 0.0, %v3276
      %v3278 = vpop.f32.mrb[0].mxu0
      %v3279 = vpop.f32.mrb[0].mxu0
      %v3280 = vadd.f32 0.0, %v3279
      %v3281 = vpop.f32.mrb[0].mxu0
      %3282 = vmatprep.mubr.bf16.mxu0 0
      %3283 = vmatmul.mubr.bf16.gmra.mrb[0].mxu0 %v3169
      %v3284 = vpop.f32.mrb[0].mxu0
      %v3285 = vadd.f32 0.0, %v3284
      %v3286 = vpop.f32.mrb[0].mxu0
      %v3287 = vpop.f32.mrb[0].mxu0
      %v3288 = vadd.f32 0.0, %v3287
      %v3289 = vpop.f32.mrb[0].mxu0
      %3290 = vmatprep.mubr.bf16.mxu0 0
      %3291 = vmatmul.mubr.bf16.gmra.mrb[0].mxu0 %v3172
      %v3292 = vpop.f32.mrb[0].mxu0
      %v3293 = vadd.f32 0.0, %v3292
      %v3294 = vpop.f32.mrb[0].mxu0
      %v3295 = vpop.f32.mrb[0].mxu0
      %v3296 = vadd.f32 0.0, %v3295
      %v3297 = vpop.f32.mrb[0].mxu0
      %3298 = vmatprep.mubr.bf16.mxu0 0
      %3299 = vmatmul.mubr.bf16.gmra.mrb[0].mxu0 %v3175
      %v3300 = vpop.f32.mrb[0].mxu0
      %v3301 = vadd.f32 0.0, %v3300
      %v3302 = vpop.f32.mrb[0].mxu0
      %v3303 = vpop.f32.mrb[0].mxu0
      %v3304 = vadd.f32 0.0, %v3303
      %v3305 = vpop.f32.mrb[0].mxu0
      %3306 = vmatprep.mubr.bf16.mxu0 0
      %3307 = vmatmul.mubr.bf16.gmra.mrb[0].mxu0 %v3178
      %v3308 = vpop.f32.mrb[0].mxu0
      %v3309 = vadd.f32 0.0, %v3308
      %v3310 = vpop.f32.mrb[0].mxu0
      %v3311 = vpop.f32.mrb[0].mxu0
      %v3312 = vadd.f32 0.0, %v3311
      %v3313 = vpop.f32.mrb[0].mxu0
      %3314 = vmatprep.mubr.bf16.mxu0 0
      %3315 = vmatmul.mubr.bf16.gmra.mrb[0].mxu0 %v3181
      %v3316 = vpop.f32.mrb[0].mxu0
      %v3317 = vadd.f32 0.0, %v3316
      %v3318 = vpop.f32.mrb[0].mxu0
      %v3319 = vpop.f32.mrb[0].mxu0
      %v3320 = vadd.f32 0.0, %v3319
      %v3321 = vpop.f32.mrb[0].mxu0
      %3322 = vmatprep.mubr.bf16.mxu0 0
      %3323 = vmatmul.mubr.bf16.gmra.mrb[0].mxu0 %v3184
      %v3324 = vpop.f32.mrb[0].mxu0
      %v3325 = vadd.f32 0.0, %v3324
      %v3326 = vpop.f32.mrb[0].mxu0
      %v3327 = vpop.f32.mrb[0].mxu0
      %v3328 = vadd.f32 0.0, %v3327
      %v3329 = vpop.f32.mrb[0].mxu0
      %3330 = vmatprep.mubr.bf16.mxu0 0
      %3331 = vmatmul.mubr.bf16.gmra.mrb[0].mxu0 %v3187
      %v3332 = vpop.f32.mrb[0].mxu0
      %v3333 = vadd.f32 0.0, %v3332
      %v3334 = vpop.f32.mrb[0].mxu0
      %v3335 = vpop.f32.mrb[0].mxu0
      %v3336 = vadd.f32 0.0, %v3335
      %v3337 = vpop.f32.mrb[0].mxu0
      %3338 = vmatprep.mubr.bf16.mxu0 0
      %3339 = vmatmul.mubr.bf16.gmra.mrb[0].mxu0 %v3190
      %v3340 = vpop.f32.mrb[0].mxu0
      %v3341 = vadd.f32 0.0, %v3340
      %v3342 = vpop.f32.mrb[0].mxu0
      %v3343 = vpop.f32.mrb[0].mxu0
      %v3344 = vadd.f32 0.0, %v3343
      %v3345 = vpop.f32.mrb[0].mxu0
      %3346 = vmatprep.mubr.bf16.mxu0 0
      %3347 = vmatmul.mubr.bf16.gmra.mrb[0].mxu0 %v3193
      %v3348 = vpop.f32.mrb[0].mxu0
      %v3349 = vadd.f32 0.0, %v3348
      %v3350 = vpop.f32.mrb[0].mxu0
      %v3351 = vpop.f32.mrb[0].mxu0
      %v3352 = vadd.f32 0.0, %v3351
      %v3353 = vpop.f32.mrb[0].mxu0
      %3354 = vmatprep.mubr.bf16.mxu0 0
      %3355 = vmatmul.mubr.bf16.gmra.mrb[0].mxu0 %v3196
      %v3356 = vpop.f32.mrb[0].mxu0
      %v3357 = vadd.f32 0.0, %v3356
      %v3358 = vpop.f32.mrb[0].mxu0
      %v3359 = vpop.f32.mrb[0].mxu0
      %v3360 = vadd.f32 0.0, %v3359
      %v3361 = vpop.f32.mrb[0].mxu0
      %3362 = vdwg.mxu0
      %v3363 = vpack.c.bf16 %v3240, %v3237
      %v3364 = vpack.c.bf16 %v3248, %v3245
      %v3365 = vpack.c.bf16 %v3256, %v3253
      %v3366 = vpack.c.bf16 %v3264, %v3261
      %v3367 = vpack.c.bf16 %v3272, %v3269
      %v3368 = vpack.c.bf16 %v3280, %v3277
      %v3369 = vpack.c.bf16 %v3288, %v3285
      %v3370 = vpack.c.bf16 %v3296, %v3293
      %v3371 = vpack.c.bf16 %v3304, %v3301
      %v3372 = vpack.c.bf16 %v3312, %v3309
      %v3373 = vpack.c.bf16 %v3320, %v3317
      %v3374 = vpack.c.bf16 %v3328, %v3325
      %v3375 = vpack.c.bf16 %v3336, %v3333
      %v3376 = vpack.c.bf16 %v3344, %v3341
      %v3377 = vpack.c.bf16 %v3352, %v3349
      %v3378 = vpack.c.bf16 %v3360, %v3357
      %v3395 = vunpack.c.l.b16 %v3363
      %v3396 = vunpack.c.h.b16 %v3363
      %v3397 = vunpack.c.l.b16 %v3364
      %v3398 = vunpack.c.h.b16 %v3364
      %v3399 = vunpack.c.l.b16 %v3365
      %v3400 = vunpack.c.h.b16 %v3365
      %v3401 = vunpack.c.l.b16 %v3366
      %v3402 = vunpack.c.h.b16 %v3366
      %v3403 = vunpack.c.l.b16 %v3367
      %v3404 = vunpack.c.h.b16 %v3367
      %v3405 = vunpack.c.l.b16 %v3368
      %v3406 = vunpack.c.h.b16 %v3368
      %v3407 = vunpack.c.l.b16 %v3369
      %v3408 = vunpack.c.h.b16 %v3369
      %v3409 = vunpack.c.l.b16 %v3370
      %v3410 = vunpack.c.h.b16 %v3370
      %v3411 = vunpack.c.l.b16 %v3371
      %v3412 = vunpack.c.h.b16 %v3371
      %v3413 = vunpack.c.l.b16 %v3372
      %v3414 = vunpack.c.h.b16 %v3372
      %v3415 = vunpack.c.l.b16 %v3373
      %v3416 = vunpack.c.h.b16 %v3373
      %v3417 = vunpack.c.l.b16 %v3374
      %v3418 = vunpack.c.h.b16 %v3374
      %v3419 = vunpack.c.l.b16 %v3375
      %v3420 = vunpack.c.h.b16 %v3375
      %v3421 = vunpack.c.l.b16 %v3376
      %v3422 = vunpack.c.h.b16 %v3376
      %v3423 = vunpack.c.l.b16 %v3377
      %v3424 = vunpack.c.h.b16 %v3377
      %v3425 = vunpack.c.l.b16 %v3378
      %v3426 = vunpack.c.h.b16 %v3378
      %v3427 = vpack.c.b16 %v3395, %v3395
      %v3428 = vpack.c.b16 %v3396, %v3396
      %v3429 = vpack.c.b16 %v3397, %v3397
      %v3430 = vpack.c.b16 %v3398, %v3398
      %v3431 = vpack.c.b16 %v3399, %v3399
      %v3432 = vpack.c.b16 %v3400, %v3400
      %v3433 = vpack.c.b16 %v3401, %v3401
      %v3434 = vpack.c.b16 %v3402, %v3402
      %v3435 = vpack.c.b16 %v3403, %v3403
      %v3436 = vpack.c.b16 %v3404, %v3404
      %v3437 = vpack.c.b16 %v3405, %v3405
      %v3438 = vpack.c.b16 %v3406, %v3406
      %v3439 = vpack.c.b16 %v3407, %v3407
      %v3440 = vpack.c.b16 %v3408, %v3408
      %v3441 = vpack.c.b16 %v3409, %v3409
      %v3442 = vpack.c.b16 %v3410, %v3410
      %v3443 = vpack.c.b16 %v3411, %v3411
      %v3444 = vpack.c.b16 %v3412, %v3412
      %v3445 = vpack.c.b16 %v3413, %v3413
      %v3446 = vpack.c.b16 %v3414, %v3414
      %v3447 = vpack.c.b16 %v3415, %v3415
      %v3448 = vpack.c.b16 %v3416, %v3416
      %v3449 = vpack.c.b16 %v3417, %v3417
      %v3450 = vpack.c.b16 %v3418, %v3418
      %v3451 = vpack.c.b16 %v3419, %v3419
      %v3452 = vpack.c.b16 %v3420, %v3420
      %v3453 = vpack.c.b16 %v3421, %v3421
      %v3454 = vpack.c.b16 %v3422, %v3422
      %v3455 = vpack.c.b16 %v3423, %v3423
      %v3456 = vpack.c.b16 %v3424, %v3424
      %v3457 = vpack.c.b16 %v3425, %v3425
      %v3458 = vpack.c.b16 %v3426, %v3426
      %3491 = vst [vmem:[%s219] sm:$0xf] %v3427
      %3492 = vst [vmem:[%s219 + $0x4] sm:$0xf] %v3428
      %3493 = vst [vmem:[%s219 + $0x8] sm:$0xf] %v3429
      %3494 = vst [vmem:[%s219 + $0xc] sm:$0xf] %v3430
      %3495 = vst [vmem:[%s219 + $0x10] sm:$0xf] %v3431
      %3496 = vst [vmem:[%s219 + $0x14] sm:$0xf] %v3432
      %3497 = vst [vmem:[%s219 + $0x18] sm:$0xf] %v3433
      %3498 = vst [vmem:[%s219 + $0x1c] sm:$0xf] %v3434
      %3499 = vst [vmem:[%s219 + $0x20] sm:$0xf] %v3435
      %3500 = vst [vmem:[%s219 + $0x24] sm:$0xf] %v3436
      %3501 = vst [vmem:[%s219 + $0x28] sm:$0xf] %v3437
      %3502 = vst [vmem:[%s219 + $0x2c] sm:$0xf] %v3438
      %3503 = vst [vmem:[%s219 + $0x30] sm:$0xf] %v3439
      %3504 = vst [vmem:[%s219 + $0x34] sm:$0xf] %v3440
      %3505 = vst [vmem:[%s219 + $0x38] sm:$0xf] %v3441
      %3506 = vst [vmem:[%s219 + $0x3c] sm:$0xf] %v3442
      %3507 = vst [vmem:[%s219 + $0x40] sm:$0xf] %v3443
      %3508 = vst [vmem:[%s219 + $0x44] sm:$0xf] %v3444
      %3509 = vst [vmem:[%s219 + $0x48] sm:$0xf] %v3445
      %3510 = vst [vmem:[%s219 + $0x4c] sm:$0xf] %v3446
      %3511 = vst [vmem:[%s219 + $0x50] sm:$0xf] %v3447
      %3512 = vst [vmem:[%s219 + $0x54] sm:$0xf] %v3448
      %3513 = vst [vmem:[%s219 + $0x58] sm:$0xf] %v3449
      %3514 = vst [vmem:[%s219 + $0x5c] sm:$0xf] %v3450
      %3515 = vst [vmem:[%s219 + $0x60] sm:$0xf] %v3451
      %3516 = vst [vmem:[%s219 + $0x64] sm:$0xf] %v3452
      %3517 = vst [vmem:[%s219 + $0x68] sm:$0xf] %v3453
      %3518 = vst [vmem:[%s219 + $0x6c] sm:$0xf] %v3454
      %3519 = vst [vmem:[%s219 + $0x70] sm:$0xf] %v3455
      %3520 = vst [vmem:[%s219 + $0x74] sm:$0xf] %v3456
      %3521 = vst [vmem:[%s219 + $0x78] sm:$0xf] %v3457
      %3522 = vst [vmem:[%s219 + $0x7c] sm:$0xf] %v3458
      %v3523 = vadd.f32 %v3237, %v3240
      %v3524 = vadd.f32 %v3523, %v3245
      %v3525 = vadd.f32 %v3524, %v3248
      %v3526 = vadd.f32 %v3525, %v3253
      %v3527 = vadd.f32 %v3526, %v3256
      %v3528 = vadd.f32 %v3527, %v3261
      %v3529 = vadd.f32 %v3528, %v3264
      %v3530 = vadd.f32 %v3529, %v3269
      %v3531 = vadd.f32 %v3530, %v3272
      %v3532 = vadd.f32 %v3531, %v3277
      %v3533 = vadd.f32 %v3532, %v3280
      %v3534 = vadd.f32 %v3533, %v3285
      %v3535 = vadd.f32 %v3534, %v3288
      %v3536 = vadd.f32 %v3535, %v3293
      %v3537 = vadd.f32 %v3536, %v3296
      %v3538 = vadd.f32 %v3537, %v3301
      %v3539 = vadd.f32 %v3538, %v3304
      %v3540 = vadd.f32 %v3539, %v3309
      %v3541 = vadd.f32 %v3540, %v3312
      %v3542 = vadd.f32 %v3541, %v3317
      %v3543 = vadd.f32 %v3542, %v3320
      %v3544 = vadd.f32 %v3543, %v3325
      %v3545 = vadd.f32 %v3544, %v3328
      %v3546 = vadd.f32 %v3545, %v3333
      %v3547 = vadd.f32 %v3546, %v3336
      %v3548 = vadd.f32 %v3547, %v3341
      %v3549 = vadd.f32 %v3548, %v3344
      %v3550 = vadd.f32 %v3549, %v3349
      %v3551 = vadd.f32 %v3550, %v3352
      %v3552 = vadd.f32 %v3551, %v3357
      %v3553 = vadd.f32 %v3552, %v3360
      %v3554 = vrot.slane %v3553, 4
      %v3555 = vadd.f32 %v3553, %v3554
      %v3556 = vrot.slane %v3555, 2
      %v3557 = vadd.f32 %v3555, %v3556
      %v3558 = vrot.slane %v3557, 1
      %v3559 = vadd.f32 %v3557, %v3558
      %v3560 = vmul.f32 %v3237, %v3237
      %v3561 = vmul.f32 %v3240, %v3240
      %v3562 = vmul.f32 %v3245, %v3245
      %v3563 = vmul.f32 %v3248, %v3248
      %v3564 = vmul.f32 %v3253, %v3253
      %v3565 = vmul.f32 %v3256, %v3256
      %v3566 = vmul.f32 %v3261, %v3261
      %v3567 = vmul.f32 %v3264, %v3264
      %v3568 = vmul.f32 %v3269, %v3269
      %v3569 = vmul.f32 %v3272, %v3272
      %v3570 = vmul.f32 %v3277, %v3277
      %v3571 = vmul.f32 %v3280, %v3280
      %v3572 = vmul.f32 %v3285, %v3285
      %v3573 = vmul.f32 %v3288, %v3288
      %v3574 = vmul.f32 %v3293, %v3293
      %v3575 = vmul.f32 %v3296, %v3296
      %v3576 = vmul.f32 %v3301, %v3301
      %v3577 = vmul.f32 %v3304, %v3304
      %v3578 = vmul.f32 %v3309, %v3309
      %v3579 = vmul.f32 %v3312, %v3312
      %v3580 = vmul.f32 %v3317, %v3317
      %v3581 = vmul.f32 %v3320, %v3320
      %v3582 = vmul.f32 %v3325, %v3325
      %v3583 = vmul.f32 %v3328, %v3328
      %v3584 = vmul.f32 %v3333, %v3333
      %v3585 = vmul.f32 %v3336, %v3336
      %v3586 = vmul.f32 %v3341, %v3341
      %v3587 = vmul.f32 %v3344, %v3344
      %v3588 = vmul.f32 %v3349, %v3349
      %v3589 = vmul.f32 %v3352, %v3352
      %v3590 = vmul.f32 %v3357, %v3357
      %v3591 = vmul.f32 %v3360, %v3360
      %v3592 = vadd.f32 %v3560, %v3561
      %v3593 = vadd.f32 %v3592, %v3562
      %v3594 = vadd.f32 %v3593, %v3563
      %v3595 = vadd.f32 %v3594, %v3564
      %v3596 = vadd.f32 %v3595, %v3565
      %v3597 = vadd.f32 %v3596, %v3566
      %v3598 = vadd.f32 %v3597, %v3567
      %v3599 = vadd.f32 %v3598, %v3568
      %v3600 = vadd.f32 %v3599, %v3569
      %v3601 = vadd.f32 %v3600, %v3570
      %v3602 = vadd.f32 %v3601, %v3571
      %v3603 = vadd.f32 %v3602, %v3572
      %v3604 = vadd.f32 %v3603, %v3573
      %v3605 = vadd.f32 %v3604, %v3574
      %v3606 = vadd.f32 %v3605, %v3575
      %v3607 = vadd.f32 %v3606, %v3576
      %v3608 = vadd.f32 %v3607, %v3577
      %v3609 = vadd.f32 %v3608, %v3578
      %v3610 = vadd.f32 %v3609, %v3579
      %v3611 = vadd.f32 %v3610, %v3580
      %v3612 = vadd.f32 %v3611, %v3581
      %v3613 = vadd.f32 %v3612, %v3582
      %v3614 = vadd.f32 %v3613, %v3583
      %v3615 = vadd.f32 %v3614, %v3584
      %v3616 = vadd.f32 %v3615, %v3585
      %v3617 = vadd.f32 %v3616, %v3586
      %v3618 = vadd.f32 %v3617, %v3587
      %v3619 = vadd.f32 %v3618, %v3588
      %v3620 = vadd.f32 %v3619, %v3589
      %v3621 = vadd.f32 %v3620, %v3590
      %v3622 = vadd.f32 %v3621, %v3591
      %v3623 = vrot.slane %v3622, 4
      %v3624 = vadd.f32 %v3622, %v3623
      %v3625 = vrot.slane %v3624, 2
      %v3626 = vadd.f32 %v3624, %v3625
      %v3627 = vrot.slane %v3626, 1
      %v3628 = vadd.f32 %v3626, %v3627
      %vm3629 = vcmask 1040384
      %v3630 = vsel %vm3629, %v3559, %v3628
      %3631 = vst [vmem:[%s226] sm:$0x3] %v3630
      %p3632 = scmp.lt.s32.totalorder %s19, 1
      %s3633 = scalar_select %p3632, %s19, 1
      %p3634 = scmp.lt.s32.totalorder %s20, 0
      %s3635 = scalar_select %p3634, %s20, 0
      %s3636 = smul.addr %s3633, 32
      %s3637 = sadd.s32 %s3635, %s3636
      %s3638 = smul.addr %s3637, 4
      %s3639 = scalar_lea.vmem %s2, %s3638
      %p3640 = scmp.lt.s32.totalorder %s19, 1
      %s3641 = scalar_select %p3640, %s19, 1
      %p3642 = scmp.lt.s32.totalorder %s20, 0
      %s3643 = scalar_select %p3642, %s20, 0
      %s3644 = sadd.s32 %s3643, %s3641
      %s3645 = smul.addr %s3644, 2
      %s3646 = scalar_lea.vmem %s3, %s3645
      // Predicated region
      $region33: #{residual_block.3} parent=27 // pred_check
        %p3647 = pneg %p99
      $region34: #{residual_block.3} parent=27 // pred_check_branch
        %3649 = sbr.rel (%p3647) target = $region36
      $region35: #{residual_block.3} parent=27 // pred_region
        _
      $region36: #{residual_block.3} parent=27 // pred_fallthru
        _
      // Predicated region
      $region37: #{residual_block.3} parent=27 // pred_check
        %p3650 = pneg %p127
      $region38: #{residual_block.3} parent=27 // pred_check_branch
        %3652 = sbr.rel (%p3650) target = $region40
      $region39: #{residual_block.3} parent=27 // pred_region
        _
      $region40: #{residual_block.3} parent=27 // pred_fallthru
        _
    $region28: #{residual_block.3} parent=5 // pred_fallthru
      _
    %p3653 = scmp.le.s32.totalorder 2, %s10
    // Predicated region
    $region41: #{residual_block.3} parent=5 // pred_check
      %p3654 = pneg %p3653
    $region42: #{residual_block.3} parent=5 // pred_check_branch
      %3656 = sbr.rel (%p3654) target = $region44
    $region43: #{residual_block.3} parent=5 // pred_region
      %s3657 = ssub.s32 %s10, 2
      // Predicated region
      $region45: #{residual_block.3} parent=43 // pred_check
        %p3658 = pneg %p105
      $region46: #{residual_block.3} parent=43 // pred_check_branch
        %3660 = sbr.rel (%p3658) target = $region48
      $region47: #{residual_block.3} parent=43 // pred_region
        %p3661 = scmp.lt.s32.totalorder %s21, 1
        %s3662 = scalar_select %p3661, %s21, 1
        %p3663 = scmp.lt.s32.totalorder %s22, 0
        %s3664 = scalar_select %p3663, %s22, 0
        %s3665 = smul.addr %s3662, 32
        %s3666 = sadd.s32 %s3664, %s3665
        %s3667 = smul.addr %s3666, 4
        %s3668 = scalar_lea.vmem %s2, %s3667
      $region48: #{residual_block.3} parent=43 // pred_fallthru
        _
      // Predicated region
      $region49: #{residual_block.3} parent=43 // pred_check
        %p3669 = pneg %p133
      $region50: #{residual_block.3} parent=43 // pred_check_branch
        %3671 = sbr.rel (%p3669) target = $region52
      $region51: #{residual_block.3} parent=43 // pred_region
        %p3672 = scmp.lt.s32.totalorder %s21, 1
        %s3673 = scalar_select %p3672, %s21, 1
        %p3674 = scmp.lt.s32.totalorder %s22, 0
        %s3675 = scalar_select %p3674, %s22, 0
        %s3676 = sadd.s32 %s3675, %s3673
        %s3677 = smul.addr %s3676, 2
        %s3678 = scalar_lea.vmem %s3, %s3677
      $region52: #{residual_block.3} parent=43 // pred_fallthru
        _
    $region44: #{residual_block.3} parent=5 // pred_fallthru
      _
  $region6: #{residual_block.3} parent=0 // loop_footer
    %s14 = sadd.s32 1, %s10
  $region7: #{residual_block.3} parent=0 // loop_footer_branch
    %9 = sbr.rel target = $region3
  $region8: #{residual_block.3} parent=0 // loop_exit
    _

</llo_original>
